<compile_context>
chip_gen: v7x
topology: tpu7x:2x2x1
jax: 0.10.0
libtpu: 0.0.40
codegen_flags: <defaults>
</compile_context>

<pallas_src>
import functools

import jax
import jax.numpy as jnp
from jax import lax
from jax.experimental import pallas as pl
from jax.experimental.pallas import tpu as pltpu


# ---------------------------------------------------------------------------
# Fused kernel: 3 x (conv(2,4)/stride(2,4)/pad 2 + ReLU)  +  Linear -> (B, 1)
# ---------------------------------------------------------------------------
def _disc_kernel(a_ref,
                 bw1a_ref, bw1b_ref, brow1_ref,
                 bw2a_ref, bw2b_ref, brow2_ref,
                 bw3a_ref, bw3b_ref, brow3_ref,
                 wlin_ref, bout_ref,
                 out_ref,
                 z1a, z1b, z2a, z2b, z3a, z3b, y1_buf, y2_buf,
                 *, B, dims):
    """Fused Discriminator forward.

    a_ref     : (B*H1, W1*C1)  input activation, rows (b, h), cols (w, c)
    bwLx_ref  : (4*WoL*CL, WoL*CoutL)  block-diagonal conv weights, H-tap x in {a: i=0, b: i=1}
    browL_ref : (1, WoL*CoutL)         conv bias tiled over wo
    wlin_ref  : (B*Ho3, Wo3*Cout3)     final linear weight permuted to (h, (w, c)) and tiled over b
    bout_ref  : (1, 1)                 final linear bias
    out_ref   : (B, 1)                 output
    zLx       : (B*HoL, 4*WoL*CL)      scratch: zero-padded tap-row LHS (in-kernel im2col)
    yL_buf    : inter-layer activation scratch (layer L output, stays in VMEM)
    """

    def conv_layer(src_ref, z0, z1, bw0_ref, bw1_ref, brow_ref, d):
        H, W, C, Ho, Wo = d
        z0[...] = jnp.zeros_like(z0)
        z1[...] = jnp.zeros_like(z1)
        zrefs = (z0, z1)
        # In-kernel im2col: output row (b, ho), H-tap i reads input row h = 2*ho + i - 2
        # (shifted into the ref by the W padding of 2 pixels = 2*C lanes).  Rows that fall
        # into the zero padding are simply left as zeros.  All offsets are static.
        for b in range(B):
            for ho in range(Ho):
                for i in range(2):
                    h = 2 * ho + i - 2
                    if 0 <= h < H:
                        zrefs[i][b * Ho + ho:b * Ho + ho + 1, 2 * C:(2 + W) * C] = (
                            src_ref[b * H + h:b * H + h + 1, :])
        # W-taps are folded into the block-diagonal weights -> two lane-dense MXU matmuls.
        y = jnp.dot(z0[...], bw0_ref[...], preferred_element_type=jnp.float32)
        y = y + jnp.dot(z1[...], bw1_ref[...], preferred_element_type=jnp.float32)
        return jnp.maximum(y + brow_ref[...], 0.0)          # (B*Ho, Wo*Cout), rows (b,h'), cols (w',c')

    d1, d2, d3 = dims
    y1_buf[...] = conv_layer(a_ref, z1a, z1b, bw1a_ref, bw1b_ref, brow1_ref, d1)
    y2_buf[...] = conv_layer(y1_buf, z2a, z2b, bw2a_ref, bw2b_ref, brow2_ref, d2)
    y3 = conv_layer(y2_buf, z3a, z3b, bw3a_ref, bw3b_ref, brow3_ref, d3)

    # Final Linear(4*4*4*hidden, 1) as a VPU multiply + reduction (no N=1 matmul).
    Ho3 = d3[3]
    prod = y3 * wlin_ref[...]                               # (B*Ho3, Wo3*Cout3)
    for b in range(B):
        total = jnp.sum(prod[b * Ho3:(b + 1) * Ho3, :])     # scalar reduce per batch row-block
        out_ref[b:b + 1, :] = bout_ref[...] + total


# ---------------------------------------------------------------------------
# One-time parameter preparation (hoisted out of the forward pass)
# ---------------------------------------------------------------------------
def _layer_dims(c_in, h, w, hidden_dim):
    dims = []
    c = c_in
    for cout in (hidden_dim, 2 * hidden_dim, 4 * hidden_dim):
        assert w % 4 == 0, "width must be a multiple of 4 for this kernel"
        ho = (h + 2) // 2 + 1          # conv output height: kernel 2, stride 2, pad 2
        wo = w // 4 + 1                # conv output width : kernel 4, stride 4, pad 2
        dims.append(dict(H=h, W=w, C=c, Ho=ho, Wo=wo, Cout=cout))
        h, w, c = ho, wo, cout
    return dims


def prepare_params(params, *, batch_size, in_channels, in_height, in_width, hidden_dim):
    dims = _layer_dims(in_channels, in_height, in_width, hidden_dim)
    assert dims[-1]["Ho"] == 4 and dims[-1]["Wo"] == 4, (
        "input spatial size must reduce to 4x4 to match Linear(4*4*4*hidden, 1)")

    prep = {}
    for l, (wk, bk) in enumerate((("w1", "b1"), ("w2", "b2"), ("w3", "b3")), start=1):
        d = dims[l - 1]
        w = params[wk].astype(jnp.float32)                  # (Cout, C, 2, 4) PyTorch OIHW
        bias = params[bk].astype(jnp.float32)               # (Cout,)
        eye = jnp.eye(d["Wo"], dtype=jnp.float32)
        for tap, name in ((0, "a"), (1, "b")):
            wt = jnp.transpose(w[:, :, tap, :], (2, 1, 0))  # (4, C, Cout): rows ordered (j, c)
            wt = wt.reshape(4 * d["C"], d["Cout"])
            prep[f"bw{l}{name}"] = jnp.kron(eye, wt)        # (4*Wo*C, Wo*Cout) block-diagonal
        prep[f"brow{l}"] = jnp.tile(bias, d["Wo"])[None, :]  # (1, Wo*Cout)

    d3 = dims[-1]
    c3, ho3, wo3 = d3["Cout"], d3["Ho"], d3["Wo"]
    wl = params["w_out"].astype(jnp.float32).reshape(c3, ho3, wo3)   # (c, h, w)  (torch .view order)
    wl = jnp.transpose(wl, (1, 2, 0)).reshape(ho3, wo3 * c3)         # rows h, cols (w, c)
    prep["wlin"] = jnp.tile(wl, (batch_size, 1))                     # (B*Ho3, Wo3*C3)
    prep["bout"] = params["b_out"].astype(jnp.float32).reshape(1, 1)
    return dims, prep


# ---------------------------------------------------------------------------
# Build the fused forward pass (single pallas_call)
# ---------------------------------------------------------------------------
def build_forward(params, *, batch_size, feature_channels, hidden_dim, in_height, in_width):
    c_in = feature_channels + 2
    dims, prep = prepare_params(params, batch_size=batch_size, in_channels=c_in,
                                in_height=in_height, in_width=in_width, hidden_dim=hidden_dim)
    B = batch_size
    dim_tuples = tuple((d["H"], d["W"], d["C"], d["Ho"], d["Wo"]) for d in dims)
    kernel = functools.partial(_disc_kernel, B=B, dims=dim_tuples)

    scratch = []
    for d in dims:
        zshape = (B * d["Ho"], 4 * d["Wo"] * d["C"])
        scratch += [pltpu.VMEM(zshape, jnp.float32), pltpu.VMEM(zshape, jnp.float32)]
    scratch.append(pltpu.VMEM((B * dims[0]["Ho"], dims[0]["Wo"] * dims[0]["Cout"]), jnp.float32))
    scratch.append(pltpu.VMEM((B * dims[1]["Ho"], dims[1]["Wo"] * dims[1]["Cout"]), jnp.float32))

    vmem_spec = pl.BlockSpec(memory_space=pltpu.MemorySpace.VMEM)
    disc_call = pl.pallas_call(
        kernel,
        out_shape=jax.ShapeDtypeStruct((B, 1), jnp.float32),
        in_specs=[vmem_spec] * 12,
        out_specs=vmem_spec,
        scratch_shapes=scratch,
    )

    H, W = dims[0]["H"], dims[0]["W"]

    @jax.jit
    def forward(prep_args, st_graph, condition):
        in_data = jnp.concatenate([st_graph, condition], axis=-1)
        # Raw row-major reinterpretation, matching torch.reshape on a contiguous tensor.
        x = in_data.reshape(B, -1, in_data.shape[2], in_data.shape[1])       # (B, C, H, W)
        a0 = jnp.transpose(x, (0, 2, 3, 1)).reshape(B * H, W * c_in)         # rows (b,h), cols (w,c)
        out2d = disc_call(
            a0.astype(jnp.float32),
            prep_args["bw1a"], prep_args["bw1b"], prep_args["brow1"],
            prep_args["bw2a"], prep_args["bw2b"], prep_args["brow2"],
            prep_args["bw3a"], prep_args["bw3b"], prep_args["brow3"],
            prep_args["wlin"], prep_args["bout"])
        return jnp.squeeze(out2d)

    return functools.partial(forward, prep), dims


# ---------------------------------------------------------------------------
# Pure-JAX reference for sanity checking
# ---------------------------------------------------------------------------
def _ref_forward(params, st_graph, condition, *, batch_size, hidden_dim):
    in_data = jnp.concatenate([st_graph, condition], axis=-1)
    x = in_data.reshape(batch_size, -1, in_data.shape[2], in_data.shape[1])

    def conv(x, w, b):
        y = lax.conv_general_dilated(
            x, w, window_strides=(2, 4), padding=((2, 2), (2, 2)),
            dimension_numbers=("NCHW", "OIHW", "NCHW"))
        return jnp.maximum(y + b.reshape(1, -1, 1, 1), 0.0)

    x = conv(x, params["w1"], params["b1"])
    x = conv(x, params["w2"], params["b2"])
    x = conv(x, params["w3"], params["b3"])
    flat = x.reshape(-1, 4 * 4 * 4 * hidden_dim)
    return jnp.squeeze(flat @ params["w_out"].T + params["b_out"])


# ---------------------------------------------------------------------------
# Deterministic parameter init (shapes follow the module's __init__)
# ---------------------------------------------------------------------------
def init_params(key, feature_channels, hidden_dim):
    c_in = feature_channels + 2
    ks = jax.random.split(key, 8)

    def w_init(k, shape, fan_in):
        return jax.random.normal(k, shape, jnp.float32) / jnp.sqrt(float(fan_in))

    return {
        "w1": w_init(ks[0], (hidden_dim, c_in, 2, 4), c_in * 8),
        "b1": w_init(ks[1], (hidden_dim,), c_in * 8),
        "w2": w_init(ks[2], (2 * hidden_dim, hidden_dim, 2, 4), hidden_dim * 8),
        "b2": w_init(ks[3], (2 * hidden_dim,), hidden_dim * 8),
        "w3": w_init(ks[4], (4 * hidden_dim, 2 * hidden_dim, 2, 4), 2 * hidden_dim * 8),
        "b3": w_init(ks[5], (4 * hidden_dim,), 2 * hidden_dim * 8),
        "w_out": w_init(ks[6], (1, 4 * 4 * 4 * hidden_dim), 4 * 4 * 4 * hidden_dim),
        "b_out": w_init(ks[7], (1,), 4 * 4 * 4 * hidden_dim),
    }


if __name__ == "__main__":
    # Shapes consistent with the forward pass: after three (2,4)-kernel/(2,4)-stride
    # convs with padding=2 the spatial grid must be 4x4, which requires H=8 (dim-2 of
    # the pre-reshape input) and W=172 (dim-1).
    feature_channels = 2
    hidden_dim = 8
    batch_size = 2
    seq, height = 172, 8

    key = jax.random.PRNGKey(0)
    k_p, k_x, k_c = jax.random.split(key, 3)
    params = init_params(k_p, feature_channels, hidden_dim)

    st_graph = jax.random.normal(k_x, (batch_size, seq, height, feature_channels), jnp.float32)
    condition = jax.random.normal(k_c, (batch_size, seq, height, 2), jnp.float32)

    forward, _ = build_forward(params, batch_size=batch_size,
                               feature_channels=feature_channels, hidden_dim=hidden_dim,
                               in_height=height, in_width=seq)

    out = jax.block_until_ready(forward(st_graph, condition))
    assert out.shape == (batch_size,), out.shape

    ref = jax.block_until_ready(
        _ref_forward(params, st_graph, condition,
                     batch_size=batch_size, hidden_dim=hidden_dim))
    assert jnp.allclose(out, ref, rtol=2e-2, atol=2e-2), (out, ref)

    print("KERNEL_OK")
</pallas_src>

<mosaic_0001>
module attributes {stable_mosaic.version = 11 : i64} {
  func.func @_disc_kernel(%arg0: memref<16x688xf32, #tpu.memory_space<vmem>>, %arg1: memref<704x352xf32, #tpu.memory_space<vmem>>, %arg2: memref<704x352xf32, #tpu.memory_space<vmem>>, %arg3: memref<1x352xf32, #tpu.memory_space<vmem>>, %arg4: memref<384x192xf32, #tpu.memory_space<vmem>>, %arg5: memref<384x192xf32, #tpu.memory_space<vmem>>, %arg6: memref<1x192xf32, #tpu.memory_space<vmem>>, %arg7: memref<256x128xf32, #tpu.memory_space<vmem>>, %arg8: memref<256x128xf32, #tpu.memory_space<vmem>>, %arg9: memref<1x128xf32, #tpu.memory_space<vmem>>, %arg10: memref<8x128xf32, #tpu.memory_space<vmem>>, %arg11: memref<1x1xf32, #tpu.memory_space<vmem>>, %arg12: memref<2x1xf32, #tpu.memory_space<vmem>>, %arg13: memref<12x704xf32, #tpu.memory_space<vmem>>, %arg14: memref<12x704xf32, #tpu.memory_space<vmem>>, %arg15: memref<10x384xf32, #tpu.memory_space<vmem>>, %arg16: memref<10x384xf32, #tpu.memory_space<vmem>>, %arg17: memref<8x256xf32, #tpu.memory_space<vmem>>, %arg18: memref<8x256xf32, #tpu.memory_space<vmem>>, %arg19: memref<12x352xf32, #tpu.memory_space<vmem>>, %arg20: memref<10x192xf32, #tpu.memory_space<vmem>>) attributes {dimension_semantics = [], scalar_prefetch = 0 : i64, scratch_operands = 8 : i64, tpu.core_type = #tpu.core_type<tc>} {
    %cst = arith.constant 0.000000e+00 : f32
    %0 = vector.broadcast %cst : f32 to vector<12x704xf32>
    %c0 = arith.constant 0 : index
    %c0_0 = arith.constant 0 : index
    %1 = vector.load %arg13[%c0, %c0_0] : memref<12x704xf32, #tpu.memory_space<vmem>>, vector<12x704xf32>
    tpu.vector_store %arg13[%c0, %c0_0], %0 {strides = array<i32>} : memref<12x704xf32, #tpu.memory_space<vmem>>, vector<12x704xf32>,
    %cst_1 = arith.constant 0.000000e+00 : f32
    %2 = vector.broadcast %cst_1 : f32 to vector<12x704xf32>
    %c0_2 = arith.constant 0 : index
    %c0_3 = arith.constant 0 : index
    %3 = vector.load %arg14[%c0_2, %c0_3] : memref<12x704xf32, #tpu.memory_space<vmem>>, vector<12x704xf32>
    tpu.vector_store %arg14[%c0_2, %c0_3], %2 {strides = array<i32>} : memref<12x704xf32, #tpu.memory_space<vmem>>, vector<12x704xf32>,
    %c0_4 = arith.constant 0 : index
    %c0_5 = arith.constant 0 : index
    %4 = vector.load %arg0[%c0_4, %c0_5] : memref<16x688xf32, #tpu.memory_space<vmem>>, vector<1x688xf32>
    %c1 = arith.constant 1 : index
    %c8 = arith.constant 8 : index
    %5 = vector.load %arg13[%c1, %c8] : memref<12x704xf32, #tpu.memory_space<vmem>>, vector<1x688xf32>
    tpu.vector_store %arg13[%c1, %c8], %4 {strides = array<i32>} : memref<12x704xf32, #tpu.memory_space<vmem>>, vector<1x688xf32>,
    %c1_6 = arith.constant 1 : index
    %c0_7 = arith.constant 0 : index
    %6 = vector.load %arg0[%c1_6, %c0_7] : memref<16x688xf32, #tpu.memory_space<vmem>>, vector<1x688xf32>
    %c1_8 = arith.constant 1 : index
    %c8_9 = arith.constant 8 : index
    %7 = vector.load %arg14[%c1_8, %c8_9] : memref<12x704xf32, #tpu.memory_space<vmem>>, vector<1x688xf32>
    tpu.vector_store %arg14[%c1_8, %c8_9], %6 {strides = array<i32>} : memref<12x704xf32, #tpu.memory_space<vmem>>, vector<1x688xf32>,
    %c2 = arith.constant 2 : index
    %c0_10 = arith.constant 0 : index
    %8 = vector.load %arg0[%c2, %c0_10] : memref<16x688xf32, #tpu.memory_space<vmem>>, vector<1x688xf32>
    %c2_11 = arith.constant 2 : index
    %c8_12 = arith.constant 8 : index
    %9 = vector.load %arg13[%c2_11, %c8_12] : memref<12x704xf32, #tpu.memory_space<vmem>>, vector<1x688xf32>
    tpu.vector_store %arg13[%c2_11, %c8_12], %8 {strides = array<i32>} : memref<12x704xf32, #tpu.memory_space<vmem>>, vector<1x688xf32>,
    %c3 = arith.constant 3 : index
    %c0_13 = arith.constant 0 : index
    %10 = vector.load %arg0[%c3, %c0_13] : memref<16x688xf32, #tpu.memory_space<vmem>>, vector<1x688xf32>
    %c2_14 = arith.constant 2 : index
    %c8_15 = arith.constant 8 : index
    %11 = vector.load %arg14[%c2_14, %c8_15] : memref<12x704xf32, #tpu.memory_space<vmem>>, vector<1x688xf32>
    tpu.vector_store %arg14[%c2_14, %c8_15], %10 {strides = array<i32>} : memref<12x704xf32, #tpu.memory_space<vmem>>, vector<1x688xf32>,
    %c4 = arith.constant 4 : index
    %c0_16 = arith.constant 0 : index
    %12 = vector.load %arg0[%c4, %c0_16] : memref<16x688xf32, #tpu.memory_space<vmem>>, vector<1x688xf32>
    %c3_17 = arith.constant 3 : index
    %c8_18 = arith.constant 8 : index
    %13 = vector.load %arg13[%c3_17, %c8_18] : memref<12x704xf32, #tpu.memory_space<vmem>>, vector<1x688xf32>
    tpu.vector_store %arg13[%c3_17, %c8_18], %12 {strides = array<i32>} : memref<12x704xf32, #tpu.memory_space<vmem>>, vector<1x688xf32>,
    %c5 = arith.constant 5 : index
    %c0_19 = arith.constant 0 : index
    %14 = vector.load %arg0[%c5, %c0_19] : memref<16x688xf32, #tpu.memory_space<vmem>>, vector<1x688xf32>
    %c3_20 = arith.constant 3 : index
    %c8_21 = arith.constant 8 : index
    %15 = vector.load %arg14[%c3_20, %c8_21] : memref<12x704xf32, #tpu.memory_space<vmem>>, vector<1x688xf32>
    tpu.vector_store %arg14[%c3_20, %c8_21], %14 {strides = array<i32>} : memref<12x704xf32, #tpu.memory_space<vmem>>, vector<1x688xf32>,
    %c6 = arith.constant 6 : index
    %c0_22 = arith.constant 0 : index
    %16 = vector.load %arg0[%c6, %c0_22] : memref<16x688xf32, #tpu.memory_space<vmem>>, vector<1x688xf32>
    %c4_23 = arith.constant 4 : index
    %c8_24 = arith.constant 8 : index
    %17 = vector.load %arg13[%c4_23, %c8_24] : memref<12x704xf32, #tpu.memory_space<vmem>>, vector<1x688xf32>
    tpu.vector_store %arg13[%c4_23, %c8_24], %16 {strides = array<i32>} : memref<12x704xf32, #tpu.memory_space<vmem>>, vector<1x688xf32>,
    %c7 = arith.constant 7 : index
    %c0_25 = arith.constant 0 : index
    %18 = vector.load %arg0[%c7, %c0_25] : memref<16x688xf32, #tpu.memory_space<vmem>>, vector<1x688xf32>
    %c4_26 = arith.constant 4 : index
    %c8_27 = arith.constant 8 : index
    %19 = vector.load %arg14[%c4_26, %c8_27] : memref<12x704xf32, #tpu.memory_space<vmem>>, vector<1x688xf32>
    tpu.vector_store %arg14[%c4_26, %c8_27], %18 {strides = array<i32>} : memref<12x704xf32, #tpu.memory_space<vmem>>, vector<1x688xf32>,
    %c8_28 = arith.constant 8 : index
    %c0_29 = arith.constant 0 : index
    %20 = vector.load %arg0[%c8_28, %c0_29] : memref<16x688xf32, #tpu.memory_space<vmem>>, vector<1x688xf32>
    %c7_30 = arith.constant 7 : index
    %c8_31 = arith.constant 8 : index
    %21 = vector.load %arg13[%c7_30, %c8_31] : memref<12x704xf32, #tpu.memory_space<vmem>>, vector<1x688xf32>
    tpu.vector_store %arg13[%c7_30, %c8_31], %20 {strides = array<i32>} : memref<12x704xf32, #tpu.memory_space<vmem>>, vector<1x688xf32>,
    %c9 = arith.constant 9 : index
    %c0_32 = arith.constant 0 : index
    %22 = vector.load %arg0[%c9, %c0_32] : memref<16x688xf32, #tpu.memory_space<vmem>>, vector<1x688xf32>
    %c7_33 = arith.constant 7 : index
    %c8_34 = arith.constant 8 : index
    %23 = vector.load %arg14[%c7_33, %c8_34] : memref<12x704xf32, #tpu.memory_space<vmem>>, vector<1x688xf32>
    tpu.vector_store %arg14[%c7_33, %c8_34], %22 {strides = array<i32>} : memref<12x704xf32, #tpu.memory_space<vmem>>, vector<1x688xf32>,
    %c10 = arith.constant 10 : index
    %c0_35 = arith.constant 0 : index
    %24 = vector.load %arg0[%c10, %c0_35] : memref<16x688xf32, #tpu.memory_space<vmem>>, vector<1x688xf32>
    %c8_36 = arith.constant 8 : index
    %c8_37 = arith.constant 8 : index
    %25 = vector.load %arg13[%c8_36, %c8_37] : memref<12x704xf32, #tpu.memory_space<vmem>>, vector<1x688xf32>
    tpu.vector_store %arg13[%c8_36, %c8_37], %24 {strides = array<i32>} : memref<12x704xf32, #tpu.memory_space<vmem>>, vector<1x688xf32>,
    %c11 = arith.constant 11 : index
    %c0_38 = arith.constant 0 : index
    %26 = vector.load %arg0[%c11, %c0_38] : memref<16x688xf32, #tpu.memory_space<vmem>>, vector<1x688xf32>
    %c8_39 = arith.constant 8 : index
    %c8_40 = arith.constant 8 : index
    %27 = vector.load %arg14[%c8_39, %c8_40] : memref<12x704xf32, #tpu.memory_space<vmem>>, vector<1x688xf32>
    tpu.vector_store %arg14[%c8_39, %c8_40], %26 {strides = array<i32>} : memref<12x704xf32, #tpu.memory_space<vmem>>, vector<1x688xf32>,
    %c12 = arith.constant 12 : index
    %c0_41 = arith.constant 0 : index
    %28 = vector.load %arg0[%c12, %c0_41] : memref<16x688xf32, #tpu.memory_space<vmem>>, vector<1x688xf32>
    %c9_42 = arith.constant 9 : index
    %c8_43 = arith.constant 8 : index
    %29 = vector.load %arg13[%c9_42, %c8_43] : memref<12x704xf32, #tpu.memory_space<vmem>>, vector<1x688xf32>
    tpu.vector_store %arg13[%c9_42, %c8_43], %28 {strides = array<i32>} : memref<12x704xf32, #tpu.memory_space<vmem>>, vector<1x688xf32>,
    %c13 = arith.constant 13 : index
    %c0_44 = arith.constant 0 : index
    %30 = vector.load %arg0[%c13, %c0_44] : memref<16x688xf32, #tpu.memory_space<vmem>>, vector<1x688xf32>
    %c9_45 = arith.constant 9 : index
    %c8_46 = arith.constant 8 : index
    %31 = vector.load %arg14[%c9_45, %c8_46] : memref<12x704xf32, #tpu.memory_space<vmem>>, vector<1x688xf32>
    tpu.vector_store %arg14[%c9_45, %c8_46], %30 {strides = array<i32>} : memref<12x704xf32, #tpu.memory_space<vmem>>, vector<1x688xf32>,
    %c14 = arith.constant 14 : index
    %c0_47 = arith.constant 0 : index
    %32 = vector.load %arg0[%c14, %c0_47] : memref<16x688xf32, #tpu.memory_space<vmem>>, vector<1x688xf32>
    %c10_48 = arith.constant 10 : index
    %c8_49 = arith.constant 8 : index
    %33 = vector.load %arg13[%c10_48, %c8_49] : memref<12x704xf32, #tpu.memory_space<vmem>>, vector<1x688xf32>
    tpu.vector_store %arg13[%c10_48, %c8_49], %32 {strides = array<i32>} : memref<12x704xf32, #tpu.memory_space<vmem>>, vector<1x688xf32>,
    %c15 = arith.constant 15 : index
    %c0_50 = arith.constant 0 : index
    %34 = vector.load %arg0[%c15, %c0_50] : memref<16x688xf32, #tpu.memory_space<vmem>>, vector<1x688xf32>
    %c10_51 = arith.constant 10 : index
    %c8_52 = arith.constant 8 : index
    %35 = vector.load %arg14[%c10_51, %c8_52] : memref<12x704xf32, #tpu.memory_space<vmem>>, vector<1x688xf32>
    tpu.vector_store %arg14[%c10_51, %c8_52], %34 {strides = array<i32>} : memref<12x704xf32, #tpu.memory_space<vmem>>, vector<1x688xf32>,
    %c0_53 = arith.constant 0 : index
    %c0_54 = arith.constant 0 : index
    %36 = vector.load %arg13[%c0_53, %c0_54] : memref<12x704xf32, #tpu.memory_space<vmem>>, vector<12x704xf32>
    %c0_55 = arith.constant 0 : index
    %c0_56 = arith.constant 0 : index
    %37 = vector.load %arg1[%c0_55, %c0_56] : memref<704x352xf32, #tpu.memory_space<vmem>>, vector<704x352xf32>
    %cst_57 = arith.constant dense<0.000000e+00> : vector<12x352xf32>
    %38 = tpu.matmul %36, %37, %cst_57 {dimension_numbers = #tpu.dot_dimension_numbers<[1], [0], [0], [1], [0, 0, 1, 1], [], []>} : vector<12x704xf32>, vector<704x352xf32>, vector<12x352xf32> -> vector<12x352xf32>
    %c0_58 = arith.constant 0 : index
    %c0_59 = arith.constant 0 : index
    %39 = vector.load %arg14[%c0_58, %c0_59] : memref<12x704xf32, #tpu.memory_space<vmem>>, vector<12x704xf32>
    %c0_60 = arith.constant 0 : index
    %c0_61 = arith.constant 0 : index
    %40 = vector.load %arg2[%c0_60, %c0_61] : memref<704x352xf32, #tpu.memory_space<vmem>>, vector<704x352xf32>
    %cst_62 = arith.constant dense<0.000000e+00> : vector<12x352xf32>
    %41 = tpu.matmul %39, %40, %cst_62 {dimension_numbers = #tpu.dot_dimension_numbers<[1], [0], [0], [1], [0, 0, 1, 1], [], []>} : vector<12x704xf32>, vector<704x352xf32>, vector<12x352xf32> -> vector<12x352xf32>
    %42 = arith.addf %38, %41 : vector<12x352xf32>
    %c0_63 = arith.constant 0 : index
    %c0_64 = arith.constant 0 : index
    %43 = vector.load %arg3[%c0_63, %c0_64] : memref<1x352xf32, #tpu.memory_space<vmem>>, vector<1x352xf32>
    %44 = vector.broadcast %43 : vector<1x352xf32> to vector<12x352xf32>
    %45 = arith.addf %42, %44 : vector<12x352xf32>
    %cst_65 = arith.constant 0.000000e+00 : f32
    %46 = vector.broadcast %cst_65 : f32 to vector<12x352xf32>
    %47 = arith.maximumf %45, %46 : vector<12x352xf32>
    %c0_66 = arith.constant 0 : index
    %c0_67 = arith.constant 0 : index
    %48 = vector.load %arg19[%c0_66, %c0_67] : memref<12x352xf32, #tpu.memory_space<vmem>>, vector<12x352xf32>
    tpu.vector_store %arg19[%c0_66, %c0_67], %47 {strides = array<i32>} : memref<12x352xf32, #tpu.memory_space<vmem>>, vector<12x352xf32>,
    %cst_68 = arith.constant 0.000000e+00 : f32
    %49 = vector.broadcast %cst_68 : f32 to vector<10x384xf32>
    %c0_69 = arith.constant 0 : index
    %c0_70 = arith.constant 0 : index
    %50 = vector.load %arg15[%c0_69, %c0_70] : memref<10x384xf32, #tpu.memory_space<vmem>>, vector<10x384xf32>
    tpu.vector_store %arg15[%c0_69, %c0_70], %49 {strides = array<i32>} : memref<10x384xf32, #tpu.memory_space<vmem>>, vector<10x384xf32>,
    %cst_71 = arith.constant 0.000000e+00 : f32
    %51 = vector.broadcast %cst_71 : f32 to vector<10x384xf32>
    %c0_72 = arith.constant 0 : index
    %c0_73 = arith.constant 0 : index
    %52 = vector.load %arg16[%c0_72, %c0_73] : memref<10x384xf32, #tpu.memory_space<vmem>>, vector<10x384xf32>
    tpu.vector_store %arg16[%c0_72, %c0_73], %51 {strides = array<i32>} : memref<10x384xf32, #tpu.memory_space<vmem>>, vector<10x384xf32>,
    %c0_74 = arith.constant 0 : index
    %c0_75 = arith.constant 0 : index
    %53 = vector.load %arg19[%c0_74, %c0_75] : memref<12x352xf32, #tpu.memory_space<vmem>>, vector<1x352xf32>
    %c1_76 = arith.constant 1 : index
    %c16 = arith.constant 16 : index
    %54 = vector.load %arg15[%c1_76, %c16] : memref<10x384xf32, #tpu.memory_space<vmem>>, vector<1x352xf32>
    tpu.vector_store %arg15[%c1_76, %c16], %53 {strides = array<i32>} : memref<10x384xf32, #tpu.memory_space<vmem>>, vector<1x352xf32>,
    %c1_77 = arith.constant 1 : index
    %c0_78 = arith.constant 0 : index
    %55 = vector.load %arg19[%c1_77, %c0_78] : memref<12x352xf32, #tpu.memory_space<vmem>>, vector<1x352xf32>
    %c1_79 = arith.constant 1 : index
    %c16_80 = arith.constant 16 : index
    %56 = vector.load %arg16[%c1_79, %c16_80] : memref<10x384xf32, #tpu.memory_space<vmem>>, vector<1x352xf32>
    tpu.vector_store %arg16[%c1_79, %c16_80], %55 {strides = array<i32>} : memref<10x384xf32, #tpu.memory_space<vmem>>, vector<1x352xf32>,
    %c2_81 = arith.constant 2 : index
    %c0_82 = arith.constant 0 : index
    %57 = vector.load %arg19[%c2_81, %c0_82] : memref<12x352xf32, #tpu.memory_space<vmem>>, vector<1x352xf32>
    %c2_83 = arith.constant 2 : index
    %c16_84 = arith.constant 16 : index
    %58 = vector.load %arg15[%c2_83, %c16_84] : memref<10x384xf32, #tpu.memory_space<vmem>>, vector<1x352xf32>
    tpu.vector_store %arg15[%c2_83, %c16_84], %57 {strides = array<i32>} : memref<10x384xf32, #tpu.memory_space<vmem>>, vector<1x352xf32>,
    %c3_85 = arith.constant 3 : index
    %c0_86 = arith.constant 0 : index
    %59 = vector.load %arg19[%c3_85, %c0_86] : memref<12x352xf32, #tpu.memory_space<vmem>>, vector<1x352xf32>
    %c2_87 = arith.constant 2 : index
    %c16_88 = arith.constant 16 : index
    %60 = vector.load %arg16[%c2_87, %c16_88] : memref<10x384xf32, #tpu.memory_space<vmem>>, vector<1x352xf32>
    tpu.vector_store %arg16[%c2_87, %c16_88], %59 {strides = array<i32>} : memref<10x384xf32, #tpu.memory_space<vmem>>, vector<1x352xf32>,
    %c4_89 = arith.constant 4 : index
    %c0_90 = arith.constant 0 : index
    %61 = vector.load %arg19[%c4_89, %c0_90] : memref<12x352xf32, #tpu.memory_space<vmem>>, vector<1x352xf32>
    %c3_91 = arith.constant 3 : index
    %c16_92 = arith.constant 16 : index
    %62 = vector.load %arg15[%c3_91, %c16_92] : memref<10x384xf32, #tpu.memory_space<vmem>>, vector<1x352xf32>
    tpu.vector_store %arg15[%c3_91, %c16_92], %61 {strides = array<i32>} : memref<10x384xf32, #tpu.memory_space<vmem>>, vector<1x352xf32>,
    %c5_93 = arith.constant 5 : index
    %c0_94 = arith.constant 0 : index
    %63 = vector.load %arg19[%c5_93, %c0_94] : memref<12x352xf32, #tpu.memory_space<vmem>>, vector<1x352xf32>
    %c3_95 = arith.constant 3 : index
    %c16_96 = arith.constant 16 : index
    %64 = vector.load %arg16[%c3_95, %c16_96] : memref<10x384xf32, #tpu.memory_space<vmem>>, vector<1x352xf32>
    tpu.vector_store %arg16[%c3_95, %c16_96], %63 {strides = array<i32>} : memref<10x384xf32, #tpu.memory_space<vmem>>, vector<1x352xf32>,
    %c6_97 = arith.constant 6 : index
    %c0_98 = arith.constant 0 : index
    %65 = vector.load %arg19[%c6_97, %c0_98] : memref<12x352xf32, #tpu.memory_space<vmem>>, vector<1x352xf32>
    %c6_99 = arith.constant 6 : index
    %c16_100 = arith.constant 16 : index
    %66 = vector.load %arg15[%c6_99, %c16_100] : memref<10x384xf32, #tpu.memory_space<vmem>>, vector<1x352xf32>
    tpu.vector_store %arg15[%c6_99, %c16_100], %65 {strides = array<i32>} : memref<10x384xf32, #tpu.memory_space<vmem>>, vector<1x352xf32>,
    %c7_101 = arith.constant 7 : index
    %c0_102 = arith.constant 0 : index
    %67 = vector.load %arg19[%c7_101, %c0_102] : memref<12x352xf32, #tpu.memory_space<vmem>>, vector<1x352xf32>
    %c6_103 = arith.constant 6 : index
    %c16_104 = arith.constant 16 : index
    %68 = vector.load %arg16[%c6_103, %c16_104] : memref<10x384xf32, #tpu.memory_space<vmem>>, vector<1x352xf32>
    tpu.vector_store %arg16[%c6_103, %c16_104], %67 {strides = array<i32>} : memref<10x384xf32, #tpu.memory_space<vmem>>, vector<1x352xf32>,
    %c8_105 = arith.constant 8 : index
    %c0_106 = arith.constant 0 : index
    %69 = vector.load %arg19[%c8_105, %c0_106] : memref<12x352xf32, #tpu.memory_space<vmem>>, vector<1x352xf32>
    %c7_107 = arith.constant 7 : index
    %c16_108 = arith.constant 16 : index
    %70 = vector.load %arg15[%c7_107, %c16_108] : memref<10x384xf32, #tpu.memory_space<vmem>>, vector<1x352xf32>
    tpu.vector_store %arg15[%c7_107, %c16_108], %69 {strides = array<i32>} : memref<10x384xf32, #tpu.memory_space<vmem>>, vector<1x352xf32>,
    %c9_109 = arith.constant 9 : index
    %c0_110 = arith.constant 0 : index
    %71 = vector.load %arg19[%c9_109, %c0_110] : memref<12x352xf32, #tpu.memory_space<vmem>>, vector<1x352xf32>
    %c7_111 = arith.constant 7 : index
    %c16_112 = arith.constant 16 : index
    %72 = vector.load %arg16[%c7_111, %c16_112] : memref<10x384xf32, #tpu.memory_space<vmem>>, vector<1x352xf32>
    tpu.vector_store %arg16[%c7_111, %c16_112], %71 {strides = array<i32>} : memref<10x384xf32, #tpu.memory_space<vmem>>, vector<1x352xf32>,
    %c10_113 = arith.constant 10 : index
    %c0_114 = arith.constant 0 : index
    %73 = vector.load %arg19[%c10_113, %c0_114] : memref<12x352xf32, #tpu.memory_space<vmem>>, vector<1x352xf32>
    %c8_115 = arith.constant 8 : index
    %c16_116 = arith.constant 16 : index
    %74 = vector.load %arg15[%c8_115, %c16_116] : memref<10x384xf32, #tpu.memory_space<vmem>>, vector<1x352xf32>
    tpu.vector_store %arg15[%c8_115, %c16_116], %73 {strides = array<i32>} : memref<10x384xf32, #tpu.memory_space<vmem>>, vector<1x352xf32>,
    %c11_117 = arith.constant 11 : index
    %c0_118 = arith.constant 0 : index
    %75 = vector.load %arg19[%c11_117, %c0_118] : memref<12x352xf32, #tpu.memory_space<vmem>>, vector<1x352xf32>
    %c8_119 = arith.constant 8 : index
    %c16_120 = arith.constant 16 : index
    %76 = vector.load %arg16[%c8_119, %c16_120] : memref<10x384xf32, #tpu.memory_space<vmem>>, vector<1x352xf32>
    tpu.vector_store %arg16[%c8_119, %c16_120], %75 {strides = array<i32>} : memref<10x384xf32, #tpu.memory_space<vmem>>, vector<1x352xf32>,
    %c0_121 = arith.constant 0 : index
    %c0_122 = arith.constant 0 : index
    %77 = vector.load %arg15[%c0_121, %c0_122] : memref<10x384xf32, #tpu.memory_space<vmem>>, vector<10x384xf32>
    %c0_123 = arith.constant 0 : index
    %c0_124 = arith.constant 0 : index
    %78 = vector.load %arg4[%c0_123, %c0_124] : memref<384x192xf32, #tpu.memory_space<vmem>>, vector<384x192xf32>
    %cst_125 = arith.constant dense<0.000000e+00> : vector<10x192xf32>
    %79 = tpu.matmul %77, %78, %cst_125 {dimension_numbers = #tpu.dot_dimension_numbers<[1], [0], [0], [1], [0, 0, 1, 1], [], []>} : vector<10x384xf32>, vector<384x192xf32>, vector<10x192xf32> -> vector<10x192xf32>
    %c0_126 = arith.constant 0 : index
    %c0_127 = arith.constant 0 : index
    %80 = vector.load %arg16[%c0_126, %c0_127] : memref<10x384xf32, #tpu.memory_space<vmem>>, vector<10x384xf32>
    %c0_128 = arith.constant 0 : index
    %c0_129 = arith.constant 0 : index
    %81 = vector.load %arg5[%c0_128, %c0_129] : memref<384x192xf32, #tpu.memory_space<vmem>>, vector<384x192xf32>
    %cst_130 = arith.constant dense<0.000000e+00> : vector<10x192xf32>
    %82 = tpu.matmul %80, %81, %cst_130 {dimension_numbers = #tpu.dot_dimension_numbers<[1], [0], [0], [1], [0, 0, 1, 1], [], []>} : vector<10x384xf32>, vector<384x192xf32>, vector<10x192xf32> -> vector<10x192xf32>
    %83 = arith.addf %79, %82 : vector<10x192xf32>
    %c0_131 = arith.constant 0 : index
    %c0_132 = arith.constant 0 : index
    %84 = vector.load %arg6[%c0_131, %c0_132] : memref<1x192xf32, #tpu.memory_space<vmem>>, vector<1x192xf32>
    %85 = vector.broadcast %84 : vector<1x192xf32> to vector<10x192xf32>
    %86 = arith.addf %83, %85 : vector<10x192xf32>
    %cst_133 = arith.constant 0.000000e+00 : f32
    %87 = vector.broadcast %cst_133 : f32 to vector<10x192xf32>
    %88 = arith.maximumf %86, %87 : vector<10x192xf32>
    %c0_134 = arith.constant 0 : index
    %c0_135 = arith.constant 0 : index
    %89 = vector.load %arg20[%c0_134, %c0_135] : memref<10x192xf32, #tpu.memory_space<vmem>>, vector<10x192xf32>
    tpu.vector_store %arg20[%c0_134, %c0_135], %88 {strides = array<i32>} : memref<10x192xf32, #tpu.memory_space<vmem>>, vector<10x192xf32>,
    %cst_136 = arith.constant 0.000000e+00 : f32
    %90 = vector.broadcast %cst_136 : f32 to vector<8x256xf32>
    %c0_137 = arith.constant 0 : index
    %c0_138 = arith.constant 0 : index
    %91 = vector.load %arg17[%c0_137, %c0_138] : memref<8x256xf32, #tpu.memory_space<vmem>>, vector<8x256xf32>
    tpu.vector_store %arg17[%c0_137, %c0_138], %90 {strides = array<i32>} : memref<8x256xf32, #tpu.memory_space<vmem>>, vector<8x256xf32>,
    %cst_139 = arith.constant 0.000000e+00 : f32
    %92 = vector.broadcast %cst_139 : f32 to vector<8x256xf32>
    %c0_140 = arith.constant 0 : index
    %c0_141 = arith.constant 0 : index
    %93 = vector.load %arg18[%c0_140, %c0_141] : memref<8x256xf32, #tpu.memory_space<vmem>>, vector<8x256xf32>
    tpu.vector_store %arg18[%c0_140, %c0_141], %92 {strides = array<i32>} : memref<8x256xf32, #tpu.memory_space<vmem>>, vector<8x256xf32>,
    %c0_142 = arith.constant 0 : index
    %c0_143 = arith.constant 0 : index
    %94 = vector.load %arg20[%c0_142, %c0_143] : memref<10x192xf32, #tpu.memory_space<vmem>>, vector<1x192xf32>
    %c1_144 = arith.constant 1 : index
    %c32 = arith.constant 32 : index
    %95 = vector.load %arg17[%c1_144, %c32] : memref<8x256xf32, #tpu.memory_space<vmem>>, vector<1x192xf32>
    tpu.vector_store %arg17[%c1_144, %c32], %94 {strides = array<i32>} : memref<8x256xf32, #tpu.memory_space<vmem>>, vector<1x192xf32>,
    %c1_145 = arith.constant 1 : index
    %c0_146 = arith.constant 0 : index
    %96 = vector.load %arg20[%c1_145, %c0_146] : memref<10x192xf32, #tpu.memory_space<vmem>>, vector<1x192xf32>
    %c1_147 = arith.constant 1 : index
    %c32_148 = arith.constant 32 : index
    %97 = vector.load %arg18[%c1_147, %c32_148] : memref<8x256xf32, #tpu.memory_space<vmem>>, vector<1x192xf32>
    tpu.vector_store %arg18[%c1_147, %c32_148], %96 {strides = array<i32>} : memref<8x256xf32, #tpu.memory_space<vmem>>, vector<1x192xf32>,
    %c2_149 = arith.constant 2 : index
    %c0_150 = arith.constant 0 : index
    %98 = vector.load %arg20[%c2_149, %c0_150] : memref<10x192xf32, #tpu.memory_space<vmem>>, vector<1x192xf32>
    %c2_151 = arith.constant 2 : index
    %c32_152 = arith.constant 32 : index
    %99 = vector.load %arg17[%c2_151, %c32_152] : memref<8x256xf32, #tpu.memory_space<vmem>>, vector<1x192xf32>
    tpu.vector_store %arg17[%c2_151, %c32_152], %98 {strides = array<i32>} : memref<8x256xf32, #tpu.memory_space<vmem>>, vector<1x192xf32>,
    %c3_153 = arith.constant 3 : index
    %c0_154 = arith.constant 0 : index
    %100 = vector.load %arg20[%c3_153, %c0_154] : memref<10x192xf32, #tpu.memory_space<vmem>>, vector<1x192xf32>
    %c2_155 = arith.constant 2 : index
    %c32_156 = arith.constant 32 : index
    %101 = vector.load %arg18[%c2_155, %c32_156] : memref<8x256xf32, #tpu.memory_space<vmem>>, vector<1x192xf32>
    tpu.vector_store %arg18[%c2_155, %c32_156], %100 {strides = array<i32>} : memref<8x256xf32, #tpu.memory_space<vmem>>, vector<1x192xf32>,
    %c4_157 = arith.constant 4 : index
    %c0_158 = arith.constant 0 : index
    %102 = vector.load %arg20[%c4_157, %c0_158] : memref<10x192xf32, #tpu.memory_space<vmem>>, vector<1x192xf32>
    %c3_159 = arith.constant 3 : index
    %c32_160 = arith.constant 32 : index
    %103 = vector.load %arg17[%c3_159, %c32_160] : memref<8x256xf32, #tpu.memory_space<vmem>>, vector<1x192xf32>
    tpu.vector_store %arg17[%c3_159, %c32_160], %102 {strides = array<i32>} : memref<8x256xf32, #tpu.memory_space<vmem>>, vector<1x192xf32>,
    %c5_161 = arith.constant 5 : index
    %c0_162 = arith.constant 0 : index
    %104 = vector.load %arg20[%c5_161, %c0_162] : memref<10x192xf32, #tpu.memory_space<vmem>>, vector<1x192xf32>
    %c5_163 = arith.constant 5 : index
    %c32_164 = arith.constant 32 : index
    %105 = vector.load %arg17[%c5_163, %c32_164] : memref<8x256xf32, #tpu.memory_space<vmem>>, vector<1x192xf32>
    tpu.vector_store %arg17[%c5_163, %c32_164], %104 {strides = array<i32>} : memref<8x256xf32, #tpu.memory_space<vmem>>, vector<1x192xf32>,
    %c6_165 = arith.constant 6 : index
    %c0_166 = arith.constant 0 : index
    %106 = vector.load %arg20[%c6_165, %c0_166] : memref<10x192xf32, #tpu.memory_space<vmem>>, vector<1x192xf32>
    %c5_167 = arith.constant 5 : index
    %c32_168 = arith.constant 32 : index
    %107 = vector.load %arg18[%c5_167, %c32_168] : memref<8x256xf32, #tpu.memory_space<vmem>>, vector<1x192xf32>
    tpu.vector_store %arg18[%c5_167, %c32_168], %106 {strides = array<i32>} : memref<8x256xf32, #tpu.memory_space<vmem>>, vector<1x192xf32>,
    %c7_169 = arith.constant 7 : index
    %c0_170 = arith.constant 0 : index
    %108 = vector.load %arg20[%c7_169, %c0_170] : memref<10x192xf32, #tpu.memory_space<vmem>>, vector<1x192xf32>
    %c6_171 = arith.constant 6 : index
    %c32_172 = arith.constant 32 : index
    %109 = vector.load %arg17[%c6_171, %c32_172] : memref<8x256xf32, #tpu.memory_space<vmem>>, vector<1x192xf32>
    tpu.vector_store %arg17[%c6_171, %c32_172], %108 {strides = array<i32>} : memref<8x256xf32, #tpu.memory_space<vmem>>, vector<1x192xf32>,
    %c8_173 = arith.constant 8 : index
    %c0_174 = arith.constant 0 : index
    %110 = vector.load %arg20[%c8_173, %c0_174] : memref<10x192xf32, #tpu.memory_space<vmem>>, vector<1x192xf32>
    %c6_175 = arith.constant 6 : index
    %c32_176 = arith.constant 32 : index
    %111 = vector.load %arg18[%c6_175, %c32_176] : memref<8x256xf32, #tpu.memory_space<vmem>>, vector<1x192xf32>
    tpu.vector_store %arg18[%c6_175, %c32_176], %110 {strides = array<i32>} : memref<8x256xf32, #tpu.memory_space<vmem>>, vector<1x192xf32>,
    %c9_177 = arith.constant 9 : index
    %c0_178 = arith.constant 0 : index
    %112 = vector.load %arg20[%c9_177, %c0_178] : memref<10x192xf32, #tpu.memory_space<vmem>>, vector<1x192xf32>
    %c7_179 = arith.constant 7 : index
    %c32_180 = arith.constant 32 : index
    %113 = vector.load %arg17[%c7_179, %c32_180] : memref<8x256xf32, #tpu.memory_space<vmem>>, vector<1x192xf32>
    tpu.vector_store %arg17[%c7_179, %c32_180], %112 {strides = array<i32>} : memref<8x256xf32, #tpu.memory_space<vmem>>, vector<1x192xf32>,
    %c0_181 = arith.constant 0 : index
    %c0_182 = arith.constant 0 : index
    %114 = vector.load %arg17[%c0_181, %c0_182] : memref<8x256xf32, #tpu.memory_space<vmem>>, vector<8x256xf32>
    %c0_183 = arith.constant 0 : index
    %c0_184 = arith.constant 0 : index
    %115 = vector.load %arg7[%c0_183, %c0_184] : memref<256x128xf32, #tpu.memory_space<vmem>>, vector<256x128xf32>
    %cst_185 = arith.constant dense<0.000000e+00> : vector<8x128xf32>
    %116 = tpu.matmul %114, %115, %cst_185 {dimension_numbers = #tpu.dot_dimension_numbers<[1], [0], [0], [1], [0, 0, 1, 1], [], []>} : vector<8x256xf32>, vector<256x128xf32>, vector<8x128xf32> -> vector<8x128xf32>
    %c0_186 = arith.constant 0 : index
    %c0_187 = arith.constant 0 : index
    %117 = vector.load %arg18[%c0_186, %c0_187] : memref<8x256xf32, #tpu.memory_space<vmem>>, vector<8x256xf32>
    %c0_188 = arith.constant 0 : index
    %c0_189 = arith.constant 0 : index
    %118 = vector.load %arg8[%c0_188, %c0_189] : memref<256x128xf32, #tpu.memory_space<vmem>>, vector<256x128xf32>
    %cst_190 = arith.constant dense<0.000000e+00> : vector<8x128xf32>
    %119 = tpu.matmul %117, %118, %cst_190 {dimension_numbers = #tpu.dot_dimension_numbers<[1], [0], [0], [1], [0, 0, 1, 1], [], []>} : vector<8x256xf32>, vector<256x128xf32>, vector<8x128xf32> -> vector<8x128xf32>
    %120 = arith.addf %116, %119 : vector<8x128xf32>
    %c0_191 = arith.constant 0 : index
    %c0_192 = arith.constant 0 : index
    %121 = vector.load %arg9[%c0_191, %c0_192] : memref<1x128xf32, #tpu.memory_space<vmem>>, vector<1x128xf32>
    %122 = vector.broadcast %121 : vector<1x128xf32> to vector<8x128xf32>
    %123 = arith.addf %120, %122 : vector<8x128xf32>
    %cst_193 = arith.constant 0.000000e+00 : f32
    %124 = vector.broadcast %cst_193 : f32 to vector<8x128xf32>
    %125 = arith.maximumf %123, %124 : vector<8x128xf32>
    %c0_194 = arith.constant 0 : index
    %c0_195 = arith.constant 0 : index
    %126 = vector.load %arg10[%c0_194, %c0_195] : memref<8x128xf32, #tpu.memory_space<vmem>>, vector<8x128xf32>
    %127 = arith.mulf %125, %126 : vector<8x128xf32>
    %128 = vector.extract_strided_slice %127 {offsets = [0, 0], sizes = [4, 128], strides = [1, 1]} : vector<8x128xf32> to vector<4x128xf32>
    %129 = vector.shape_cast %128 : vector<4x128xf32> to vector<1x4x128xf32>
    %cst_196 = arith.constant dense<0.000000e+00> : vector<1xf32>
    %130 = vector.multi_reduction <add>, %129, %cst_196 [1, 2] : vector<1x4x128xf32> to vector<1xf32>
    %131 = vector.shape_cast %130 : vector<1xf32> to vector<1x1x1xf32>
    %132 = vector.extract %131[0, 0, 0] : f32 from vector<1x1x1xf32>
    %c0_197 = arith.constant 0 : index
    %c0_198 = arith.constant 0 : index
    %133 = vector.load %arg11[%c0_197, %c0_198] : memref<1x1xf32, #tpu.memory_space<vmem>>, vector<1x1xf32>
    %134 = vector.broadcast %132 : f32 to vector<1x1xf32>
    %135 = arith.addf %133, %134 : vector<1x1xf32>
    %c0_199 = arith.constant 0 : index
    %c0_200 = arith.constant 0 : index
    %136 = vector.load %arg12[%c0_199, %c0_200] : memref<2x1xf32, #tpu.memory_space<vmem>>, vector<1x1xf32>
    tpu.vector_store %arg12[%c0_199, %c0_200], %135 {strides = array<i32>} : memref<2x1xf32, #tpu.memory_space<vmem>>, vector<1x1xf32>,
    %137 = vector.extract_strided_slice %127 {offsets = [4, 0], sizes = [4, 128], strides = [1, 1]} : vector<8x128xf32> to vector<4x128xf32>
    %138 = vector.shape_cast %137 : vector<4x128xf32> to vector<1x4x128xf32>
    %cst_201 = arith.constant dense<0.000000e+00> : vector<1xf32>
    %139 = vector.multi_reduction <add>, %138, %cst_201 [1, 2] : vector<1x4x128xf32> to vector<1xf32>
    %140 = vector.shape_cast %139 : vector<1xf32> to vector<1x1x1xf32>
    %141 = vector.extract %140[0, 0, 0] : f32 from vector<1x1x1xf32>
    %c0_202 = arith.constant 0 : index
    %c0_203 = arith.constant 0 : index
    %142 = vector.load %arg11[%c0_202, %c0_203] : memref<1x1xf32, #tpu.memory_space<vmem>>, vector<1x1xf32>
    %143 = vector.broadcast %141 : f32 to vector<1x1xf32>
    %144 = arith.addf %142, %143 : vector<1x1xf32>
    %c1_204 = arith.constant 1 : index
    %c0_205 = arith.constant 0 : index
    %145 = vector.load %arg12[%c1_204, %c0_205] : memref<2x1xf32, #tpu.memory_space<vmem>>, vector<1x1xf32>
    tpu.vector_store %arg12[%c1_204, %c0_205], %144 {strides = array<i32>} : memref<2x1xf32, #tpu.memory_space<vmem>>, vector<1x1xf32>,
    return
  }
}

</mosaic_0001>

<llo_original>
// kernel: forward.1
$region0: #{forward.1}
  #allocation0 [shape = 'u32[]', space=smem, size = 0x4, offset = 0x4, fixed_abs, tag = 'smem constant byte address 0x4 - core index']
  #allocation1 [shape = 'u32[144,128]{1,0:T(1,128)}', space=vmem, size = 0x12000, scoped, tag = 'internal scratch']
  #allocation2 [shape = 'f32[12,704]{1,0:T(8,128)}', space=vmem, size = 0xc000, scoped, tag = 'scratch operand']
  #allocation3 [shape = 'f32[12,704]{1,0:T(8,128)}', space=vmem, size = 0xc000, scoped, tag = 'scratch operand']
  #allocation4 [shape = 'f32[10,384]{1,0:T(8,128)}', space=vmem, size = 0x6000, scoped, tag = 'scratch operand']
  #allocation5 [shape = 'f32[10,384]{1,0:T(8,128)}', space=vmem, size = 0x6000, scoped, tag = 'scratch operand']
  #allocation6 [shape = 'f32[8,256]{1,0:T(8,128)}', space=vmem, size = 0x2000, scoped, tag = 'scratch operand']
  #allocation7 [shape = 'f32[8,256]{1,0:T(8,128)}', space=vmem, size = 0x2000, scoped, tag = 'scratch operand']
  #allocation8 [shape = 'f32[12,352]{1,0:T(8,128)}', space=vmem, size = 0x6000, scoped, tag = 'scratch operand']
  #allocation9 [shape = 'f32[10,192]{1,0:T(8,128)}', space=vmem, size = 0x4000, scoped, tag = 'scratch operand']
  #allocation10 [shape = 'f32[1,1]{1,0:T(1,128)S(1)}', space=vmem, size = 0x200, scoped, tag = 'scoped memory for forward.1']
  %s0 = inlined_call_operand.vmem [shape: f32[16,688], index: 0, kind: input, shape index: {}]
  %s1 = inlined_call_operand.vmem [shape: f32[704,352], index: 1, kind: input, shape index: {}]
  %s2 = inlined_call_operand.vmem [shape: f32[704,352], index: 2, kind: input, shape index: {}]
  %s3 = inlined_call_operand.vmem [shape: f32[1,352], index: 3, kind: input, shape index: {}]
  %s4 = inlined_call_operand.vmem [shape: f32[384,192], index: 4, kind: input, shape index: {}]
  %s5 = inlined_call_operand.vmem [shape: f32[384,192], index: 5, kind: input, shape index: {}]
  %s6 = inlined_call_operand.vmem [shape: f32[1,192], index: 6, kind: input, shape index: {}]
  %s7 = inlined_call_operand.vmem [shape: f32[256,128], index: 7, kind: input, shape index: {}]
  %s8 = inlined_call_operand.vmem [shape: f32[256,128], index: 8, kind: input, shape index: {}]
  %s9 = inlined_call_operand.vmem [shape: f32[1,128], index: 9, kind: input, shape index: {}]
  %s10 = inlined_call_operand.vmem [shape: f32[8,128], index: 10, kind: input, shape index: {}]
  %s11 = inlined_call_operand.<no memory space> [shape: f32[1,1], index: 11, kind: input, shape index: {}]
  %s12 = inlined_call_operand.vmem [shape: f32[2,1], index: 12, kind: output, shape index: {}]
  %s13 = sld [smem:[#allocation0]]
  $region58: #{forward.1} parent=0
    _
  %s15 = ssub.s32 1, %s13
  %s16 = scalar_select 0, %s15, %s13
  %v17 = vstv %s11
  %18 = vst [vmem:[#allocation10] sm:$0x1] %v17
  // Predicated region
  $region2: #{forward.1} parent=0 // pred_check
    _
  $region3: #{forward.1} parent=0 // pred_check_branch
    %20 = sbr.rel (0) target = $region5
  $region4: #{forward.1} parent=0 // pred_region
    _
  $region5: #{forward.1} parent=0 // pred_fallthru
    _
  // Predicated region
  $region6: #{forward.1} parent=0 // pred_check
    _
  $region7: #{forward.1} parent=0 // pred_check_branch
    %22 = sbr.rel (0) target = $region9
  $region8: #{forward.1} parent=0 // pred_region
    _
  $region9: #{forward.1} parent=0 // pred_fallthru
    _
  // Predicated region
  $region10: #{forward.1} parent=0 // pred_check
    _
  $region11: #{forward.1} parent=0 // pred_check_branch
    %24 = sbr.rel (0) target = $region13
  $region12: #{forward.1} parent=0 // pred_region
    _
  $region13: #{forward.1} parent=0 // pred_fallthru
    _
  // Predicated region
  $region14: #{forward.1} parent=0 // pred_check
    _
  $region15: #{forward.1} parent=0 // pred_check_branch
    %26 = sbr.rel (0) target = $region17
  $region16: #{forward.1} parent=0 // pred_region
    _
  $region17: #{forward.1} parent=0 // pred_fallthru
    _
  // Predicated region
  $region18: #{forward.1} parent=0 // pred_check
    _
  $region19: #{forward.1} parent=0 // pred_check_branch
    %28 = sbr.rel (0) target = $region21
  $region20: #{forward.1} parent=0 // pred_region
    _
  $region21: #{forward.1} parent=0 // pred_fallthru
    _
  // Predicated region
  $region22: #{forward.1} parent=0 // pred_check
    _
  $region23: #{forward.1} parent=0 // pred_check_branch
    %30 = sbr.rel (0) target = $region25
  $region24: #{forward.1} parent=0 // pred_region
    _
  $region25: #{forward.1} parent=0 // pred_fallthru
    _
  // Predicated region
  $region26: #{forward.1} parent=0 // pred_check
    _
  $region27: #{forward.1} parent=0 // pred_check_branch
    %32 = sbr.rel (0) target = $region29
  $region28: #{forward.1} parent=0 // pred_region
    _
  $region29: #{forward.1} parent=0 // pred_fallthru
    _
  // Predicated region
  $region30: #{forward.1} parent=0 // pred_check
    _
  $region31: #{forward.1} parent=0 // pred_check_branch
    %34 = sbr.rel (0) target = $region33
  $region32: #{forward.1} parent=0 // pred_region
    _
  $region33: #{forward.1} parent=0 // pred_fallthru
    _
  // Predicated region
  $region34: #{forward.1} parent=0 // pred_check
    _
  $region35: #{forward.1} parent=0 // pred_check_branch
    %36 = sbr.rel (0) target = $region37
  $region36: #{forward.1} parent=0 // pred_region
    _
  $region37: #{forward.1} parent=0 // pred_fallthru
    _
  // Predicated region
  $region38: #{forward.1} parent=0 // pred_check
    _
  $region39: #{forward.1} parent=0 // pred_check_branch
    %38 = sbr.rel (0) target = $region41
  $region40: #{forward.1} parent=0 // pred_region
    _
  $region41: #{forward.1} parent=0 // pred_fallthru
    _
  // Predicated region
  $region42: #{forward.1} parent=0 // pred_check
    _
  $region43: #{forward.1} parent=0 // pred_check_branch
    %40 = sbr.rel (0) target = $region45
  $region44: #{forward.1} parent=0 // pred_region
    _
  $region45: #{forward.1} parent=0 // pred_fallthru
    _
  // Predicated region
  $region46: #{forward.1} parent=0 // pred_check
    _
  $region47: #{forward.1} parent=0 // pred_check_branch
    %42 = sbr.rel (0) target = $region49
  $region48: #{forward.1} parent=0 // pred_region
    _
  $region49: #{forward.1} parent=0 // pred_fallthru
    _
  %43 = vst [vmem:[#allocation2] sm:$0xff] 0.0
  %44 = vst [vmem:[#allocation2 + $0x8] sm:$0xff] 0.0
  %45 = vst [vmem:[#allocation2 + $0x10] sm:$0xff] 0.0
  %46 = vst [vmem:[#allocation2 + $0x18] sm:$0xff] 0.0
  %47 = vst [vmem:[#allocation2 + $0x20] sm:$0xff] 0.0
  %vm48 = vcmask 523264
  %49 = vst.msk [vmem:[#allocation2 + $0x28] sm:$0xff] %vm48, 0.0
  %50 = vst [vmem:[#allocation2 + $0x30] sm:$0xf] 0.0
  %51 = vst [vmem:[#allocation2 + $0x38] sm:$0xf] 0.0
  %52 = vst [vmem:[#allocation2 + $0x40] sm:$0xf] 0.0
  %53 = vst [vmem:[#allocation2 + $0x48] sm:$0xf] 0.0
  %54 = vst [vmem:[#allocation2 + $0x50] sm:$0xf] 0.0
  %vm55 = vcmask 519168
  %56 = vst.msk [vmem:[#allocation2 + $0x58] sm:$0xf] %vm55, 0.0
  %57 = vst [vmem:[#allocation3] sm:$0xff] 0.0
  %58 = vst [vmem:[#allocation3 + $0x8] sm:$0xff] 0.0
  %59 = vst [vmem:[#allocation3 + $0x10] sm:$0xff] 0.0
  %60 = vst [vmem:[#allocation3 + $0x18] sm:$0xff] 0.0
  %61 = vst [vmem:[#allocation3 + $0x20] sm:$0xff] 0.0
  %62 = vst.msk [vmem:[#allocation3 + $0x28] sm:$0xff] %vm48, 0.0
  %63 = vst [vmem:[#allocation3 + $0x30] sm:$0xf] 0.0
  %64 = vst [vmem:[#allocation3 + $0x38] sm:$0xf] 0.0
  %65 = vst [vmem:[#allocation3 + $0x40] sm:$0xf] 0.0
  %66 = vst [vmem:[#allocation3 + $0x48] sm:$0xf] 0.0
  %67 = vst [vmem:[#allocation3 + $0x50] sm:$0xf] 0.0
  %68 = vst.msk [vmem:[#allocation3 + $0x58] sm:$0xf] %vm55, 0.0
  %v69 = vld [vmem:[%s0] ss:$8 sm:$0xf]
  %v70 = vld [vmem:[%s0] ss:$8 sm:$0x30]
  %v71 = vor.u32 %v69, %v70
  %73 = vrot.lane.b32.xlu0 %v71, 8
  %v74 = vpop.permute.xlu0 %73
  %v75 = vrot.slane %v74, 7
  %vm76 = vcmask 64512
  %v77 = vsel %vm76, %v75, %v74
  %v79 = vlaneseq
  %vm80 = vcmp.ge.s32.totalorder %v79, 8
  %vm81 = vcmp.lt.s32.totalorder %v79, 696
  %vm82 = vmand %vm80, %vm81
  %s83 = scalar_lea.vmem [#allocation2], 1
  %84 = vst.msk [vmem:[%s83] ss:$8 sm:$0xf] %vm82, %v77
  %85 = vst.msk [vmem:[%s83] ss:$8 sm:$0x30] %vm82, %v77
  %s86 = scalar_lea.vmem %s0, 1
  %v87 = vld [vmem:[%s86] ss:$8 sm:$0xf]
  %v88 = vld [vmem:[%s86] ss:$8 sm:$0x30]
  %v89 = vor.u32 %v87, %v88
  %91 = vrot.lane.b32.xlu0 %v89, 8
  %v92 = vpop.permute.xlu0 %91
  %v93 = vrot.slane %v92, 7
  %v94 = vsel %vm76, %v93, %v92
  %s96 = scalar_lea.vmem [#allocation3], 1
  %97 = vst.msk [vmem:[%s96] ss:$8 sm:$0xf] %vm82, %v94
  %98 = vst.msk [vmem:[%s96] ss:$8 sm:$0x30] %vm82, %v94
  %s99 = scalar_lea.vmem %s0, 2
  %v100 = vld [vmem:[%s99] ss:$8 sm:$0xf]
  %v101 = vld [vmem:[%s99] ss:$8 sm:$0x30]
  %v102 = vor.u32 %v100, %v101
  %104 = vrot.lane.b32.xlu0 %v102, 8
  %v105 = vpop.permute.xlu0 %104
  %v106 = vrot.slane %v105, 7
  %v107 = vsel %vm76, %v106, %v105
  %s109 = scalar_lea.vmem [#allocation2], 2
  %110 = vst.msk [vmem:[%s109] ss:$8 sm:$0xf] %vm82, %v107
  %111 = vst.msk [vmem:[%s109] ss:$8 sm:$0x30] %vm82, %v107
  %s112 = scalar_lea.vmem %s0, 3
  %v113 = vld [vmem:[%s112] ss:$8 sm:$0xf]
  %v114 = vld [vmem:[%s112] ss:$8 sm:$0x30]
  %v115 = vor.u32 %v113, %v114
  %117 = vrot.lane.b32.xlu0 %v115, 8
  %v118 = vpop.permute.xlu0 %117
  %v119 = vrot.slane %v118, 7
  %v120 = vsel %vm76, %v119, %v118
  %s122 = scalar_lea.vmem [#allocation3], 2
  %123 = vst.msk [vmem:[%s122] ss:$8 sm:$0xf] %vm82, %v120
  %124 = vst.msk [vmem:[%s122] ss:$8 sm:$0x30] %vm82, %v120
  %s125 = scalar_lea.vmem %s0, 4
  %v126 = vld [vmem:[%s125] ss:$8 sm:$0xf]
  %v127 = vld [vmem:[%s125] ss:$8 sm:$0x30]
  %v128 = vor.u32 %v126, %v127
  %130 = vrot.lane.b32.xlu0 %v128, 8
  %v131 = vpop.permute.xlu0 %130
  %v132 = vrot.slane %v131, 7
  %v133 = vsel %vm76, %v132, %v131
  %s135 = scalar_lea.vmem [#allocation2], 3
  %136 = vst.msk [vmem:[%s135] ss:$8 sm:$0xf] %vm82, %v133
  %137 = vst.msk [vmem:[%s135] ss:$8 sm:$0x30] %vm82, %v133
  %s138 = scalar_lea.vmem %s0, 5
  %v139 = vld [vmem:[%s138] ss:$8 sm:$0xf]
  %v140 = vld [vmem:[%s138] ss:$8 sm:$0x30]
  %v141 = vor.u32 %v139, %v140
  %143 = vrot.lane.b32.xlu0 %v141, 8
  %v144 = vpop.permute.xlu0 %143
  %v145 = vrot.slane %v144, 7
  %v146 = vsel %vm76, %v145, %v144
  %s148 = scalar_lea.vmem [#allocation3], 3
  %149 = vst.msk [vmem:[%s148] ss:$8 sm:$0xf] %vm82, %v146
  %150 = vst.msk [vmem:[%s148] ss:$8 sm:$0x30] %vm82, %v146
  %s151 = scalar_lea.vmem %s0, 6
  %v152 = vld [vmem:[%s151] ss:$8 sm:$0xf]
  %v153 = vld [vmem:[%s151] ss:$8 sm:$0x30]
  %v154 = vor.u32 %v152, %v153
  %156 = vrot.lane.b32.xlu0 %v154, 8
  %v157 = vpop.permute.xlu0 %156
  %v158 = vrot.slane %v157, 7
  %v159 = vsel %vm76, %v158, %v157
  %s161 = scalar_lea.vmem [#allocation2], 4
  %162 = vst.msk [vmem:[%s161] ss:$8 sm:$0xf] %vm82, %v159
  %163 = vst.msk [vmem:[%s161] ss:$8 sm:$0x30] %vm82, %v159
  %s164 = scalar_lea.vmem %s0, 7
  %v165 = vld [vmem:[%s164] ss:$8 sm:$0xf]
  %v166 = vld [vmem:[%s164] ss:$8 sm:$0x30]
  %v167 = vor.u32 %v165, %v166
  %169 = vrot.lane.b32.xlu0 %v167, 8
  %v170 = vpop.permute.xlu0 %169
  %v171 = vrot.slane %v170, 7
  %v172 = vsel %vm76, %v171, %v170
  %s174 = scalar_lea.vmem [#allocation3], 4
  %175 = vst.msk [vmem:[%s174] ss:$8 sm:$0xf] %vm82, %v172
  %176 = vst.msk [vmem:[%s174] ss:$8 sm:$0x30] %vm82, %v172
  %s177 = scalar_lea.vmem %s0, 48
  %v178 = vld [vmem:[%s177] ss:$8 sm:$0xf]
  %v179 = vld [vmem:[%s177] ss:$8 sm:$0x30]
  %v180 = vor.u32 %v178, %v179
  %182 = vrot.lane.b32.xlu0 %v180, 8
  %v183 = vpop.permute.xlu0 %182
  %v184 = vrot.slane %v183, 7
  %v185 = vsel %vm76, %v184, %v183
  %s187 = scalar_lea.vmem [#allocation2], 7
  %188 = vst.msk [vmem:[%s187] ss:$8 sm:$0xf] %vm82, %v185
  %189 = vst.msk [vmem:[%s187] ss:$8 sm:$0x30] %vm82, %v185
  %s190 = scalar_lea.vmem %s0, 49
  %v191 = vld [vmem:[%s190] ss:$8 sm:$0xf]
  %v192 = vld [vmem:[%s190] ss:$8 sm:$0x30]
  %v193 = vor.u32 %v191, %v192
  %195 = vrot.lane.b32.xlu0 %v193, 8
  %v196 = vpop.permute.xlu0 %195
  %v197 = vrot.slane %v196, 7
  %v198 = vsel %vm76, %v197, %v196
  %s200 = scalar_lea.vmem [#allocation3], 7
  %201 = vst.msk [vmem:[%s200] ss:$8 sm:$0xf] %vm82, %v198
  %202 = vst.msk [vmem:[%s200] ss:$8 sm:$0x30] %vm82, %v198
  %s203 = scalar_lea.vmem %s0, 50
  %v204 = vld [vmem:[%s203] ss:$8 sm:$0xf]
  %v205 = vld [vmem:[%s203] ss:$8 sm:$0x30]
  %v206 = vor.u32 %v204, %v205
  %208 = vrot.lane.b32.xlu0 %v206, 8
  %v209 = vpop.permute.xlu0 %208
  %v210 = vrot.slane %v209, 7
  %v211 = vsel %vm76, %v210, %v209
  %s213 = scalar_lea.vmem [#allocation2], 48
  %214 = vst.msk [vmem:[%s213] ss:$8 sm:$0xf] %vm82, %v211
  %215 = vst.msk [vmem:[%s213] ss:$8 sm:$0x30] %vm82, %v211
  %s216 = scalar_lea.vmem %s0, 51
  %v217 = vld [vmem:[%s216] ss:$8 sm:$0xf]
  %v218 = vld [vmem:[%s216] ss:$8 sm:$0x30]
  %v219 = vor.u32 %v217, %v218
  %221 = vrot.lane.b32.xlu0 %v219, 8
  %v222 = vpop.permute.xlu0 %221
  %v223 = vrot.slane %v222, 7
  %v224 = vsel %vm76, %v223, %v222
  %s226 = scalar_lea.vmem [#allocation3], 48
  %227 = vst.msk [vmem:[%s226] ss:$8 sm:$0xf] %vm82, %v224
  %228 = vst.msk [vmem:[%s226] ss:$8 sm:$0x30] %vm82, %v224
  %s229 = scalar_lea.vmem %s0, 52
  %v230 = vld [vmem:[%s229] ss:$8 sm:$0xf]
  %v231 = vld [vmem:[%s229] ss:$8 sm:$0x30]
  %v232 = vor.u32 %v230, %v231
  %234 = vrot.lane.b32.xlu0 %v232, 8
  %v235 = vpop.permute.xlu0 %234
  %v236 = vrot.slane %v235, 7
  %v237 = vsel %vm76, %v236, %v235
  %s239 = scalar_lea.vmem [#allocation2], 49
  %240 = vst.msk [vmem:[%s239] ss:$8 sm:$0xf] %vm82, %v237
  %241 = vst.msk [vmem:[%s239] ss:$8 sm:$0x30] %vm82, %v237
  %s242 = scalar_lea.vmem %s0, 53
  %v243 = vld [vmem:[%s242] ss:$8 sm:$0xf]
  %v244 = vld [vmem:[%s242] ss:$8 sm:$0x30]
  %v245 = vor.u32 %v243, %v244
  %247 = vrot.lane.b32.xlu0 %v245, 8
  %v248 = vpop.permute.xlu0 %247
  %v249 = vrot.slane %v248, 7
  %v250 = vsel %vm76, %v249, %v248
  %s252 = scalar_lea.vmem [#allocation3], 49
  %253 = vst.msk [vmem:[%s252] ss:$8 sm:$0xf] %vm82, %v250
  %254 = vst.msk [vmem:[%s252] ss:$8 sm:$0x30] %vm82, %v250
  %s255 = scalar_lea.vmem %s0, 54
  %v256 = vld [vmem:[%s255] ss:$8 sm:$0xf]
  %v257 = vld [vmem:[%s255] ss:$8 sm:$0x30]
  %v258 = vor.u32 %v256, %v257
  %260 = vrot.lane.b32.xlu0 %v258, 8
  %v261 = vpop.permute.xlu0 %260
  %v262 = vrot.slane %v261, 7
  %v263 = vsel %vm76, %v262, %v261
  %s265 = scalar_lea.vmem [#allocation2], 50
  %266 = vst.msk [vmem:[%s265] ss:$8 sm:$0xf] %vm82, %v263
  %267 = vst.msk [vmem:[%s265] ss:$8 sm:$0x30] %vm82, %v263
  %s268 = scalar_lea.vmem %s0, 55
  %v269 = vld [vmem:[%s268] ss:$8 sm:$0xf]
  %v270 = vld [vmem:[%s268] ss:$8 sm:$0x30]
  %v271 = vor.u32 %v269, %v270
  %273 = vrot.lane.b32.xlu0 %v271, 8
  %v274 = vpop.permute.xlu0 %273
  %v275 = vrot.slane %v274, 7
  %v276 = vsel %vm76, %v275, %v274
  %s278 = scalar_lea.vmem [#allocation3], 50
  %279 = vst.msk [vmem:[%s278] ss:$8 sm:$0xf] %vm82, %v276
  %280 = vst.msk [vmem:[%s278] ss:$8 sm:$0x30] %vm82, %v276
  %v281 = vld [vmem:[#allocation2] sm:$0xff]
  %v282 = vld [vmem:[#allocation2 + $0x8] sm:$0xff]
  %v283 = vld [vmem:[#allocation2 + $0x10] sm:$0xff]
  %v284 = vld [vmem:[#allocation2 + $0x18] sm:$0xff]
  %v285 = vld [vmem:[#allocation2 + $0x20] sm:$0xff]
  %v286 = vld [vmem:[#allocation2 + $0x28] sm:$0xff]
  %v287 = vld [vmem:[#allocation2 + $0x30] sm:$0xf]
  %v288 = vld [vmem:[#allocation2 + $0x38] sm:$0xf]
  %v289 = vld [vmem:[#allocation2 + $0x40] sm:$0xf]
  %v290 = vld [vmem:[#allocation2 + $0x48] sm:$0xf]
  %v291 = vld [vmem:[#allocation2 + $0x50] sm:$0xf]
  %v292 = vld [vmem:[#allocation2 + $0x58] sm:$0xf]
  %v293 = vld [vmem:[%s1] sm:$0xff]
  %v294 = vld [vmem:[%s1 + $0x8] sm:$0xff]
  %v295 = vld [vmem:[%s1 + $0x10] sm:$0xff]
  %v296 = vld [vmem:[%s1 + $0x18] sm:$0xff]
  %v297 = vld [vmem:[%s1 + $0x20] sm:$0xff]
  %v298 = vld [vmem:[%s1 + $0x28] sm:$0xff]
  %v299 = vld [vmem:[%s1 + $0x30] sm:$0xff]
  %v300 = vld [vmem:[%s1 + $0x38] sm:$0xff]
  %v301 = vld [vmem:[%s1 + $0x40] sm:$0xff]
  %v302 = vld [vmem:[%s1 + $0x48] sm:$0xff]
  %v303 = vld [vmem:[%s1 + $0x50] sm:$0xff]
  %v304 = vld [vmem:[%s1 + $0x58] sm:$0xff]
  %v305 = vld [vmem:[%s1 + $0x60] sm:$0xff]
  %v306 = vld [vmem:[%s1 + $0x68] sm:$0xff]
  %v307 = vld [vmem:[%s1 + $0x70] sm:$0xff]
  %v308 = vld [vmem:[%s1 + $0x78] sm:$0xff]
  %v309 = vld [vmem:[%s1 + $0x80] sm:$0xff]
  %v310 = vld [vmem:[%s1 + $0x88] sm:$0xff]
  %v311 = vld [vmem:[%s1 + $0x90] sm:$0xff]
  %v312 = vld [vmem:[%s1 + $0x98] sm:$0xff]
  %v313 = vld [vmem:[%s1 + $0xa0] sm:$0xff]
  %v314 = vld [vmem:[%s1 + $0xa8] sm:$0xff]
  %v315 = vld [vmem:[%s1 + $0xb0] sm:$0xff]
  %v316 = vld [vmem:[%s1 + $0xb8] sm:$0xff]
  %v317 = vld [vmem:[%s1 + $0xc0] sm:$0xff]
  %v318 = vld [vmem:[%s1 + $0xc8] sm:$0xff]
  %v319 = vld [vmem:[%s1 + $0xd0] sm:$0xff]
  %v320 = vld [vmem:[%s1 + $0xd8] sm:$0xff]
  %v321 = vld [vmem:[%s1 + $0xe0] sm:$0xff]
  %v322 = vld [vmem:[%s1 + $0xe8] sm:$0xff]
  %v323 = vld [vmem:[%s1 + $0xf0] sm:$0xff]
  %v324 = vld [vmem:[%s1 + $0xf8] sm:$0xff]
  %v325 = vld [vmem:[%s1 + $0x100] sm:$0xff]
  %v326 = vld [vmem:[%s1 + $0x108] sm:$0xff]
  %v327 = vld [vmem:[%s1 + $0x110] sm:$0xff]
  %v328 = vld [vmem:[%s1 + $0x118] sm:$0xff]
  %v329 = vld [vmem:[%s1 + $0x120] sm:$0xff]
  %v330 = vld [vmem:[%s1 + $0x128] sm:$0xff]
  %v331 = vld [vmem:[%s1 + $0x130] sm:$0xff]
  %v332 = vld [vmem:[%s1 + $0x138] sm:$0xff]
  %v333 = vld [vmem:[%s1 + $0x140] sm:$0xff]
  %v334 = vld [vmem:[%s1 + $0x148] sm:$0xff]
  %v335 = vld [vmem:[%s1 + $0x150] sm:$0xff]
  %v336 = vld [vmem:[%s1 + $0x158] sm:$0xff]
  %v337 = vld [vmem:[%s1 + $0x160] sm:$0xff]
  %v338 = vld [vmem:[%s1 + $0x168] sm:$0xff]
  %v339 = vld [vmem:[%s1 + $0x170] sm:$0xff]
  %v340 = vld [vmem:[%s1 + $0x178] sm:$0xff]
  %v341 = vld [vmem:[%s1 + $0x180] sm:$0xff]
  %v342 = vld [vmem:[%s1 + $0x188] sm:$0xff]
  %v343 = vld [vmem:[%s1 + $0x190] sm:$0xff]
  %v344 = vld [vmem:[%s1 + $0x198] sm:$0xff]
  %v345 = vld [vmem:[%s1 + $0x1a0] sm:$0xff]
  %v346 = vld [vmem:[%s1 + $0x1a8] sm:$0xff]
  %v347 = vld [vmem:[%s1 + $0x1b0] sm:$0xff]
  %v348 = vld [vmem:[%s1 + $0x1b8] sm:$0xff]
  %v349 = vld [vmem:[%s1 + $0x1c0] sm:$0xff]
  %v350 = vld [vmem:[%s1 + $0x1c8] sm:$0xff]
  %v351 = vld [vmem:[%s1 + $0x1d0] sm:$0xff]
  %v352 = vld [vmem:[%s1 + $0x1d8] sm:$0xff]
  %v353 = vld [vmem:[%s1 + $0x1e0] sm:$0xff]
  %v354 = vld [vmem:[%s1 + $0x1e8] sm:$0xff]
  %v355 = vld [vmem:[%s1 + $0x1f0] sm:$0xff]
  %v356 = vld [vmem:[%s1 + $0x1f8] sm:$0xff]
  %v357 = vld [vmem:[%s1 + $0x200] sm:$0xff]
  %v358 = vld [vmem:[%s1 + $0x208] sm:$0xff]
  %v359 = vld [vmem:[%s1 + $0x210] sm:$0xff]
  %v360 = vld [vmem:[%s1 + $0x218] sm:$0xff]
  %v361 = vld [vmem:[%s1 + $0x220] sm:$0xff]
  %v362 = vld [vmem:[%s1 + $0x228] sm:$0xff]
  %v363 = vld [vmem:[%s1 + $0x230] sm:$0xff]
  %v364 = vld [vmem:[%s1 + $0x238] sm:$0xff]
  %v365 = vld [vmem:[%s1 + $0x240] sm:$0xff]
  %v366 = vld [vmem:[%s1 + $0x248] sm:$0xff]
  %v367 = vld [vmem:[%s1 + $0x250] sm:$0xff]
  %v368 = vld [vmem:[%s1 + $0x258] sm:$0xff]
  %v369 = vld [vmem:[%s1 + $0x260] sm:$0xff]
  %v370 = vld [vmem:[%s1 + $0x268] sm:$0xff]
  %v371 = vld [vmem:[%s1 + $0x270] sm:$0xff]
  %v372 = vld [vmem:[%s1 + $0x278] sm:$0xff]
  %v373 = vld [vmem:[%s1 + $0x280] sm:$0xff]
  %v374 = vld [vmem:[%s1 + $0x288] sm:$0xff]
  %v375 = vld [vmem:[%s1 + $0x290] sm:$0xff]
  %v376 = vld [vmem:[%s1 + $0x298] sm:$0xff]
  %v377 = vld [vmem:[%s1 + $0x2a0] sm:$0xff]
  %v378 = vld [vmem:[%s1 + $0x2a8] sm:$0xff]
  %v379 = vld [vmem:[%s1 + $0x2b0] sm:$0xff]
  %v380 = vld [vmem:[%s1 + $0x2b8] sm:$0xff]
  %v381 = vld [vmem:[%s1 + $0x2c0] sm:$0xff]
  %v382 = vld [vmem:[%s1 + $0x2c8] sm:$0xff]
  %v383 = vld [vmem:[%s1 + $0x2d0] sm:$0xff]
  %v384 = vld [vmem:[%s1 + $0x2d8] sm:$0xff]
  %v385 = vld [vmem:[%s1 + $0x2e0] sm:$0xff]
  %v386 = vld [vmem:[%s1 + $0x2e8] sm:$0xff]
  %v387 = vld [vmem:[%s1 + $0x2f0] sm:$0xff]
  %v388 = vld [vmem:[%s1 + $0x2f8] sm:$0xff]
  %v389 = vld [vmem:[%s1 + $0x300] sm:$0xff]
  %v390 = vld [vmem:[%s1 + $0x308] sm:$0xff]
  %v391 = vld [vmem:[%s1 + $0x310] sm:$0xff]
  %v392 = vld [vmem:[%s1 + $0x318] sm:$0xff]
  %v393 = vld [vmem:[%s1 + $0x320] sm:$0xff]
  %v394 = vld [vmem:[%s1 + $0x328] sm:$0xff]
  %v395 = vld [vmem:[%s1 + $0x330] sm:$0xff]
  %v396 = vld [vmem:[%s1 + $0x338] sm:$0xff]
  %v397 = vld [vmem:[%s1 + $0x340] sm:$0xff]
  %v398 = vld [vmem:[%s1 + $0x348] sm:$0xff]
  %v399 = vld [vmem:[%s1 + $0x350] sm:$0xff]
  %v400 = vld [vmem:[%s1 + $0x358] sm:$0xff]
  %v401 = vld [vmem:[%s1 + $0x360] sm:$0xff]
  %v402 = vld [vmem:[%s1 + $0x368] sm:$0xff]
  %v403 = vld [vmem:[%s1 + $0x370] sm:$0xff]
  %v404 = vld [vmem:[%s1 + $0x378] sm:$0xff]
  %v405 = vld [vmem:[%s1 + $0x380] sm:$0xff]
  %v406 = vld [vmem:[%s1 + $0x388] sm:$0xff]
  %v407 = vld [vmem:[%s1 + $0x390] sm:$0xff]
  %v408 = vld [vmem:[%s1 + $0x398] sm:$0xff]
  %v409 = vld [vmem:[%s1 + $0x3a0] sm:$0xff]
  %v410 = vld [vmem:[%s1 + $0x3a8] sm:$0xff]
  %v411 = vld [vmem:[%s1 + $0x3b0] sm:$0xff]
  %v412 = vld [vmem:[%s1 + $0x3b8] sm:$0xff]
  %v413 = vld [vmem:[%s1 + $0x3c0] sm:$0xff]
  %v414 = vld [vmem:[%s1 + $0x3c8] sm:$0xff]
  %v415 = vld [vmem:[%s1 + $0x3d0] sm:$0xff]
  %v416 = vld [vmem:[%s1 + $0x3d8] sm:$0xff]
  %v417 = vld [vmem:[%s1 + $0x3e0] sm:$0xff]
  %v418 = vld [vmem:[%s1 + $0x3e8] sm:$0xff]
  %v419 = vld [vmem:[%s1 + $0x3f0] sm:$0xff]
  %v420 = vld [vmem:[%s1 + $0x3f8] sm:$0xff]
  %v421 = vld [vmem:[%s1 + $0x400] sm:$0xff]
  %v422 = vld [vmem:[%s1 + $0x408] sm:$0xff]
  %v423 = vld [vmem:[%s1 + $0x410] sm:$0xff]
  %v424 = vld [vmem:[%s1 + $0x418] sm:$0xff]
  %v425 = vld [vmem:[%s1 + $0x420] sm:$0xff]
  %v426 = vld [vmem:[%s1 + $0x428] sm:$0xff]
  %v427 = vld [vmem:[%s1 + $0x430] sm:$0xff]
  %v428 = vld [vmem:[%s1 + $0x438] sm:$0xff]
  %v429 = vld [vmem:[%s1 + $0x440] sm:$0xff]
  %v430 = vld [vmem:[%s1 + $0x448] sm:$0xff]
  %v431 = vld [vmem:[%s1 + $0x450] sm:$0xff]
  %v432 = vld [vmem:[%s1 + $0x458] sm:$0xff]
  %v433 = vld [vmem:[%s1 + $0x460] sm:$0xff]
  %v434 = vld [vmem:[%s1 + $0x468] sm:$0xff]
  %v435 = vld [vmem:[%s1 + $0x470] sm:$0xff]
  %v436 = vld [vmem:[%s1 + $0x478] sm:$0xff]
  %v437 = vld [vmem:[%s1 + $0x480] sm:$0xff]
  %v438 = vld [vmem:[%s1 + $0x488] sm:$0xff]
  %v439 = vld [vmem:[%s1 + $0x490] sm:$0xff]
  %v440 = vld [vmem:[%s1 + $0x498] sm:$0xff]
  %v441 = vld [vmem:[%s1 + $0x4a0] sm:$0xff]
  %v442 = vld [vmem:[%s1 + $0x4a8] sm:$0xff]
  %v443 = vld [vmem:[%s1 + $0x4b0] sm:$0xff]
  %v444 = vld [vmem:[%s1 + $0x4b8] sm:$0xff]
  %v445 = vld [vmem:[%s1 + $0x4c0] sm:$0xff]
  %v446 = vld [vmem:[%s1 + $0x4c8] sm:$0xff]
  %v447 = vld [vmem:[%s1 + $0x4d0] sm:$0xff]
  %v448 = vld [vmem:[%s1 + $0x4d8] sm:$0xff]
  %v449 = vld [vmem:[%s1 + $0x4e0] sm:$0xff]
  %v450 = vld [vmem:[%s1 + $0x4e8] sm:$0xff]
  %v451 = vld [vmem:[%s1 + $0x4f0] sm:$0xff]
  %v452 = vld [vmem:[%s1 + $0x4f8] sm:$0xff]
  %v453 = vld [vmem:[%s1 + $0x500] sm:$0xff]
  %v454 = vld [vmem:[%s1 + $0x508] sm:$0xff]
  %v455 = vld [vmem:[%s1 + $0x510] sm:$0xff]
  %v456 = vld [vmem:[%s1 + $0x518] sm:$0xff]
  %v457 = vld [vmem:[%s1 + $0x520] sm:$0xff]
  %v458 = vld [vmem:[%s1 + $0x528] sm:$0xff]
  %v459 = vld [vmem:[%s1 + $0x530] sm:$0xff]
  %v460 = vld [vmem:[%s1 + $0x538] sm:$0xff]
  %v461 = vld [vmem:[%s1 + $0x540] sm:$0xff]
  %v462 = vld [vmem:[%s1 + $0x548] sm:$0xff]
  %v463 = vld [vmem:[%s1 + $0x550] sm:$0xff]
  %v464 = vld [vmem:[%s1 + $0x558] sm:$0xff]
  %v465 = vld [vmem:[%s1 + $0x560] sm:$0xff]
  %v466 = vld [vmem:[%s1 + $0x568] sm:$0xff]
  %v467 = vld [vmem:[%s1 + $0x570] sm:$0xff]
  %v468 = vld [vmem:[%s1 + $0x578] sm:$0xff]
  %v469 = vld [vmem:[%s1 + $0x580] sm:$0xff]
  %v470 = vld [vmem:[%s1 + $0x588] sm:$0xff]
  %v471 = vld [vmem:[%s1 + $0x590] sm:$0xff]
  %v472 = vld [vmem:[%s1 + $0x598] sm:$0xff]
  %v473 = vld [vmem:[%s1 + $0x5a0] sm:$0xff]
  %v474 = vld [vmem:[%s1 + $0x5a8] sm:$0xff]
  %v475 = vld [vmem:[%s1 + $0x5b0] sm:$0xff]
  %v476 = vld [vmem:[%s1 + $0x5b8] sm:$0xff]
  %v477 = vld [vmem:[%s1 + $0x5c0] sm:$0xff]
  %v478 = vld [vmem:[%s1 + $0x5c8] sm:$0xff]
  %v479 = vld [vmem:[%s1 + $0x5d0] sm:$0xff]
  %v480 = vld [vmem:[%s1 + $0x5d8] sm:$0xff]
  %v481 = vld [vmem:[%s1 + $0x5e0] sm:$0xff]
  %v482 = vld [vmem:[%s1 + $0x5e8] sm:$0xff]
  %v483 = vld [vmem:[%s1 + $0x5f0] sm:$0xff]
  %v484 = vld [vmem:[%s1 + $0x5f8] sm:$0xff]
  %v485 = vld [vmem:[%s1 + $0x600] sm:$0xff]
  %v486 = vld [vmem:[%s1 + $0x608] sm:$0xff]
  %v487 = vld [vmem:[%s1 + $0x610] sm:$0xff]
  %v488 = vld [vmem:[%s1 + $0x618] sm:$0xff]
  %v489 = vld [vmem:[%s1 + $0x620] sm:$0xff]
  %v490 = vld [vmem:[%s1 + $0x628] sm:$0xff]
  %v491 = vld [vmem:[%s1 + $0x630] sm:$0xff]
  %v492 = vld [vmem:[%s1 + $0x638] sm:$0xff]
  %v493 = vld [vmem:[%s1 + $0x640] sm:$0xff]
  %v494 = vld [vmem:[%s1 + $0x648] sm:$0xff]
  %v495 = vld [vmem:[%s1 + $0x650] sm:$0xff]
  %v496 = vld [vmem:[%s1 + $0x658] sm:$0xff]
  %v497 = vld [vmem:[%s1 + $0x660] sm:$0xff]
  %v498 = vld [vmem:[%s1 + $0x668] sm:$0xff]
  %v499 = vld [vmem:[%s1 + $0x670] sm:$0xff]
  %v500 = vld [vmem:[%s1 + $0x678] sm:$0xff]
  %v501 = vld [vmem:[%s1 + $0x680] sm:$0xff]
  %v502 = vld [vmem:[%s1 + $0x688] sm:$0xff]
  %v503 = vld [vmem:[%s1 + $0x690] sm:$0xff]
  %v504 = vld [vmem:[%s1 + $0x698] sm:$0xff]
  %v505 = vld [vmem:[%s1 + $0x6a0] sm:$0xff]
  %v506 = vld [vmem:[%s1 + $0x6a8] sm:$0xff]
  %v507 = vld [vmem:[%s1 + $0x6b0] sm:$0xff]
  %v508 = vld [vmem:[%s1 + $0x6b8] sm:$0xff]
  %v509 = vld [vmem:[%s1 + $0x6c0] sm:$0xff]
  %v510 = vld [vmem:[%s1 + $0x6c8] sm:$0xff]
  %v511 = vld [vmem:[%s1 + $0x6d0] sm:$0xff]
  %v512 = vld [vmem:[%s1 + $0x6d8] sm:$0xff]
  %v513 = vld [vmem:[%s1 + $0x6e0] sm:$0xff]
  %v514 = vld [vmem:[%s1 + $0x6e8] sm:$0xff]
  %v515 = vld [vmem:[%s1 + $0x6f0] sm:$0xff]
  %v516 = vld [vmem:[%s1 + $0x6f8] sm:$0xff]
  %v517 = vld [vmem:[%s1 + $0x700] sm:$0xff]
  %v518 = vld [vmem:[%s1 + $0x708] sm:$0xff]
  %v519 = vld [vmem:[%s1 + $0x710] sm:$0xff]
  %v520 = vld [vmem:[%s1 + $0x718] sm:$0xff]
  %v521 = vld [vmem:[%s1 + $0x720] sm:$0xff]
  %v522 = vld [vmem:[%s1 + $0x728] sm:$0xff]
  %v523 = vld [vmem:[%s1 + $0x730] sm:$0xff]
  %v524 = vld [vmem:[%s1 + $0x738] sm:$0xff]
  %v525 = vld [vmem:[%s1 + $0x740] sm:$0xff]
  %v526 = vld [vmem:[%s1 + $0x748] sm:$0xff]
  %v527 = vld [vmem:[%s1 + $0x750] sm:$0xff]
  %v528 = vld [vmem:[%s1 + $0x758] sm:$0xff]
  %v529 = vld [vmem:[%s1 + $0x760] sm:$0xff]
  %v530 = vld [vmem:[%s1 + $0x768] sm:$0xff]
  %v531 = vld [vmem:[%s1 + $0x770] sm:$0xff]
  %v532 = vld [vmem:[%s1 + $0x778] sm:$0xff]
  %v533 = vld [vmem:[%s1 + $0x780] sm:$0xff]
  %v534 = vld [vmem:[%s1 + $0x788] sm:$0xff]
  %v535 = vld [vmem:[%s1 + $0x790] sm:$0xff]
  %v536 = vld [vmem:[%s1 + $0x798] sm:$0xff]
  %v537 = vld [vmem:[%s1 + $0x7a0] sm:$0xff]
  %v538 = vld [vmem:[%s1 + $0x7a8] sm:$0xff]
  %v539 = vld [vmem:[%s1 + $0x7b0] sm:$0xff]
  %v540 = vld [vmem:[%s1 + $0x7b8] sm:$0xff]
  %v541 = vld [vmem:[%s1 + $0x7c0] sm:$0xff]
  %v542 = vld [vmem:[%s1 + $0x7c8] sm:$0xff]
  %v543 = vld [vmem:[%s1 + $0x7d0] sm:$0xff]
  %v544 = vld [vmem:[%s1 + $0x7d8] sm:$0xff]
  %v545 = vld [vmem:[%s1 + $0x7e0] sm:$0xff]
  %v546 = vld [vmem:[%s1 + $0x7e8] sm:$0xff]
  %v547 = vld [vmem:[%s1 + $0x7f0] sm:$0xff]
  %v548 = vld [vmem:[%s1 + $0x7f8] sm:$0xff]
  %v549 = vld [vmem:[%s1 + $0x800] sm:$0xff]
  %v550 = vld [vmem:[%s1 + $0x808] sm:$0xff]
  %v551 = vld [vmem:[%s1 + $0x810] sm:$0xff]
  %v552 = vld [vmem:[%s1 + $0x818] sm:$0xff]
  %v553 = vld [vmem:[%s1 + $0x820] sm:$0xff]
  %v554 = vld [vmem:[%s1 + $0x828] sm:$0xff]
  %v555 = vld [vmem:[%s1 + $0x830] sm:$0xff]
  %v556 = vld [vmem:[%s1 + $0x838] sm:$0xff]
  %v557 = vld [vmem:[#allocation3] sm:$0xff]
  %v558 = vld [vmem:[#allocation3 + $0x8] sm:$0xff]
  %v559 = vld [vmem:[#allocation3 + $0x10] sm:$0xff]
  %v560 = vld [vmem:[#allocation3 + $0x18] sm:$0xff]
  %v561 = vld [vmem:[#allocation3 + $0x20] sm:$0xff]
  %v562 = vld [vmem:[#allocation3 + $0x28] sm:$0xff]
  %v563 = vld [vmem:[#allocation3 + $0x30] sm:$0xf]
  %v564 = vld [vmem:[#allocation3 + $0x38] sm:$0xf]
  %v565 = vld [vmem:[#allocation3 + $0x40] sm:$0xf]
  %v566 = vld [vmem:[#allocation3 + $0x48] sm:$0xf]
  %v567 = vld [vmem:[#allocation3 + $0x50] sm:$0xf]
  %v568 = vld [vmem:[#allocation3 + $0x58] sm:$0xf]
  %v569 = vld [vmem:[%s2] sm:$0xff]
  %v570 = vld [vmem:[%s2 + $0x8] sm:$0xff]
  %v571 = vld [vmem:[%s2 + $0x10] sm:$0xff]
  %v572 = vld [vmem:[%s2 + $0x18] sm:$0xff]
  %v573 = vld [vmem:[%s2 + $0x20] sm:$0xff]
  %v574 = vld [vmem:[%s2 + $0x28] sm:$0xff]
  %v575 = vld [vmem:[%s2 + $0x30] sm:$0xff]
  %v576 = vld [vmem:[%s2 + $0x38] sm:$0xff]
  %v577 = vld [vmem:[%s2 + $0x40] sm:$0xff]
  %v578 = vld [vmem:[%s2 + $0x48] sm:$0xff]
  %v579 = vld [vmem:[%s2 + $0x50] sm:$0xff]
  %v580 = vld [vmem:[%s2 + $0x58] sm:$0xff]
  %v581 = vld [vmem:[%s2 + $0x60] sm:$0xff]
  %v582 = vld [vmem:[%s2 + $0x68] sm:$0xff]
  %v583 = vld [vmem:[%s2 + $0x70] sm:$0xff]
  %v584 = vld [vmem:[%s2 + $0x78] sm:$0xff]
  %v585 = vld [vmem:[%s2 + $0x80] sm:$0xff]
  %v586 = vld [vmem:[%s2 + $0x88] sm:$0xff]
  %v587 = vld [vmem:[%s2 + $0x90] sm:$0xff]
  %v588 = vld [vmem:[%s2 + $0x98] sm:$0xff]
  %v589 = vld [vmem:[%s2 + $0xa0] sm:$0xff]
  %v590 = vld [vmem:[%s2 + $0xa8] sm:$0xff]
  %v591 = vld [vmem:[%s2 + $0xb0] sm:$0xff]
  %v592 = vld [vmem:[%s2 + $0xb8] sm:$0xff]
  %v593 = vld [vmem:[%s2 + $0xc0] sm:$0xff]
  %v594 = vld [vmem:[%s2 + $0xc8] sm:$0xff]
  %v595 = vld [vmem:[%s2 + $0xd0] sm:$0xff]
  %v596 = vld [vmem:[%s2 + $0xd8] sm:$0xff]
  %v597 = vld [vmem:[%s2 + $0xe0] sm:$0xff]
  %v598 = vld [vmem:[%s2 + $0xe8] sm:$0xff]
  %v599 = vld [vmem:[%s2 + $0xf0] sm:$0xff]
  %v600 = vld [vmem:[%s2 + $0xf8] sm:$0xff]
  %v601 = vld [vmem:[%s2 + $0x100] sm:$0xff]
  %v602 = vld [vmem:[%s2 + $0x108] sm:$0xff]
  %v603 = vld [vmem:[%s2 + $0x110] sm:$0xff]
  %v604 = vld [vmem:[%s2 + $0x118] sm:$0xff]
  %v605 = vld [vmem:[%s2 + $0x120] sm:$0xff]
  %v606 = vld [vmem:[%s2 + $0x128] sm:$0xff]
  %v607 = vld [vmem:[%s2 + $0x130] sm:$0xff]
  %v608 = vld [vmem:[%s2 + $0x138] sm:$0xff]
  %v609 = vld [vmem:[%s2 + $0x140] sm:$0xff]
  %v610 = vld [vmem:[%s2 + $0x148] sm:$0xff]
  %v611 = vld [vmem:[%s2 + $0x150] sm:$0xff]
  %v612 = vld [vmem:[%s2 + $0x158] sm:$0xff]
  %v613 = vld [vmem:[%s2 + $0x160] sm:$0xff]
  %v614 = vld [vmem:[%s2 + $0x168] sm:$0xff]
  %v615 = vld [vmem:[%s2 + $0x170] sm:$0xff]
  %v616 = vld [vmem:[%s2 + $0x178] sm:$0xff]
  %v617 = vld [vmem:[%s2 + $0x180] sm:$0xff]
  %v618 = vld [vmem:[%s2 + $0x188] sm:$0xff]
  %v619 = vld [vmem:[%s2 + $0x190] sm:$0xff]
  %v620 = vld [vmem:[%s2 + $0x198] sm:$0xff]
  %v621 = vld [vmem:[%s2 + $0x1a0] sm:$0xff]
  %v622 = vld [vmem:[%s2 + $0x1a8] sm:$0xff]
  %v623 = vld [vmem:[%s2 + $0x1b0] sm:$0xff]
  %v624 = vld [vmem:[%s2 + $0x1b8] sm:$0xff]
  %v625 = vld [vmem:[%s2 + $0x1c0] sm:$0xff]
  %v626 = vld [vmem:[%s2 + $0x1c8] sm:$0xff]
  %v627 = vld [vmem:[%s2 + $0x1d0] sm:$0xff]
  %v628 = vld [vmem:[%s2 + $0x1d8] sm:$0xff]
  %v629 = vld [vmem:[%s2 + $0x1e0] sm:$0xff]
  %v630 = vld [vmem:[%s2 + $0x1e8] sm:$0xff]
  %v631 = vld [vmem:[%s2 + $0x1f0] sm:$0xff]
  %v632 = vld [vmem:[%s2 + $0x1f8] sm:$0xff]
  %v633 = vld [vmem:[%s2 + $0x200] sm:$0xff]
  %v634 = vld [vmem:[%s2 + $0x208] sm:$0xff]
  %v635 = vld [vmem:[%s2 + $0x210] sm:$0xff]
  %v636 = vld [vmem:[%s2 + $0x218] sm:$0xff]
  %v637 = vld [vmem:[%s2 + $0x220] sm:$0xff]
  %v638 = vld [vmem:[%s2 + $0x228] sm:$0xff]
  %v639 = vld [vmem:[%s2 + $0x230] sm:$0xff]
  %v640 = vld [vmem:[%s2 + $0x238] sm:$0xff]
  %v641 = vld [vmem:[%s2 + $0x240] sm:$0xff]
  %v642 = vld [vmem:[%s2 + $0x248] sm:$0xff]
  %v643 = vld [vmem:[%s2 + $0x250] sm:$0xff]
  %v644 = vld [vmem:[%s2 + $0x258] sm:$0xff]
  %v645 = vld [vmem:[%s2 + $0x260] sm:$0xff]
  %v646 = vld [vmem:[%s2 + $0x268] sm:$0xff]
  %v647 = vld [vmem:[%s2 + $0x270] sm:$0xff]
  %v648 = vld [vmem:[%s2 + $0x278] sm:$0xff]
  %v649 = vld [vmem:[%s2 + $0x280] sm:$0xff]
  %v650 = vld [vmem:[%s2 + $0x288] sm:$0xff]
  %v651 = vld [vmem:[%s2 + $0x290] sm:$0xff]
  %v652 = vld [vmem:[%s2 + $0x298] sm:$0xff]
  %v653 = vld [vmem:[%s2 + $0x2a0] sm:$0xff]
  %v654 = vld [vmem:[%s2 + $0x2a8] sm:$0xff]
  %v655 = vld [vmem:[%s2 + $0x2b0] sm:$0xff]
  %v656 = vld [vmem:[%s2 + $0x2b8] sm:$0xff]
  %v657 = vld [vmem:[%s2 + $0x2c0] sm:$0xff]
  %v658 = vld [vmem:[%s2 + $0x2c8] sm:$0xff]
  %v659 = vld [vmem:[%s2 + $0x2d0] sm:$0xff]
  %v660 = vld [vmem:[%s2 + $0x2d8] sm:$0xff]
  %v661 = vld [vmem:[%s2 + $0x2e0] sm:$0xff]
  %v662 = vld [vmem:[%s2 + $0x2e8] sm:$0xff]
  %v663 = vld [vmem:[%s2 + $0x2f0] sm:$0xff]
  %v664 = vld [vmem:[%s2 + $0x2f8] sm:$0xff]
  %v665 = vld [vmem:[%s2 + $0x300] sm:$0xff]
  %v666 = vld [vmem:[%s2 + $0x308] sm:$0xff]
  %v667 = vld [vmem:[%s2 + $0x310] sm:$0xff]
  %v668 = vld [vmem:[%s2 + $0x318] sm:$0xff]
  %v669 = vld [vmem:[%s2 + $0x320] sm:$0xff]
  %v670 = vld [vmem:[%s2 + $0x328] sm:$0xff]
  %v671 = vld [vmem:[%s2 + $0x330] sm:$0xff]
  %v672 = vld [vmem:[%s2 + $0x338] sm:$0xff]
  %v673 = vld [vmem:[%s2 + $0x340] sm:$0xff]
  %v674 = vld [vmem:[%s2 + $0x348] sm:$0xff]
  %v675 = vld [vmem:[%s2 + $0x350] sm:$0xff]
  %v676 = vld [vmem:[%s2 + $0x358] sm:$0xff]
  %v677 = vld [vmem:[%s2 + $0x360] sm:$0xff]
  %v678 = vld [vmem:[%s2 + $0x368] sm:$0xff]
  %v679 = vld [vmem:[%s2 + $0x370] sm:$0xff]
  %v680 = vld [vmem:[%s2 + $0x378] sm:$0xff]
  %v681 = vld [vmem:[%s2 + $0x380] sm:$0xff]
  %v682 = vld [vmem:[%s2 + $0x388] sm:$0xff]
  %v683 = vld [vmem:[%s2 + $0x390] sm:$0xff]
  %v684 = vld [vmem:[%s2 + $0x398] sm:$0xff]
  %v685 = vld [vmem:[%s2 + $0x3a0] sm:$0xff]
  %v686 = vld [vmem:[%s2 + $0x3a8] sm:$0xff]
  %v687 = vld [vmem:[%s2 + $0x3b0] sm:$0xff]
  %v688 = vld [vmem:[%s2 + $0x3b8] sm:$0xff]
  %v689 = vld [vmem:[%s2 + $0x3c0] sm:$0xff]
  %v690 = vld [vmem:[%s2 + $0x3c8] sm:$0xff]
  %v691 = vld [vmem:[%s2 + $0x3d0] sm:$0xff]
  %v692 = vld [vmem:[%s2 + $0x3d8] sm:$0xff]
  %v693 = vld [vmem:[%s2 + $0x3e0] sm:$0xff]
  %v694 = vld [vmem:[%s2 + $0x3e8] sm:$0xff]
  %v695 = vld [vmem:[%s2 + $0x3f0] sm:$0xff]
  %v696 = vld [vmem:[%s2 + $0x3f8] sm:$0xff]
  %v697 = vld [vmem:[%s2 + $0x400] sm:$0xff]
  %v698 = vld [vmem:[%s2 + $0x408] sm:$0xff]
  %v699 = vld [vmem:[%s2 + $0x410] sm:$0xff]
  %v700 = vld [vmem:[%s2 + $0x418] sm:$0xff]
  %v701 = vld [vmem:[%s2 + $0x420] sm:$0xff]
  %v702 = vld [vmem:[%s2 + $0x428] sm:$0xff]
  %v703 = vld [vmem:[%s2 + $0x430] sm:$0xff]
  %v704 = vld [vmem:[%s2 + $0x438] sm:$0xff]
  %v705 = vld [vmem:[%s2 + $0x440] sm:$0xff]
  %v706 = vld [vmem:[%s2 + $0x448] sm:$0xff]
  %v707 = vld [vmem:[%s2 + $0x450] sm:$0xff]
  %v708 = vld [vmem:[%s2 + $0x458] sm:$0xff]
  %v709 = vld [vmem:[%s2 + $0x460] sm:$0xff]
  %v710 = vld [vmem:[%s2 + $0x468] sm:$0xff]
  %v711 = vld [vmem:[%s2 + $0x470] sm:$0xff]
  %v712 = vld [vmem:[%s2 + $0x478] sm:$0xff]
  %v713 = vld [vmem:[%s2 + $0x480] sm:$0xff]
  %v714 = vld [vmem:[%s2 + $0x488] sm:$0xff]
  %v715 = vld [vmem:[%s2 + $0x490] sm:$0xff]
  %v716 = vld [vmem:[%s2 + $0x498] sm:$0xff]
  %v717 = vld [vmem:[%s2 + $0x4a0] sm:$0xff]
  %v718 = vld [vmem:[%s2 + $0x4a8] sm:$0xff]
  %v719 = vld [vmem:[%s2 + $0x4b0] sm:$0xff]
  %v720 = vld [vmem:[%s2 + $0x4b8] sm:$0xff]
  %v721 = vld [vmem:[%s2 + $0x4c0] sm:$0xff]
  %v722 = vld [vmem:[%s2 + $0x4c8] sm:$0xff]
  %v723 = vld [vmem:[%s2 + $0x4d0] sm:$0xff]
  %v724 = vld [vmem:[%s2 + $0x4d8] sm:$0xff]
  %v725 = vld [vmem:[%s2 + $0x4e0] sm:$0xff]
  %v726 = vld [vmem:[%s2 + $0x4e8] sm:$0xff]
  %v727 = vld [vmem:[%s2 + $0x4f0] sm:$0xff]
  %v728 = vld [vmem:[%s2 + $0x4f8] sm:$0xff]
  %v729 = vld [vmem:[%s2 + $0x500] sm:$0xff]
  %v730 = vld [vmem:[%s2 + $0x508] sm:$0xff]
  %v731 = vld [vmem:[%s2 + $0x510] sm:$0xff]
  %v732 = vld [vmem:[%s2 + $0x518] sm:$0xff]
  %v733 = vld [vmem:[%s2 + $0x520] sm:$0xff]
  %v734 = vld [vmem:[%s2 + $0x528] sm:$0xff]
  %v735 = vld [vmem:[%s2 + $0x530] sm:$0xff]
  %v736 = vld [vmem:[%s2 + $0x538] sm:$0xff]
  %v737 = vld [vmem:[%s2 + $0x540] sm:$0xff]
  %v738 = vld [vmem:[%s2 + $0x548] sm:$0xff]
  %v739 = vld [vmem:[%s2 + $0x550] sm:$0xff]
  %v740 = vld [vmem:[%s2 + $0x558] sm:$0xff]
  %v741 = vld [vmem:[%s2 + $0x560] sm:$0xff]
  %v742 = vld [vmem:[%s2 + $0x568] sm:$0xff]
  %v743 = vld [vmem:[%s2 + $0x570] sm:$0xff]
  %v744 = vld [vmem:[%s2 + $0x578] sm:$0xff]
  %v745 = vld [vmem:[%s2 + $0x580] sm:$0xff]
  %v746 = vld [vmem:[%s2 + $0x588] sm:$0xff]
  %v747 = vld [vmem:[%s2 + $0x590] sm:$0xff]
  %v748 = vld [vmem:[%s2 + $0x598] sm:$0xff]
  %v749 = vld [vmem:[%s2 + $0x5a0] sm:$0xff]
  %v750 = vld [vmem:[%s2 + $0x5a8] sm:$0xff]
  %v751 = vld [vmem:[%s2 + $0x5b0] sm:$0xff]
  %v752 = vld [vmem:[%s2 + $0x5b8] sm:$0xff]
  %v753 = vld [vmem:[%s2 + $0x5c0] sm:$0xff]
  %v754 = vld [vmem:[%s2 + $0x5c8] sm:$0xff]
  %v755 = vld [vmem:[%s2 + $0x5d0] sm:$0xff]
  %v756 = vld [vmem:[%s2 + $0x5d8] sm:$0xff]
  %v757 = vld [vmem:[%s2 + $0x5e0] sm:$0xff]
  %v758 = vld [vmem:[%s2 + $0x5e8] sm:$0xff]
  %v759 = vld [vmem:[%s2 + $0x5f0] sm:$0xff]
  %v760 = vld [vmem:[%s2 + $0x5f8] sm:$0xff]
  %v761 = vld [vmem:[%s2 + $0x600] sm:$0xff]
  %v762 = vld [vmem:[%s2 + $0x608] sm:$0xff]
  %v763 = vld [vmem:[%s2 + $0x610] sm:$0xff]
  %v764 = vld [vmem:[%s2 + $0x618] sm:$0xff]
  %v765 = vld [vmem:[%s2 + $0x620] sm:$0xff]
  %v766 = vld [vmem:[%s2 + $0x628] sm:$0xff]
  %v767 = vld [vmem:[%s2 + $0x630] sm:$0xff]
  %v768 = vld [vmem:[%s2 + $0x638] sm:$0xff]
  %v769 = vld [vmem:[%s2 + $0x640] sm:$0xff]
  %v770 = vld [vmem:[%s2 + $0x648] sm:$0xff]
  %v771 = vld [vmem:[%s2 + $0x650] sm:$0xff]
  %v772 = vld [vmem:[%s2 + $0x658] sm:$0xff]
  %v773 = vld [vmem:[%s2 + $0x660] sm:$0xff]
  %v774 = vld [vmem:[%s2 + $0x668] sm:$0xff]
  %v775 = vld [vmem:[%s2 + $0x670] sm:$0xff]
  %v776 = vld [vmem:[%s2 + $0x678] sm:$0xff]
  %v777 = vld [vmem:[%s2 + $0x680] sm:$0xff]
  %v778 = vld [vmem:[%s2 + $0x688] sm:$0xff]
  %v779 = vld [vmem:[%s2 + $0x690] sm:$0xff]
  %v780 = vld [vmem:[%s2 + $0x698] sm:$0xff]
  %v781 = vld [vmem:[%s2 + $0x6a0] sm:$0xff]
  %v782 = vld [vmem:[%s2 + $0x6a8] sm:$0xff]
  %v783 = vld [vmem:[%s2 + $0x6b0] sm:$0xff]
  %v784 = vld [vmem:[%s2 + $0x6b8] sm:$0xff]
  %v785 = vld [vmem:[%s2 + $0x6c0] sm:$0xff]
  %v786 = vld [vmem:[%s2 + $0x6c8] sm:$0xff]
  %v787 = vld [vmem:[%s2 + $0x6d0] sm:$0xff]
  %v788 = vld [vmem:[%s2 + $0x6d8] sm:$0xff]
  %v789 = vld [vmem:[%s2 + $0x6e0] sm:$0xff]
  %v790 = vld [vmem:[%s2 + $0x6e8] sm:$0xff]
  %v791 = vld [vmem:[%s2 + $0x6f0] sm:$0xff]
  %v792 = vld [vmem:[%s2 + $0x6f8] sm:$0xff]
  %v793 = vld [vmem:[%s2 + $0x700] sm:$0xff]
  %v794 = vld [vmem:[%s2 + $0x708] sm:$0xff]
  %v795 = vld [vmem:[%s2 + $0x710] sm:$0xff]
  %v796 = vld [vmem:[%s2 + $0x718] sm:$0xff]
  %v797 = vld [vmem:[%s2 + $0x720] sm:$0xff]
  %v798 = vld [vmem:[%s2 + $0x728] sm:$0xff]
  %v799 = vld [vmem:[%s2 + $0x730] sm:$0xff]
  %v800 = vld [vmem:[%s2 + $0x738] sm:$0xff]
  %v801 = vld [vmem:[%s2 + $0x740] sm:$0xff]
  %v802 = vld [vmem:[%s2 + $0x748] sm:$0xff]
  %v803 = vld [vmem:[%s2 + $0x750] sm:$0xff]
  %v804 = vld [vmem:[%s2 + $0x758] sm:$0xff]
  %v805 = vld [vmem:[%s2 + $0x760] sm:$0xff]
  %v806 = vld [vmem:[%s2 + $0x768] sm:$0xff]
  %v807 = vld [vmem:[%s2 + $0x770] sm:$0xff]
  %v808 = vld [vmem:[%s2 + $0x778] sm:$0xff]
  %v809 = vld [vmem:[%s2 + $0x780] sm:$0xff]
  %v810 = vld [vmem:[%s2 + $0x788] sm:$0xff]
  %v811 = vld [vmem:[%s2 + $0x790] sm:$0xff]
  %v812 = vld [vmem:[%s2 + $0x798] sm:$0xff]
  %v813 = vld [vmem:[%s2 + $0x7a0] sm:$0xff]
  %v814 = vld [vmem:[%s2 + $0x7a8] sm:$0xff]
  %v815 = vld [vmem:[%s2 + $0x7b0] sm:$0xff]
  %v816 = vld [vmem:[%s2 + $0x7b8] sm:$0xff]
  %v817 = vld [vmem:[%s2 + $0x7c0] sm:$0xff]
  %v818 = vld [vmem:[%s2 + $0x7c8] sm:$0xff]
  %v819 = vld [vmem:[%s2 + $0x7d0] sm:$0xff]
  %v820 = vld [vmem:[%s2 + $0x7d8] sm:$0xff]
  %v821 = vld [vmem:[%s2 + $0x7e0] sm:$0xff]
  %v822 = vld [vmem:[%s2 + $0x7e8] sm:$0xff]
  %v823 = vld [vmem:[%s2 + $0x7f0] sm:$0xff]
  %v824 = vld [vmem:[%s2 + $0x7f8] sm:$0xff]
  %v825 = vld [vmem:[%s2 + $0x800] sm:$0xff]
  %v826 = vld [vmem:[%s2 + $0x808] sm:$0xff]
  %v827 = vld [vmem:[%s2 + $0x810] sm:$0xff]
  %v828 = vld [vmem:[%s2 + $0x818] sm:$0xff]
  %v829 = vld [vmem:[%s2 + $0x820] sm:$0xff]
  %v830 = vld [vmem:[%s2 + $0x828] sm:$0xff]
  %v831 = vld [vmem:[%s2 + $0x830] sm:$0xff]
  %v832 = vld [vmem:[%s2 + $0x838] sm:$0xff]
  %v834 = vsel %vm48, %v562, 0
  %v837 = vsel %vm48, %v568, 0
  %839 = vmatprep.subr.mxu0 %v570
  %840 = vmatpush1.msra.mxu0 %v569
  %841 = vmatprep.subr.mxu0 %v573
  %842 = vmatpush1.msra.mxu0 %v572
  %843 = vmatprep.subr.mxu0 %v576
  %844 = vmatpush1.msra.mxu0 %v575
  %845 = vmatprep.subr.mxu0 %v579
  %846 = vmatpush1.msra.mxu0 %v578
  %847 = vmatprep.subr.mxu0 %v582
  %848 = vmatpush1.msra.mxu0 %v581
  %849 = vmatprep.subr.mxu0 %v585
  %850 = vmatpush1.msra.mxu0 %v584
  %851 = vmatprep.subr.mxu0 %v588
  %852 = vmatpush1.msra.mxu0 %v587
  %853 = vmatprep.subr.mxu0 %v591
  %854 = vmatpush1.msra.mxu0 %v590
  %855 = vmatprep.subr.mxu0 %v594
  %856 = vmatpush1.msra.mxu0 %v593
  %857 = vmatprep.subr.mxu0 %v597
  %858 = vmatpush1.msra.mxu0 %v596
  %859 = vmatprep.subr.mxu0 %v600
  %860 = vmatpush1.msra.mxu0 %v599
  %861 = vmatprep.subr.mxu0 %v603
  %862 = vmatpush1.msra.mxu0 %v602
  %863 = vmatprep.subr.mxu0 %v606
  %864 = vmatpush1.msra.mxu0 %v605
  %865 = vmatprep.subr.mxu0 %v609
  %866 = vmatpush1.msra.mxu0 %v608
  %867 = vmatprep.subr.mxu0 %v612
  %868 = vmatpush1.msra.mxu0 %v611
  %869 = vmatprep.subr.mxu0 %v615
  %870 = vmatpush1.msra.mxu0 %v614
  %871 = vmatprep.subr.mxu0 %v618
  %872 = vmatpush1.msra.mxu0 %v617
  %873 = vmatprep.subr.mxu0 %v621
  %874 = vmatpush1.msra.mxu0 %v620
  %875 = vmatprep.subr.mxu0 %v624
  %876 = vmatpush1.msra.mxu0 %v623
  %877 = vmatprep.subr.mxu0 %v627
  %878 = vmatpush1.msra.mxu0 %v626
  %879 = vmatprep.subr.mxu0 %v630
  %880 = vmatpush1.msra.mxu0 %v629
  %881 = vmatprep.subr.mxu0 %v633
  %882 = vmatpush1.msra.mxu0 %v632
  %883 = vmatprep.subr.mxu0 %v636
  %884 = vmatpush1.msra.mxu0 %v635
  %885 = vmatprep.subr.mxu0 %v639
  %886 = vmatpush1.msra.mxu0 %v638
  %887 = vmatprep.subr.mxu0 %v642
  %888 = vmatpush1.msra.mxu0 %v641
  %889 = vmatprep.subr.mxu0 %v645
  %890 = vmatpush1.msra.mxu0 %v644
  %891 = vmatprep.subr.mxu0 %v648
  %892 = vmatpush1.msra.mxu0 %v647
  %893 = vmatprep.subr.mxu0 %v651
  %894 = vmatpush1.msra.mxu0 %v650
  %895 = vmatprep.subr.mxu0 %v654
  %896 = vmatpush1.msra.mxu0 %v653
  %897 = vmatprep.subr.mxu0 %v657
  %898 = vmatpush1.msra.mxu0 %v656
  %899 = vmatprep.subr.mxu0 %v660
  %900 = vmatpush1.msra.mxu0 %v659
  %901 = vmatprep.subr.mxu0 %v663
  %902 = vmatpush1.msra.mxu0 %v662
  %903 = vmatprep.mubr.f32.mxu0 %v558
  %904 = vmatmul.mubr.f32.gmra.mrb[0].mxu0 %v557
  %v905 = vpop.f32.mrb[0].mxu0
  %v906 = vadd.f32 0.0, %v905
  %v907 = vpop.f32.mrb[0].mxu0
  %v908 = vadd.f32 0.0, %v907
  %909 = vmatprep.mubr.f32.mxu0 %v564
  %910 = vmatmul.mubr.f32.gmra.mrb[0].mxu0 %v563
  %v911 = vpop.f32.mrb[0].mxu0
  %v912 = vadd.f32 0.0, %v911
  %v913 = vpop.f32.mrb[0].mxu0
  %v914 = vadd.f32 0.0, %v913
  %915 = vdwg.mxu0
  %916 = vmatprep.subr.mxu0 %v666
  %917 = vmatpush1.msra.mxu0 %v665
  %918 = vmatprep.subr.mxu0 %v669
  %919 = vmatpush1.msra.mxu0 %v668
  %920 = vmatprep.subr.mxu0 %v672
  %921 = vmatpush1.msra.mxu0 %v671
  %922 = vmatprep.subr.mxu0 %v675
  %923 = vmatpush1.msra.mxu0 %v674
  %924 = vmatprep.subr.mxu0 %v678
  %925 = vmatpush1.msra.mxu0 %v677
  %926 = vmatprep.subr.mxu0 %v681
  %927 = vmatpush1.msra.mxu0 %v680
  %928 = vmatprep.subr.mxu0 %v684
  %929 = vmatpush1.msra.mxu0 %v683
  %930 = vmatprep.subr.mxu0 %v687
  %931 = vmatpush1.msra.mxu0 %v686
  %932 = vmatprep.subr.mxu0 %v690
  %933 = vmatpush1.msra.mxu0 %v689
  %934 = vmatprep.subr.mxu0 %v693
  %935 = vmatpush1.msra.mxu0 %v692
  %936 = vmatprep.subr.mxu0 %v696
  %937 = vmatpush1.msra.mxu0 %v695
  %938 = vmatprep.subr.mxu0 %v699
  %939 = vmatpush1.msra.mxu0 %v698
  %940 = vmatprep.subr.mxu0 %v702
  %941 = vmatpush1.msra.mxu0 %v701
  %942 = vmatprep.subr.mxu0 %v705
  %943 = vmatpush1.msra.mxu0 %v704
  %944 = vmatprep.subr.mxu0 %v708
  %945 = vmatpush1.msra.mxu0 %v707
  %946 = vmatprep.subr.mxu0 %v711
  %947 = vmatpush1.msra.mxu0 %v710
  %948 = vmatprep.subr.mxu0 %v714
  %949 = vmatpush1.msra.mxu0 %v713
  %950 = vmatprep.subr.mxu0 %v717
  %951 = vmatpush1.msra.mxu0 %v716
  %952 = vmatprep.subr.mxu0 %v720
  %953 = vmatpush1.msra.mxu0 %v719
  %954 = vmatprep.subr.mxu0 %v723
  %955 = vmatpush1.msra.mxu0 %v722
  %956 = vmatprep.subr.mxu0 %v726
  %957 = vmatpush1.msra.mxu0 %v725
  %958 = vmatprep.subr.mxu0 %v729
  %959 = vmatpush1.msra.mxu0 %v728
  %960 = vmatprep.subr.mxu0 %v732
  %961 = vmatpush1.msra.mxu0 %v731
  %962 = vmatprep.subr.mxu0 %v735
  %963 = vmatpush1.msra.mxu0 %v734
  %964 = vmatprep.subr.mxu0 %v738
  %965 = vmatpush1.msra.mxu0 %v737
  %966 = vmatprep.subr.mxu0 %v741
  %967 = vmatpush1.msra.mxu0 %v740
  %968 = vmatprep.subr.mxu0 %v744
  %969 = vmatpush1.msra.mxu0 %v743
  %970 = vmatprep.subr.mxu0 %v747
  %971 = vmatpush1.msra.mxu0 %v746
  %972 = vmatprep.subr.mxu0 %v750
  %973 = vmatpush1.msra.mxu0 %v749
  %974 = vmatprep.subr.mxu0 %v753
  %975 = vmatpush1.msra.mxu0 %v752
  %976 = vmatprep.subr.mxu0 %v756
  %977 = vmatpush1.msra.mxu0 %v755
  %978 = vmatprep.subr.mxu0 %v759
  %979 = vmatpush1.msra.mxu0 %v758
  %980 = vmatprep.mubr.f32.mxu0 %v560
  %981 = vmatmul.mubr.f32.gmra.mrb[0].mxu0 %v559
  %v982 = vpop.f32.mrb[0].mxu0
  %v983 = vadd.f32 %v906, %v982
  %v984 = vpop.f32.mrb[0].mxu0
  %v985 = vadd.f32 %v908, %v984
  %986 = vmatprep.mubr.f32.mxu0 %v566
  %987 = vmatmul.mubr.f32.gmra.mrb[0].mxu0 %v565
  %v988 = vpop.f32.mrb[0].mxu0
  %v989 = vadd.f32 %v912, %v988
  %v990 = vpop.f32.mrb[0].mxu0
  %v991 = vadd.f32 %v914, %v990
  %992 = vdwg.mxu0
  %993 = vmatprep.subr.mxu0 %v762
  %994 = vmatpush1.msra.mxu0 %v761
  %995 = vmatprep.subr.mxu0 %v765
  %996 = vmatpush1.msra.mxu0 %v764
  %997 = vmatprep.subr.mxu0 %v768
  %998 = vmatpush1.msra.mxu0 %v767
  %999 = vmatprep.subr.mxu0 %v771
  %1000 = vmatpush1.msra.mxu0 %v770
  %1001 = vmatprep.subr.mxu0 %v774
  %1002 = vmatpush1.msra.mxu0 %v773
  %1003 = vmatprep.subr.mxu0 %v777
  %1004 = vmatpush1.msra.mxu0 %v776
  %1005 = vmatprep.subr.mxu0 %v780
  %1006 = vmatpush1.msra.mxu0 %v779
  %1007 = vmatprep.subr.mxu0 %v783
  %1008 = vmatpush1.msra.mxu0 %v782
  %1009 = vmatprep.subr.mxu0 %v786
  %1010 = vmatpush1.msra.mxu0 %v785
  %1011 = vmatprep.subr.mxu0 %v789
  %1012 = vmatpush1.msra.mxu0 %v788
  %1013 = vmatprep.subr.mxu0 %v792
  %1014 = vmatpush1.msra.mxu0 %v791
  %1015 = vmatprep.subr.mxu0 %v795
  %1016 = vmatpush1.msra.mxu0 %v794
  %1017 = vmatprep.subr.mxu0 %v798
  %1018 = vmatpush1.msra.mxu0 %v797
  %1019 = vmatprep.subr.mxu0 %v801
  %1020 = vmatpush1.msra.mxu0 %v800
  %1021 = vmatprep.subr.mxu0 %v804
  %1022 = vmatpush1.msra.mxu0 %v803
  %1023 = vmatprep.subr.mxu0 %v807
  %1024 = vmatpush1.msra.mxu0 %v806
  %1025 = vmatprep.subr.mxu0 %v810
  %1026 = vmatpush1.msra.mxu0 %v809
  %1027 = vmatprep.subr.mxu0 %v813
  %1028 = vmatpush1.msra.mxu0 %v812
  %1029 = vmatprep.subr.mxu0 %v816
  %1030 = vmatpush1.msra.mxu0 %v815
  %1031 = vmatprep.subr.mxu0 %v819
  %1032 = vmatpush1.msra.mxu0 %v818
  %1033 = vmatprep.subr.mxu0 %v822
  %1034 = vmatpush1.msra.mxu0 %v821
  %1035 = vmatprep.subr.mxu0 %v825
  %1036 = vmatpush1.msra.mxu0 %v824
  %1037 = vmatprep.subr.mxu0 %v828
  %1038 = vmatpush1.msra.mxu0 %v827
  %1039 = vmatprep.subr.mxu0 %v831
  %1040 = vmatpush1.msra.mxu0 %v830
  %1041 = vmatprep.subr.mxu0 0.0
  %1042 = vmatpush1.msra.mxu0 0.0
  %1043 = vmatprep.subr.mxu0 0.0
  %1044 = vmatpush1.msra.mxu0 0.0
  %1045 = vmatprep.subr.mxu0 0.0
  %1046 = vmatpush1.msra.mxu0 0.0
  %1047 = vmatprep.subr.mxu0 0.0
  %1048 = vmatpush1.msra.mxu0 0.0
  %1049 = vmatprep.subr.mxu0 0.0
  %1050 = vmatpush1.msra.mxu0 0.0
  %1051 = vmatprep.subr.mxu0 0.0
  %1052 = vmatpush1.msra.mxu0 0.0
  %1053 = vmatprep.subr.mxu0 0.0
  %1054 = vmatpush1.msra.mxu0 0.0
  %1055 = vmatprep.subr.mxu0 0.0
  %1056 = vmatpush1.msra.mxu0 0.0
  %1057 = vmatprep.mubr.f32.mxu0 %v834
  %1058 = vmatmul.mubr.f32.gmra.mrb[0].mxu0 %v561
  %v1059 = vpop.f32.mrb[0].mxu0
  %v1060 = vadd.f32 %v983, %v1059
  %v1061 = vpop.f32.mrb[0].mxu0
  %v1062 = vadd.f32 %v985, %v1061
  %1063 = vmatprep.mubr.f32.mxu0 %v837
  %1064 = vmatmul.mubr.f32.gmra.mrb[0].mxu0 %v567
  %v1065 = vpop.f32.mrb[0].mxu0
  %v1066 = vadd.f32 %v989, %v1065
  %v1067 = vpop.f32.mrb[0].mxu0
  %v1068 = vadd.f32 %v991, %v1067
  %1069 = vdwg.mxu0
  %1070 = vmatprep.subr.mxu0 0.0
  %1071 = vmatpush1.msra.mxu0 %v571
  %1072 = vmatprep.subr.mxu0 0.0
  %1073 = vmatpush1.msra.mxu0 %v574
  %1074 = vmatprep.subr.mxu0 0.0
  %1075 = vmatpush1.msra.mxu0 %v577
  %1076 = vmatprep.subr.mxu0 0.0
  %1077 = vmatpush1.msra.mxu0 %v580
  %1078 = vmatprep.subr.mxu0 0.0
  %1079 = vmatpush1.msra.mxu0 %v583
  %1080 = vmatprep.subr.mxu0 0.0
  %1081 = vmatpush1.msra.mxu0 %v586
  %1082 = vmatprep.subr.mxu0 0.0
  %1083 = vmatpush1.msra.mxu0 %v589
  %1084 = vmatprep.subr.mxu0 0.0
  %1085 = vmatpush1.msra.mxu0 %v592
  %1086 = vmatprep.subr.mxu0 0.0
  %1087 = vmatpush1.msra.mxu0 %v595
  %1088 = vmatprep.subr.mxu0 0.0
  %1089 = vmatpush1.msra.mxu0 %v598
  %1090 = vmatprep.subr.mxu0 0.0
  %1091 = vmatpush1.msra.mxu0 %v601
  %1092 = vmatprep.subr.mxu0 0.0
  %1093 = vmatpush1.msra.mxu0 %v604
  %1094 = vmatprep.subr.mxu0 0.0
  %1095 = vmatpush1.msra.mxu0 %v607
  %1096 = vmatprep.subr.mxu0 0.0
  %1097 = vmatpush1.msra.mxu0 %v610
  %1098 = vmatprep.subr.mxu0 0.0
  %1099 = vmatpush1.msra.mxu0 %v613
  %1100 = vmatprep.subr.mxu0 0.0
  %1101 = vmatpush1.msra.mxu0 %v616
  %1102 = vmatprep.subr.mxu0 0.0
  %1103 = vmatpush1.msra.mxu0 %v619
  %1104 = vmatprep.subr.mxu0 0.0
  %1105 = vmatpush1.msra.mxu0 %v622
  %1106 = vmatprep.subr.mxu0 0.0
  %1107 = vmatpush1.msra.mxu0 %v625
  %1108 = vmatprep.subr.mxu0 0.0
  %1109 = vmatpush1.msra.mxu0 %v628
  %1110 = vmatprep.subr.mxu0 0.0
  %1111 = vmatpush1.msra.mxu0 %v631
  %1112 = vmatprep.subr.mxu0 0.0
  %1113 = vmatpush1.msra.mxu0 %v634
  %1114 = vmatprep.subr.mxu0 0.0
  %1115 = vmatpush1.msra.mxu0 %v637
  %1116 = vmatprep.subr.mxu0 0.0
  %1117 = vmatpush1.msra.mxu0 %v640
  %1118 = vmatprep.subr.mxu0 0.0
  %1119 = vmatpush1.msra.mxu0 %v643
  %1120 = vmatprep.subr.mxu0 0.0
  %1121 = vmatpush1.msra.mxu0 %v646
  %1122 = vmatprep.subr.mxu0 0.0
  %1123 = vmatpush1.msra.mxu0 %v649
  %1124 = vmatprep.subr.mxu0 0.0
  %1125 = vmatpush1.msra.mxu0 %v652
  %1126 = vmatprep.subr.mxu0 0.0
  %1127 = vmatpush1.msra.mxu0 %v655
  %1128 = vmatprep.subr.mxu0 0.0
  %1129 = vmatpush1.msra.mxu0 %v658
  %1130 = vmatprep.subr.mxu0 0.0
  %1131 = vmatpush1.msra.mxu0 %v661
  %1132 = vmatprep.subr.mxu0 0.0
  %1133 = vmatpush1.msra.mxu0 %v664
  %1134 = vmatprep.mubr.f32.mxu0 %v558
  %1135 = vmatmul.mubr.f32.gmra.mrb[0].mxu0 %v557
  %v1136 = vpop.f32.mrb[0].mxu0
  %v1137 = vadd.f32 0.0, %v1136
  %v1138 = vpop.f32.mrb[0].mxu0
  %1139 = vmatprep.mubr.f32.mxu0 %v564
  %1140 = vmatmul.mubr.f32.gmra.mrb[0].mxu0 %v563
  %v1141 = vpop.f32.mrb[0].mxu0
  %v1142 = vadd.f32 0.0, %v1141
  %v1143 = vpop.f32.mrb[0].mxu0
  %1144 = vdwg.mxu0
  %1145 = vmatprep.subr.mxu0 0.0
  %1146 = vmatpush1.msra.mxu0 %v667
  %1147 = vmatprep.subr.mxu0 0.0
  %1148 = vmatpush1.msra.mxu0 %v670
  %1149 = vmatprep.subr.mxu0 0.0
  %1150 = vmatpush1.msra.mxu0 %v673
  %1151 = vmatprep.subr.mxu0 0.0
  %1152 = vmatpush1.msra.mxu0 %v676
  %1153 = vmatprep.subr.mxu0 0.0
  %1154 = vmatpush1.msra.mxu0 %v679
  %1155 = vmatprep.subr.mxu0 0.0
  %1156 = vmatpush1.msra.mxu0 %v682
  %1157 = vmatprep.subr.mxu0 0.0
  %1158 = vmatpush1.msra.mxu0 %v685
  %1159 = vmatprep.subr.mxu0 0.0
  %1160 = vmatpush1.msra.mxu0 %v688
  %1161 = vmatprep.subr.mxu0 0.0
  %1162 = vmatpush1.msra.mxu0 %v691
  %1163 = vmatprep.subr.mxu0 0.0
  %1164 = vmatpush1.msra.mxu0 %v694
  %1165 = vmatprep.subr.mxu0 0.0
  %1166 = vmatpush1.msra.mxu0 %v697
  %1167 = vmatprep.subr.mxu0 0.0
  %1168 = vmatpush1.msra.mxu0 %v700
  %1169 = vmatprep.subr.mxu0 0.0
  %1170 = vmatpush1.msra.mxu0 %v703
  %1171 = vmatprep.subr.mxu0 0.0
  %1172 = vmatpush1.msra.mxu0 %v706
  %1173 = vmatprep.subr.mxu0 0.0
  %1174 = vmatpush1.msra.mxu0 %v709
  %1175 = vmatprep.subr.mxu0 0.0
  %1176 = vmatpush1.msra.mxu0 %v712
  %1177 = vmatprep.subr.mxu0 0.0
  %1178 = vmatpush1.msra.mxu0 %v715
  %1179 = vmatprep.subr.mxu0 0.0
  %1180 = vmatpush1.msra.mxu0 %v718
  %1181 = vmatprep.subr.mxu0 0.0
  %1182 = vmatpush1.msra.mxu0 %v721
  %1183 = vmatprep.subr.mxu0 0.0
  %1184 = vmatpush1.msra.mxu0 %v724
  %1185 = vmatprep.subr.mxu0 0.0
  %1186 = vmatpush1.msra.mxu0 %v727
  %1187 = vmatprep.subr.mxu0 0.0
  %1188 = vmatpush1.msra.mxu0 %v730
  %1189 = vmatprep.subr.mxu0 0.0
  %1190 = vmatpush1.msra.mxu0 %v733
  %1191 = vmatprep.subr.mxu0 0.0
  %1192 = vmatpush1.msra.mxu0 %v736
  %1193 = vmatprep.subr.mxu0 0.0
  %1194 = vmatpush1.msra.mxu0 %v739
  %1195 = vmatprep.subr.mxu0 0.0
  %1196 = vmatpush1.msra.mxu0 %v742
  %1197 = vmatprep.subr.mxu0 0.0
  %1198 = vmatpush1.msra.mxu0 %v745
  %1199 = vmatprep.subr.mxu0 0.0
  %1200 = vmatpush1.msra.mxu0 %v748
  %1201 = vmatprep.subr.mxu0 0.0
  %1202 = vmatpush1.msra.mxu0 %v751
  %1203 = vmatprep.subr.mxu0 0.0
  %1204 = vmatpush1.msra.mxu0 %v754
  %1205 = vmatprep.subr.mxu0 0.0
  %1206 = vmatpush1.msra.mxu0 %v757
  %1207 = vmatprep.subr.mxu0 0.0
  %1208 = vmatpush1.msra.mxu0 %v760
  %1209 = vmatprep.mubr.f32.mxu0 %v560
  %1210 = vmatmul.mubr.f32.gmra.mrb[0].mxu0 %v559
  %v1211 = vpop.f32.mrb[0].mxu0
  %v1212 = vadd.f32 %v1137, %v1211
  %v1213 = vpop.f32.mrb[0].mxu0
  %1214 = vmatprep.mubr.f32.mxu0 %v566
  %1215 = vmatmul.mubr.f32.gmra.mrb[0].mxu0 %v565
  %v1216 = vpop.f32.mrb[0].mxu0
  %v1217 = vadd.f32 %v1142, %v1216
  %v1218 = vpop.f32.mrb[0].mxu0
  %1219 = vdwg.mxu0
  %1220 = vmatprep.subr.mxu0 0.0
  %1221 = vmatpush1.msra.mxu0 %v763
  %1222 = vmatprep.subr.mxu0 0.0
  %1223 = vmatpush1.msra.mxu0 %v766
  %1224 = vmatprep.subr.mxu0 0.0
  %1225 = vmatpush1.msra.mxu0 %v769
  %1226 = vmatprep.subr.mxu0 0.0
  %1227 = vmatpush1.msra.mxu0 %v772
  %1228 = vmatprep.subr.mxu0 0.0
  %1229 = vmatpush1.msra.mxu0 %v775
  %1230 = vmatprep.subr.mxu0 0.0
  %1231 = vmatpush1.msra.mxu0 %v778
  %1232 = vmatprep.subr.mxu0 0.0
  %1233 = vmatpush1.msra.mxu0 %v781
  %1234 = vmatprep.subr.mxu0 0.0
  %1235 = vmatpush1.msra.mxu0 %v784
  %1236 = vmatprep.subr.mxu0 0.0
  %1237 = vmatpush1.msra.mxu0 %v787
  %1238 = vmatprep.subr.mxu0 0.0
  %1239 = vmatpush1.msra.mxu0 %v790
  %1240 = vmatprep.subr.mxu0 0.0
  %1241 = vmatpush1.msra.mxu0 %v793
  %1242 = vmatprep.subr.mxu0 0.0
  %1243 = vmatpush1.msra.mxu0 %v796
  %1244 = vmatprep.subr.mxu0 0.0
  %1245 = vmatpush1.msra.mxu0 %v799
  %1246 = vmatprep.subr.mxu0 0.0
  %1247 = vmatpush1.msra.mxu0 %v802
  %1248 = vmatprep.subr.mxu0 0.0
  %1249 = vmatpush1.msra.mxu0 %v805
  %1250 = vmatprep.subr.mxu0 0.0
  %1251 = vmatpush1.msra.mxu0 %v808
  %1252 = vmatprep.subr.mxu0 0.0
  %1253 = vmatpush1.msra.mxu0 %v811
  %1254 = vmatprep.subr.mxu0 0.0
  %1255 = vmatpush1.msra.mxu0 %v814
  %1256 = vmatprep.subr.mxu0 0.0
  %1257 = vmatpush1.msra.mxu0 %v817
  %1258 = vmatprep.subr.mxu0 0.0
  %1259 = vmatpush1.msra.mxu0 %v820
  %1260 = vmatprep.subr.mxu0 0.0
  %1261 = vmatpush1.msra.mxu0 %v823
  %1262 = vmatprep.subr.mxu0 0.0
  %1263 = vmatpush1.msra.mxu0 %v826
  %1264 = vmatprep.subr.mxu0 0.0
  %1265 = vmatpush1.msra.mxu0 %v829
  %1266 = vmatprep.subr.mxu0 0.0
  %1267 = vmatpush1.msra.mxu0 %v832
  %1268 = vmatprep.subr.mxu0 0.0
  %1269 = vmatpush1.msra.mxu0 0.0
  %1270 = vmatprep.subr.mxu0 0.0
  %1271 = vmatpush1.msra.mxu0 0.0
  %1272 = vmatprep.subr.mxu0 0.0
  %1273 = vmatpush1.msra.mxu0 0.0
  %1274 = vmatprep.subr.mxu0 0.0
  %1275 = vmatpush1.msra.mxu0 0.0
  %1276 = vmatprep.subr.mxu0 0.0
  %1277 = vmatpush1.msra.mxu0 0.0
  %1278 = vmatprep.subr.mxu0 0.0
  %1279 = vmatpush1.msra.mxu0 0.0
  %1280 = vmatprep.subr.mxu0 0.0
  %1281 = vmatpush1.msra.mxu0 0.0
  %1282 = vmatprep.subr.mxu0 0.0
  %1283 = vmatpush1.msra.mxu0 0.0
  %1284 = vmatprep.mubr.f32.mxu0 %v834
  %1285 = vmatmul.mubr.f32.gmra.mrb[0].mxu0 %v561
  %v1286 = vpop.f32.mrb[0].mxu0
  %v1287 = vadd.f32 %v1212, %v1286
  %v1288 = vpop.f32.mrb[0].mxu0
  %1289 = vmatprep.mubr.f32.mxu0 %v837
  %1290 = vmatmul.mubr.f32.gmra.mrb[0].mxu0 %v567
  %v1291 = vpop.f32.mrb[0].mxu0
  %v1292 = vadd.f32 %v1217, %v1291
  %v1293 = vpop.f32.mrb[0].mxu0
  %1294 = vdwg.mxu0
  %v1296 = vsel %vm48, %v286, 0
  %v1299 = vsel %vm48, %v292, 0
  %1301 = vmatprep.subr.mxu0 %v294
  %1302 = vmatpush1.msra.mxu0 %v293
  %1303 = vmatprep.subr.mxu0 %v297
  %1304 = vmatpush1.msra.mxu0 %v296
  %1305 = vmatprep.subr.mxu0 %v300
  %1306 = vmatpush1.msra.mxu0 %v299
  %1307 = vmatprep.subr.mxu0 %v303
  %1308 = vmatpush1.msra.mxu0 %v302
  %1309 = vmatprep.subr.mxu0 %v306
  %1310 = vmatpush1.msra.mxu0 %v305
  %1311 = vmatprep.subr.mxu0 %v309
  %1312 = vmatpush1.msra.mxu0 %v308
  %1313 = vmatprep.subr.mxu0 %v312
  %1314 = vmatpush1.msra.mxu0 %v311
  %1315 = vmatprep.subr.mxu0 %v315
  %1316 = vmatpush1.msra.mxu0 %v314
  %1317 = vmatprep.subr.mxu0 %v318
  %1318 = vmatpush1.msra.mxu0 %v317
  %1319 = vmatprep.subr.mxu0 %v321
  %1320 = vmatpush1.msra.mxu0 %v320
  %1321 = vmatprep.subr.mxu0 %v324
  %1322 = vmatpush1.msra.mxu0 %v323
  %1323 = vmatprep.subr.mxu0 %v327
  %1324 = vmatpush1.msra.mxu0 %v326
  %1325 = vmatprep.subr.mxu0 %v330
  %1326 = vmatpush1.msra.mxu0 %v329
  %1327 = vmatprep.subr.mxu0 %v333
  %1328 = vmatpush1.msra.mxu0 %v332
  %1329 = vmatprep.subr.mxu0 %v336
  %1330 = vmatpush1.msra.mxu0 %v335
  %1331 = vmatprep.subr.mxu0 %v339
  %1332 = vmatpush1.msra.mxu0 %v338
  %1333 = vmatprep.subr.mxu0 %v342
  %1334 = vmatpush1.msra.mxu0 %v341
  %1335 = vmatprep.subr.mxu0 %v345
  %1336 = vmatpush1.msra.mxu0 %v344
  %1337 = vmatprep.subr.mxu0 %v348
  %1338 = vmatpush1.msra.mxu0 %v347
  %1339 = vmatprep.subr.mxu0 %v351
  %1340 = vmatpush1.msra.mxu0 %v350
  %1341 = vmatprep.subr.mxu0 %v354
  %1342 = vmatpush1.msra.mxu0 %v353
  %1343 = vmatprep.subr.mxu0 %v357
  %1344 = vmatpush1.msra.mxu0 %v356
  %1345 = vmatprep.subr.mxu0 %v360
  %1346 = vmatpush1.msra.mxu0 %v359
  %1347 = vmatprep.subr.mxu0 %v363
  %1348 = vmatpush1.msra.mxu0 %v362
  %1349 = vmatprep.subr.mxu0 %v366
  %1350 = vmatpush1.msra.mxu0 %v365
  %1351 = vmatprep.subr.mxu0 %v369
  %1352 = vmatpush1.msra.mxu0 %v368
  %1353 = vmatprep.subr.mxu0 %v372
  %1354 = vmatpush1.msra.mxu0 %v371
  %1355 = vmatprep.subr.mxu0 %v375
  %1356 = vmatpush1.msra.mxu0 %v374
  %1357 = vmatprep.subr.mxu0 %v378
  %1358 = vmatpush1.msra.mxu0 %v377
  %1359 = vmatprep.subr.mxu0 %v381
  %1360 = vmatpush1.msra.mxu0 %v380
  %1361 = vmatprep.subr.mxu0 %v384
  %1362 = vmatpush1.msra.mxu0 %v383
  %1363 = vmatprep.subr.mxu0 %v387
  %1364 = vmatpush1.msra.mxu0 %v386
  %1365 = vmatprep.mubr.f32.mxu0 %v282
  %1366 = vmatmul.mubr.f32.gmra.mrb[0].mxu0 %v281
  %v1367 = vpop.f32.mrb[0].mxu0
  %v1368 = vadd.f32 %v1060, %v1367
  %v1369 = vpop.f32.mrb[0].mxu0
  %v1370 = vadd.f32 %v1062, %v1369
  %1371 = vmatprep.mubr.f32.mxu0 %v288
  %1372 = vmatmul.mubr.f32.gmra.mrb[0].mxu0 %v287
  %v1373 = vpop.f32.mrb[0].mxu0
  %v1374 = vadd.f32 %v1066, %v1373
  %v1375 = vpop.f32.mrb[0].mxu0
  %v1376 = vadd.f32 %v1068, %v1375
  %1377 = vdwg.mxu0
  %1378 = vmatprep.subr.mxu0 %v390
  %1379 = vmatpush1.msra.mxu0 %v389
  %1380 = vmatprep.subr.mxu0 %v393
  %1381 = vmatpush1.msra.mxu0 %v392
  %1382 = vmatprep.subr.mxu0 %v396
  %1383 = vmatpush1.msra.mxu0 %v395
  %1384 = vmatprep.subr.mxu0 %v399
  %1385 = vmatpush1.msra.mxu0 %v398
  %1386 = vmatprep.subr.mxu0 %v402
  %1387 = vmatpush1.msra.mxu0 %v401
  %1388 = vmatprep.subr.mxu0 %v405
  %1389 = vmatpush1.msra.mxu0 %v404
  %1390 = vmatprep.subr.mxu0 %v408
  %1391 = vmatpush1.msra.mxu0 %v407
  %1392 = vmatprep.subr.mxu0 %v411
  %1393 = vmatpush1.msra.mxu0 %v410
  %1394 = vmatprep.subr.mxu0 %v414
  %1395 = vmatpush1.msra.mxu0 %v413
  %1396 = vmatprep.subr.mxu0 %v417
  %1397 = vmatpush1.msra.mxu0 %v416
  %1398 = vmatprep.subr.mxu0 %v420
  %1399 = vmatpush1.msra.mxu0 %v419
  %1400 = vmatprep.subr.mxu0 %v423
  %1401 = vmatpush1.msra.mxu0 %v422
  %1402 = vmatprep.subr.mxu0 %v426
  %1403 = vmatpush1.msra.mxu0 %v425
  %1404 = vmatprep.subr.mxu0 %v429
  %1405 = vmatpush1.msra.mxu0 %v428
  %1406 = vmatprep.subr.mxu0 %v432
  %1407 = vmatpush1.msra.mxu0 %v431
  %1408 = vmatprep.subr.mxu0 %v435
  %1409 = vmatpush1.msra.mxu0 %v434
  %1410 = vmatprep.subr.mxu0 %v438
  %1411 = vmatpush1.msra.mxu0 %v437
  %1412 = vmatprep.subr.mxu0 %v441
  %1413 = vmatpush1.msra.mxu0 %v440
  %1414 = vmatprep.subr.mxu0 %v444
  %1415 = vmatpush1.msra.mxu0 %v443
  %1416 = vmatprep.subr.mxu0 %v447
  %1417 = vmatpush1.msra.mxu0 %v446
  %1418 = vmatprep.subr.mxu0 %v450
  %1419 = vmatpush1.msra.mxu0 %v449
  %1420 = vmatprep.subr.mxu0 %v453
  %1421 = vmatpush1.msra.mxu0 %v452
  %1422 = vmatprep.subr.mxu0 %v456
  %1423 = vmatpush1.msra.mxu0 %v455
  %1424 = vmatprep.subr.mxu0 %v459
  %1425 = vmatpush1.msra.mxu0 %v458
  %1426 = vmatprep.subr.mxu0 %v462
  %1427 = vmatpush1.msra.mxu0 %v461
  %1428 = vmatprep.subr.mxu0 %v465
  %1429 = vmatpush1.msra.mxu0 %v464
  %1430 = vmatprep.subr.mxu0 %v468
  %1431 = vmatpush1.msra.mxu0 %v467
  %1432 = vmatprep.subr.mxu0 %v471
  %1433 = vmatpush1.msra.mxu0 %v470
  %1434 = vmatprep.subr.mxu0 %v474
  %1435 = vmatpush1.msra.mxu0 %v473
  %1436 = vmatprep.subr.mxu0 %v477
  %1437 = vmatpush1.msra.mxu0 %v476
  %1438 = vmatprep.subr.mxu0 %v480
  %1439 = vmatpush1.msra.mxu0 %v479
  %1440 = vmatprep.subr.mxu0 %v483
  %1441 = vmatpush1.msra.mxu0 %v482
  %1442 = vmatprep.mubr.f32.mxu0 %v284
  %1443 = vmatmul.mubr.f32.gmra.mrb[0].mxu0 %v283
  %v1444 = vpop.f32.mrb[0].mxu0
  %v1445 = vadd.f32 %v1368, %v1444
  %v1446 = vpop.f32.mrb[0].mxu0
  %v1447 = vadd.f32 %v1370, %v1446
  %1448 = vmatprep.mubr.f32.mxu0 %v290
  %1449 = vmatmul.mubr.f32.gmra.mrb[0].mxu0 %v289
  %v1450 = vpop.f32.mrb[0].mxu0
  %v1451 = vadd.f32 %v1374, %v1450
  %v1452 = vpop.f32.mrb[0].mxu0
  %v1453 = vadd.f32 %v1376, %v1452
  %1454 = vdwg.mxu0
  %1455 = vmatprep.subr.mxu0 %v486
  %1456 = vmatpush1.msra.mxu0 %v485
  %1457 = vmatprep.subr.mxu0 %v489
  %1458 = vmatpush1.msra.mxu0 %v488
  %1459 = vmatprep.subr.mxu0 %v492
  %1460 = vmatpush1.msra.mxu0 %v491
  %1461 = vmatprep.subr.mxu0 %v495
  %1462 = vmatpush1.msra.mxu0 %v494
  %1463 = vmatprep.subr.mxu0 %v498
  %1464 = vmatpush1.msra.mxu0 %v497
  %1465 = vmatprep.subr.mxu0 %v501
  %1466 = vmatpush1.msra.mxu0 %v500
  %1467 = vmatprep.subr.mxu0 %v504
  %1468 = vmatpush1.msra.mxu0 %v503
  %1469 = vmatprep.subr.mxu0 %v507
  %1470 = vmatpush1.msra.mxu0 %v506
  %1471 = vmatprep.subr.mxu0 %v510
  %1472 = vmatpush1.msra.mxu0 %v509
  %1473 = vmatprep.subr.mxu0 %v513
  %1474 = vmatpush1.msra.mxu0 %v512
  %1475 = vmatprep.subr.mxu0 %v516
  %1476 = vmatpush1.msra.mxu0 %v515
  %1477 = vmatprep.subr.mxu0 %v519
  %1478 = vmatpush1.msra.mxu0 %v518
  %1479 = vmatprep.subr.mxu0 %v522
  %1480 = vmatpush1.msra.mxu0 %v521
  %1481 = vmatprep.subr.mxu0 %v525
  %1482 = vmatpush1.msra.mxu0 %v524
  %1483 = vmatprep.subr.mxu0 %v528
  %1484 = vmatpush1.msra.mxu0 %v527
  %1485 = vmatprep.subr.mxu0 %v531
  %1486 = vmatpush1.msra.mxu0 %v530
  %1487 = vmatprep.subr.mxu0 %v534
  %1488 = vmatpush1.msra.mxu0 %v533
  %1489 = vmatprep.subr.mxu0 %v537
  %1490 = vmatpush1.msra.mxu0 %v536
  %1491 = vmatprep.subr.mxu0 %v540
  %1492 = vmatpush1.msra.mxu0 %v539
  %1493 = vmatprep.subr.mxu0 %v543
  %1494 = vmatpush1.msra.mxu0 %v542
  %1495 = vmatprep.subr.mxu0 %v546
  %1496 = vmatpush1.msra.mxu0 %v545
  %1497 = vmatprep.subr.mxu0 %v549
  %1498 = vmatpush1.msra.mxu0 %v548
  %1499 = vmatprep.subr.mxu0 %v552
  %1500 = vmatpush1.msra.mxu0 %v551
  %1501 = vmatprep.subr.mxu0 %v555
  %1502 = vmatpush1.msra.mxu0 %v554
  %1503 = vmatprep.subr.mxu0 0.0
  %1504 = vmatpush1.msra.mxu0 0.0
  %1505 = vmatprep.subr.mxu0 0.0
  %1506 = vmatpush1.msra.mxu0 0.0
  %1507 = vmatprep.subr.mxu0 0.0
  %1508 = vmatpush1.msra.mxu0 0.0
  %1509 = vmatprep.subr.mxu0 0.0
  %1510 = vmatpush1.msra.mxu0 0.0
  %1511 = vmatprep.subr.mxu0 0.0
  %1512 = vmatpush1.msra.mxu0 0.0
  %1513 = vmatprep.subr.mxu0 0.0
  %1514 = vmatpush1.msra.mxu0 0.0
  %1515 = vmatprep.subr.mxu0 0.0
  %1516 = vmatpush1.msra.mxu0 0.0
  %1517 = vmatprep.subr.mxu0 0.0
  %1518 = vmatpush1.msra.mxu0 0.0
  %1519 = vmatprep.mubr.f32.mxu0 %v1296
  %1520 = vmatmul.mubr.f32.gmra.mrb[0].mxu0 %v285
  %v1521 = vpop.f32.mrb[0].mxu0
  %v1522 = vadd.f32 %v1445, %v1521
  %v1523 = vpop.f32.mrb[0].mxu0
  %v1524 = vadd.f32 %v1447, %v1523
  %1525 = vmatprep.mubr.f32.mxu0 %v1299
  %1526 = vmatmul.mubr.f32.gmra.mrb[0].mxu0 %v291
  %v1527 = vpop.f32.mrb[0].mxu0
  %v1528 = vadd.f32 %v1451, %v1527
  %v1529 = vpop.f32.mrb[0].mxu0
  %v1530 = vadd.f32 %v1453, %v1529
  %1531 = vdwg.mxu0
  %1532 = vmatprep.subr.mxu0 0.0
  %1533 = vmatpush1.msra.mxu0 %v295
  %1534 = vmatprep.subr.mxu0 0.0
  %1535 = vmatpush1.msra.mxu0 %v298
  %1536 = vmatprep.subr.mxu0 0.0
  %1537 = vmatpush1.msra.mxu0 %v301
  %1538 = vmatprep.subr.mxu0 0.0
  %1539 = vmatpush1.msra.mxu0 %v304
  %1540 = vmatprep.subr.mxu0 0.0
  %1541 = vmatpush1.msra.mxu0 %v307
  %1542 = vmatprep.subr.mxu0 0.0
  %1543 = vmatpush1.msra.mxu0 %v310
  %1544 = vmatprep.subr.mxu0 0.0
  %1545 = vmatpush1.msra.mxu0 %v313
  %1546 = vmatprep.subr.mxu0 0.0
  %1547 = vmatpush1.msra.mxu0 %v316
  %1548 = vmatprep.subr.mxu0 0.0
  %1549 = vmatpush1.msra.mxu0 %v319
  %1550 = vmatprep.subr.mxu0 0.0
  %1551 = vmatpush1.msra.mxu0 %v322
  %1552 = vmatprep.subr.mxu0 0.0
  %1553 = vmatpush1.msra.mxu0 %v325
  %1554 = vmatprep.subr.mxu0 0.0
  %1555 = vmatpush1.msra.mxu0 %v328
  %1556 = vmatprep.subr.mxu0 0.0
  %1557 = vmatpush1.msra.mxu0 %v331
  %1558 = vmatprep.subr.mxu0 0.0
  %1559 = vmatpush1.msra.mxu0 %v334
  %1560 = vmatprep.subr.mxu0 0.0
  %1561 = vmatpush1.msra.mxu0 %v337
  %1562 = vmatprep.subr.mxu0 0.0
  %1563 = vmatpush1.msra.mxu0 %v340
  %1564 = vmatprep.subr.mxu0 0.0
  %1565 = vmatpush1.msra.mxu0 %v343
  %1566 = vmatprep.subr.mxu0 0.0
  %1567 = vmatpush1.msra.mxu0 %v346
  %1568 = vmatprep.subr.mxu0 0.0
  %1569 = vmatpush1.msra.mxu0 %v349
  %1570 = vmatprep.subr.mxu0 0.0
  %1571 = vmatpush1.msra.mxu0 %v352
  %1572 = vmatprep.subr.mxu0 0.0
  %1573 = vmatpush1.msra.mxu0 %v355
  %1574 = vmatprep.subr.mxu0 0.0
  %1575 = vmatpush1.msra.mxu0 %v358
  %1576 = vmatprep.subr.mxu0 0.0
  %1577 = vmatpush1.msra.mxu0 %v361
  %1578 = vmatprep.subr.mxu0 0.0
  %1579 = vmatpush1.msra.mxu0 %v364
  %1580 = vmatprep.subr.mxu0 0.0
  %1581 = vmatpush1.msra.mxu0 %v367
  %1582 = vmatprep.subr.mxu0 0.0
  %1583 = vmatpush1.msra.mxu0 %v370
  %1584 = vmatprep.subr.mxu0 0.0
  %1585 = vmatpush1.msra.mxu0 %v373
  %1586 = vmatprep.subr.mxu0 0.0
  %1587 = vmatpush1.msra.mxu0 %v376
  %1588 = vmatprep.subr.mxu0 0.0
  %1589 = vmatpush1.msra.mxu0 %v379
  %1590 = vmatprep.subr.mxu0 0.0
  %1591 = vmatpush1.msra.mxu0 %v382
  %1592 = vmatprep.subr.mxu0 0.0
  %1593 = vmatpush1.msra.mxu0 %v385
  %1594 = vmatprep.subr.mxu0 0.0
  %1595 = vmatpush1.msra.mxu0 %v388
  %1596 = vmatprep.mubr.f32.mxu0 %v282
  %1597 = vmatmul.mubr.f32.gmra.mrb[0].mxu0 %v281
  %v1598 = vpop.f32.mrb[0].mxu0
  %v1599 = vadd.f32 %v1287, %v1598
  %v1600 = vpop.f32.mrb[0].mxu0
  %1601 = vmatprep.mubr.f32.mxu0 %v288
  %1602 = vmatmul.mubr.f32.gmra.mrb[0].mxu0 %v287
  %v1603 = vpop.f32.mrb[0].mxu0
  %v1604 = vadd.f32 %v1292, %v1603
  %v1605 = vpop.f32.mrb[0].mxu0
  %1606 = vdwg.mxu0
  %1607 = vmatprep.subr.mxu0 0.0
  %1608 = vmatpush1.msra.mxu0 %v391
  %1609 = vmatprep.subr.mxu0 0.0
  %1610 = vmatpush1.msra.mxu0 %v394
  %1611 = vmatprep.subr.mxu0 0.0
  %1612 = vmatpush1.msra.mxu0 %v397
  %1613 = vmatprep.subr.mxu0 0.0
  %1614 = vmatpush1.msra.mxu0 %v400
  %1615 = vmatprep.subr.mxu0 0.0
  %1616 = vmatpush1.msra.mxu0 %v403
  %1617 = vmatprep.subr.mxu0 0.0
  %1618 = vmatpush1.msra.mxu0 %v406
  %1619 = vmatprep.subr.mxu0 0.0
  %1620 = vmatpush1.msra.mxu0 %v409
  %1621 = vmatprep.subr.mxu0 0.0
  %1622 = vmatpush1.msra.mxu0 %v412
  %1623 = vmatprep.subr.mxu0 0.0
  %1624 = vmatpush1.msra.mxu0 %v415
  %1625 = vmatprep.subr.mxu0 0.0
  %1626 = vmatpush1.msra.mxu0 %v418
  %1627 = vmatprep.subr.mxu0 0.0
  %1628 = vmatpush1.msra.mxu0 %v421
  %1629 = vmatprep.subr.mxu0 0.0
  %1630 = vmatpush1.msra.mxu0 %v424
  %1631 = vmatprep.subr.mxu0 0.0
  %1632 = vmatpush1.msra.mxu0 %v427
  %1633 = vmatprep.subr.mxu0 0.0
  %1634 = vmatpush1.msra.mxu0 %v430
  %1635 = vmatprep.subr.mxu0 0.0
  %1636 = vmatpush1.msra.mxu0 %v433
  %1637 = vmatprep.subr.mxu0 0.0
  %1638 = vmatpush1.msra.mxu0 %v436
  %1639 = vmatprep.subr.mxu0 0.0
  %1640 = vmatpush1.msra.mxu0 %v439
  %1641 = vmatprep.subr.mxu0 0.0
  %1642 = vmatpush1.msra.mxu0 %v442
  %1643 = vmatprep.subr.mxu0 0.0
  %1644 = vmatpush1.msra.mxu0 %v445
  %1645 = vmatprep.subr.mxu0 0.0
  %1646 = vmatpush1.msra.mxu0 %v448
  %1647 = vmatprep.subr.mxu0 0.0
  %1648 = vmatpush1.msra.mxu0 %v451
  %1649 = vmatprep.subr.mxu0 0.0
  %1650 = vmatpush1.msra.mxu0 %v454
  %1651 = vmatprep.subr.mxu0 0.0
  %1652 = vmatpush1.msra.mxu0 %v457
  %1653 = vmatprep.subr.mxu0 0.0
  %1654 = vmatpush1.msra.mxu0 %v460
  %1655 = vmatprep.subr.mxu0 0.0
  %1656 = vmatpush1.msra.mxu0 %v463
  %1657 = vmatprep.subr.mxu0 0.0
  %1658 = vmatpush1.msra.mxu0 %v466
  %1659 = vmatprep.subr.mxu0 0.0
  %1660 = vmatpush1.msra.mxu0 %v469
  %1661 = vmatprep.subr.mxu0 0.0
  %1662 = vmatpush1.msra.mxu0 %v472
  %1663 = vmatprep.subr.mxu0 0.0
  %1664 = vmatpush1.msra.mxu0 %v475
  %1665 = vmatprep.subr.mxu0 0.0
  %1666 = vmatpush1.msra.mxu0 %v478
  %1667 = vmatprep.subr.mxu0 0.0
  %1668 = vmatpush1.msra.mxu0 %v481
  %1669 = vmatprep.subr.mxu0 0.0
  %1670 = vmatpush1.msra.mxu0 %v484
  %1671 = vmatprep.mubr.f32.mxu0 %v284
  %1672 = vmatmul.mubr.f32.gmra.mrb[0].mxu0 %v283
  %v1673 = vpop.f32.mrb[0].mxu0
  %v1674 = vadd.f32 %v1599, %v1673
  %v1675 = vpop.f32.mrb[0].mxu0
  %1676 = vmatprep.mubr.f32.mxu0 %v290
  %1677 = vmatmul.mubr.f32.gmra.mrb[0].mxu0 %v289
  %v1678 = vpop.f32.mrb[0].mxu0
  %v1679 = vadd.f32 %v1604, %v1678
  %v1680 = vpop.f32.mrb[0].mxu0
  %1681 = vdwg.mxu0
  %1682 = vmatprep.subr.mxu0 0.0
  %1683 = vmatpush1.msra.mxu0 %v487
  %1684 = vmatprep.subr.mxu0 0.0
  %1685 = vmatpush1.msra.mxu0 %v490
  %1686 = vmatprep.subr.mxu0 0.0
  %1687 = vmatpush1.msra.mxu0 %v493
  %1688 = vmatprep.subr.mxu0 0.0
  %1689 = vmatpush1.msra.mxu0 %v496
  %1690 = vmatprep.subr.mxu0 0.0
  %1691 = vmatpush1.msra.mxu0 %v499
  %1692 = vmatprep.subr.mxu0 0.0
  %1693 = vmatpush1.msra.mxu0 %v502
  %1694 = vmatprep.subr.mxu0 0.0
  %1695 = vmatpush1.msra.mxu0 %v505
  %1696 = vmatprep.subr.mxu0 0.0
  %1697 = vmatpush1.msra.mxu0 %v508
  %1698 = vmatprep.subr.mxu0 0.0
  %1699 = vmatpush1.msra.mxu0 %v511
  %1700 = vmatprep.subr.mxu0 0.0
  %1701 = vmatpush1.msra.mxu0 %v514
  %1702 = vmatprep.subr.mxu0 0.0
  %1703 = vmatpush1.msra.mxu0 %v517
  %1704 = vmatprep.subr.mxu0 0.0
  %1705 = vmatpush1.msra.mxu0 %v520
  %1706 = vmatprep.subr.mxu0 0.0
  %1707 = vmatpush1.msra.mxu0 %v523
  %1708 = vmatprep.subr.mxu0 0.0
  %1709 = vmatpush1.msra.mxu0 %v526
  %1710 = vmatprep.subr.mxu0 0.0
  %1711 = vmatpush1.msra.mxu0 %v529
  %1712 = vmatprep.subr.mxu0 0.0
  %1713 = vmatpush1.msra.mxu0 %v532
  %1714 = vmatprep.subr.mxu0 0.0
  %1715 = vmatpush1.msra.mxu0 %v535
  %1716 = vmatprep.subr.mxu0 0.0
  %1717 = vmatpush1.msra.mxu0 %v538
  %1718 = vmatprep.subr.mxu0 0.0
  %1719 = vmatpush1.msra.mxu0 %v541
  %1720 = vmatprep.subr.mxu0 0.0
  %1721 = vmatpush1.msra.mxu0 %v544
  %1722 = vmatprep.subr.mxu0 0.0
  %1723 = vmatpush1.msra.mxu0 %v547
  %1724 = vmatprep.subr.mxu0 0.0
  %1725 = vmatpush1.msra.mxu0 %v550
  %1726 = vmatprep.subr.mxu0 0.0
  %1727 = vmatpush1.msra.mxu0 %v553
  %1728 = vmatprep.subr.mxu0 0.0
  %1729 = vmatpush1.msra.mxu0 %v556
  %1730 = vmatprep.subr.mxu0 0.0
  %1731 = vmatpush1.msra.mxu0 0.0
  %1732 = vmatprep.subr.mxu0 0.0
  %1733 = vmatpush1.msra.mxu0 0.0
  %1734 = vmatprep.subr.mxu0 0.0
  %1735 = vmatpush1.msra.mxu0 0.0
  %1736 = vmatprep.subr.mxu0 0.0
  %1737 = vmatpush1.msra.mxu0 0.0
  %1738 = vmatprep.subr.mxu0 0.0
  %1739 = vmatpush1.msra.mxu0 0.0
  %1740 = vmatprep.subr.mxu0 0.0
  %1741 = vmatpush1.msra.mxu0 0.0
  %1742 = vmatprep.subr.mxu0 0.0
  %1743 = vmatpush1.msra.mxu0 0.0
  %1744 = vmatprep.subr.mxu0 0.0
  %1745 = vmatpush1.msra.mxu0 0.0
  %1746 = vmatprep.mubr.f32.mxu0 %v1296
  %1747 = vmatmul.mubr.f32.gmra.mrb[0].mxu0 %v285
  %v1748 = vpop.f32.mrb[0].mxu0
  %v1749 = vadd.f32 %v1674, %v1748
  %v1750 = vpop.f32.mrb[0].mxu0
  %1751 = vmatprep.mubr.f32.mxu0 %v1299
  %1752 = vmatmul.mubr.f32.gmra.mrb[0].mxu0 %v291
  %v1753 = vpop.f32.mrb[0].mxu0
  %v1754 = vadd.f32 %v1679, %v1753
  %v1755 = vpop.f32.mrb[0].mxu0
  %1756 = vdwg.mxu0
  %v1757 = vld [vmem:[%s3] sm:$0x7]
  %v1759 = vlaneseq
  %v1760 = vshrl.u32 %v1759, 7
  %v1761 = vsub.s32 0, %v1760
  %v1762 = vrot.slane %v1757, %v1761
  %v1763 = vlaneseq
  %v1764 = vshrl.u32 %v1763, 7
  %v1765 = vsub.s32 1, %v1764
  %v1766 = vrot.slane %v1757, %v1765
  %v1767 = vlaneseq
  %v1768 = vshrl.u32 %v1767, 7
  %v1769 = vsub.s32 2, %v1768
  %v1770 = vrot.slane %v1757, %v1769
  %v1774 = vadd.f32 %v1522, %v1762
  %v1775 = vadd.f32 %v1524, %v1766
  %v1776 = vadd.f32 %v1749, %v1770
  %v1777 = vadd.f32 %v1528, %v1762
  %v1778 = vadd.f32 %v1530, %v1766
  %v1779 = vadd.f32 %v1754, %v1770
  %v1780 = vmax.f32 %v1774, 0.0
  %v1781 = vmax.f32 %v1775, 0.0
  %v1782 = vmax.f32 %v1776, 0.0
  %v1783 = vmax.f32 %v1777, 0.0
  %v1784 = vmax.f32 %v1778, 0.0
  %v1785 = vmax.f32 %v1779, 0.0
  %1786 = vst [vmem:[#allocation8] sm:$0xff] %v1780
  %1787 = vst [vmem:[#allocation8 + $0x8] sm:$0xff] %v1781
  %vm1788 = vcmask 785408
  %1789 = vst.msk [vmem:[#allocation8 + $0x10] sm:$0xff] %vm1788, %v1782
  %1790 = vst [vmem:[#allocation8 + $0x18] sm:$0xf] %v1783
  %1791 = vst [vmem:[#allocation8 + $0x20] sm:$0xf] %v1784
  %vm1792 = vcmask 781312
  %1793 = vst.msk [vmem:[#allocation8 + $0x28] sm:$0xf] %vm1792, %v1785
  %1794 = vst [vmem:[#allocation4] sm:$0xff] 0.0
  %1795 = vst [vmem:[#allocation4 + $0x8] sm:$0xff] 0.0
  %1796 = vst [vmem:[#allocation4 + $0x10] sm:$0xff] 0.0
  %1797 = vst [vmem:[#allocation4 + $0x18] sm:$0x3] 0.0
  %1798 = vst [vmem:[#allocation4 + $0x20] sm:$0x3] 0.0
  %1799 = vst [vmem:[#allocation4 + $0x28] sm:$0x3] 0.0
  %1800 = vst [vmem:[#allocation5] sm:$0xff] 0.0
  %1801 = vst [vmem:[#allocation5 + $0x8] sm:$0xff] 0.0
  %1802 = vst [vmem:[#allocation5 + $0x10] sm:$0xff] 0.0
  %1803 = vst [vmem:[#allocation5 + $0x18] sm:$0x3] 0.0
  %1804 = vst [vmem:[#allocation5 + $0x20] sm:$0x3] 0.0
  %1805 = vst [vmem:[#allocation5 + $0x28] sm:$0x3] 0.0
  %v1806 = vld [vmem:[#allocation8] ss:$8 sm:$0x7]
  %1808 = vrot.lane.b32.xlu0 %v1806, 16
  %v1809 = vpop.permute.xlu0 %1808
  %v1810 = vrot.slane %v1809, 7
  %vm1811 = vcmask 130048
  %v1812 = vsel %vm1811, %v1810, %v1809
  %vm1814 = vcmp.ge.s32.totalorder %v79, 16
  %vm1815 = vcmp.lt.s32.totalorder %v79, 368
  %vm1816 = vmand %vm1814, %vm1815
  %s1817 = scalar_lea.vmem [#allocation4], 1
  %1818 = vst.msk [vmem:[%s1817] ss:$8 sm:$0x7] %vm1816, %v1812
  %1819 = vst.msk [vmem:[%s1817] ss:$8 sm:$0x0] %vm1816, %v1812
  %s1820 = scalar_lea.vmem [#allocation8], 1
  %v1821 = vld [vmem:[%s1820] ss:$8 sm:$0x7]
  %1823 = vrot.lane.b32.xlu0 %v1821, 16
  %v1824 = vpop.permute.xlu0 %1823
  %v1825 = vrot.slane %v1824, 7
  %v1826 = vsel %vm1811, %v1825, %v1824
  %s1828 = scalar_lea.vmem [#allocation5], 1
  %1829 = vst.msk [vmem:[%s1828] ss:$8 sm:$0x7] %vm1816, %v1826
  %1830 = vst.msk [vmem:[%s1828] ss:$8 sm:$0x0] %vm1816, %v1826
  %s1831 = scalar_lea.vmem [#allocation8], 2
  %v1832 = vld [vmem:[%s1831] ss:$8 sm:$0x7]
  %1834 = vrot.lane.b32.xlu0 %v1832, 16
  %v1835 = vpop.permute.xlu0 %1834
  %v1836 = vrot.slane %v1835, 7
  %v1837 = vsel %vm1811, %v1836, %v1835
  %s1839 = scalar_lea.vmem [#allocation4], 2
  %1840 = vst.msk [vmem:[%s1839] ss:$8 sm:$0x7] %vm1816, %v1837
  %1841 = vst.msk [vmem:[%s1839] ss:$8 sm:$0x0] %vm1816, %v1837
  %s1842 = scalar_lea.vmem [#allocation8], 3
  %v1843 = vld [vmem:[%s1842] ss:$8 sm:$0x7]
  %1845 = vrot.lane.b32.xlu0 %v1843, 16
  %v1846 = vpop.permute.xlu0 %1845
  %v1847 = vrot.slane %v1846, 7
  %v1848 = vsel %vm1811, %v1847, %v1846
  %s1850 = scalar_lea.vmem [#allocation5], 2
  %1851 = vst.msk [vmem:[%s1850] ss:$8 sm:$0x7] %vm1816, %v1848
  %1852 = vst.msk [vmem:[%s1850] ss:$8 sm:$0x0] %vm1816, %v1848
  %s1853 = scalar_lea.vmem [#allocation8], 4
  %v1854 = vld [vmem:[%s1853] ss:$8 sm:$0x7]
  %1856 = vrot.lane.b32.xlu0 %v1854, 16
  %v1857 = vpop.permute.xlu0 %1856
  %v1858 = vrot.slane %v1857, 7
  %v1859 = vsel %vm1811, %v1858, %v1857
  %s1861 = scalar_lea.vmem [#allocation4], 3
  %1862 = vst.msk [vmem:[%s1861] ss:$8 sm:$0x7] %vm1816, %v1859
  %1863 = vst.msk [vmem:[%s1861] ss:$8 sm:$0x0] %vm1816, %v1859
  %s1864 = scalar_lea.vmem [#allocation8], 5
  %v1865 = vld [vmem:[%s1864] ss:$8 sm:$0x7]
  %1867 = vrot.lane.b32.xlu0 %v1865, 16
  %v1868 = vpop.permute.xlu0 %1867
  %v1869 = vrot.slane %v1868, 7
  %v1870 = vsel %vm1811, %v1869, %v1868
  %s1872 = scalar_lea.vmem [#allocation5], 3
  %1873 = vst.msk [vmem:[%s1872] ss:$8 sm:$0x7] %vm1816, %v1870
  %1874 = vst.msk [vmem:[%s1872] ss:$8 sm:$0x0] %vm1816, %v1870
  %s1875 = scalar_lea.vmem [#allocation8], 6
  %v1876 = vld [vmem:[%s1875] ss:$8 sm:$0x7]
  %1878 = vrot.lane.b32.xlu0 %v1876, 16
  %v1879 = vpop.permute.xlu0 %1878
  %v1880 = vrot.slane %v1879, 7
  %v1881 = vsel %vm1811, %v1880, %v1879
  %s1883 = scalar_lea.vmem [#allocation4], 6
  %1884 = vst.msk [vmem:[%s1883] ss:$8 sm:$0x7] %vm1816, %v1881
  %1885 = vst.msk [vmem:[%s1883] ss:$8 sm:$0x0] %vm1816, %v1881
  %s1886 = scalar_lea.vmem [#allocation8], 7
  %v1887 = vld [vmem:[%s1886] ss:$8 sm:$0x7]
  %1889 = vrot.lane.b32.xlu0 %v1887, 16
  %v1890 = vpop.permute.xlu0 %1889
  %v1891 = vrot.slane %v1890, 7
  %v1892 = vsel %vm1811, %v1891, %v1890
  %s1894 = scalar_lea.vmem [#allocation5], 6
  %1895 = vst.msk [vmem:[%s1894] ss:$8 sm:$0x7] %vm1816, %v1892
  %1896 = vst.msk [vmem:[%s1894] ss:$8 sm:$0x0] %vm1816, %v1892
  %s1897 = scalar_lea.vmem [#allocation8], 24
  %v1898 = vld [vmem:[%s1897] ss:$8 sm:$0x7]
  %1900 = vrot.lane.b32.xlu0 %v1898, 16
  %v1901 = vpop.permute.xlu0 %1900
  %v1902 = vrot.slane %v1901, 7
  %v1903 = vsel %vm1811, %v1902, %v1901
  %s1905 = scalar_lea.vmem [#allocation4], 7
  %1906 = vst.msk [vmem:[%s1905] ss:$8 sm:$0x7] %vm1816, %v1903
  %1907 = vst.msk [vmem:[%s1905] ss:$8 sm:$0x0] %vm1816, %v1903
  %s1908 = scalar_lea.vmem [#allocation8], 25
  %v1909 = vld [vmem:[%s1908] ss:$8 sm:$0x7]
  %1911 = vrot.lane.b32.xlu0 %v1909, 16
  %v1912 = vpop.permute.xlu0 %1911
  %v1913 = vrot.slane %v1912, 7
  %v1914 = vsel %vm1811, %v1913, %v1912
  %s1916 = scalar_lea.vmem [#allocation5], 7
  %1917 = vst.msk [vmem:[%s1916] ss:$8 sm:$0x7] %vm1816, %v1914
  %1918 = vst.msk [vmem:[%s1916] ss:$8 sm:$0x0] %vm1816, %v1914
  %s1919 = scalar_lea.vmem [#allocation8], 26
  %v1920 = vld [vmem:[%s1919] ss:$8 sm:$0x7]
  %1922 = vrot.lane.b32.xlu0 %v1920, 16
  %v1923 = vpop.permute.xlu0 %1922
  %v1924 = vrot.slane %v1923, 7
  %v1925 = vsel %vm1811, %v1924, %v1923
  %s1927 = scalar_lea.vmem [#allocation4], 24
  %1928 = vst.msk [vmem:[%s1927] ss:$8 sm:$0x7] %vm1816, %v1925
  %1929 = vst.msk [vmem:[%s1927] ss:$8 sm:$0x0] %vm1816, %v1925
  %s1930 = scalar_lea.vmem [#allocation8], 27
  %v1931 = vld [vmem:[%s1930] ss:$8 sm:$0x7]
  %1933 = vrot.lane.b32.xlu0 %v1931, 16
  %v1934 = vpop.permute.xlu0 %1933
  %v1935 = vrot.slane %v1934, 7
  %v1936 = vsel %vm1811, %v1935, %v1934
  %s1938 = scalar_lea.vmem [#allocation5], 24
  %1939 = vst.msk [vmem:[%s1938] ss:$8 sm:$0x7] %vm1816, %v1936
  %1940 = vst.msk [vmem:[%s1938] ss:$8 sm:$0x0] %vm1816, %v1936
  %v1941 = vld [vmem:[#allocation4] sm:$0xff]
  %v1942 = vld [vmem:[#allocation4 + $0x8] sm:$0xff]
  %v1943 = vld [vmem:[#allocation4 + $0x10] sm:$0xff]
  %v1944 = vld [vmem:[#allocation4 + $0x18] sm:$0x3]
  %v1945 = vld [vmem:[#allocation4 + $0x20] sm:$0x3]
  %v1946 = vld [vmem:[#allocation4 + $0x28] sm:$0x3]
  %v1947 = vld [vmem:[%s4] sm:$0xff]
  %v1948 = vld [vmem:[%s4 + $0x8] sm:$0xff]
  %v1949 = vld [vmem:[%s4 + $0x10] sm:$0xff]
  %v1950 = vld [vmem:[%s4 + $0x18] sm:$0xff]
  %v1951 = vld [vmem:[%s4 + $0x20] sm:$0xff]
  %v1952 = vld [vmem:[%s4 + $0x28] sm:$0xff]
  %v1953 = vld [vmem:[%s4 + $0x30] sm:$0xff]
  %v1954 = vld [vmem:[%s4 + $0x38] sm:$0xff]
  %v1955 = vld [vmem:[%s4 + $0x40] sm:$0xff]
  %v1956 = vld [vmem:[%s4 + $0x48] sm:$0xff]
  %v1957 = vld [vmem:[%s4 + $0x50] sm:$0xff]
  %v1958 = vld [vmem:[%s4 + $0x58] sm:$0xff]
  %v1959 = vld [vmem:[%s4 + $0x60] sm:$0xff]
  %v1960 = vld [vmem:[%s4 + $0x68] sm:$0xff]
  %v1961 = vld [vmem:[%s4 + $0x70] sm:$0xff]
  %v1962 = vld [vmem:[%s4 + $0x78] sm:$0xff]
  %v1963 = vld [vmem:[%s4 + $0x80] sm:$0xff]
  %v1964 = vld [vmem:[%s4 + $0x88] sm:$0xff]
  %v1965 = vld [vmem:[%s4 + $0x90] sm:$0xff]
  %v1966 = vld [vmem:[%s4 + $0x98] sm:$0xff]
  %v1967 = vld [vmem:[%s4 + $0xa0] sm:$0xff]
  %v1968 = vld [vmem:[%s4 + $0xa8] sm:$0xff]
  %v1969 = vld [vmem:[%s4 + $0xb0] sm:$0xff]
  %v1970 = vld [vmem:[%s4 + $0xb8] sm:$0xff]
  %v1971 = vld [vmem:[%s4 + $0xc0] sm:$0xff]
  %v1972 = vld [vmem:[%s4 + $0xc8] sm:$0xff]
  %v1973 = vld [vmem:[%s4 + $0xd0] sm:$0xff]
  %v1974 = vld [vmem:[%s4 + $0xd8] sm:$0xff]
  %v1975 = vld [vmem:[%s4 + $0xe0] sm:$0xff]
  %v1976 = vld [vmem:[%s4 + $0xe8] sm:$0xff]
  %v1977 = vld [vmem:[%s4 + $0xf0] sm:$0xff]
  %v1978 = vld [vmem:[%s4 + $0xf8] sm:$0xff]
  %v1979 = vld [vmem:[%s4 + $0x100] sm:$0xff]
  %v1980 = vld [vmem:[%s4 + $0x108] sm:$0xff]
  %v1981 = vld [vmem:[%s4 + $0x110] sm:$0xff]
  %v1982 = vld [vmem:[%s4 + $0x118] sm:$0xff]
  %v1983 = vld [vmem:[%s4 + $0x120] sm:$0xff]
  %v1984 = vld [vmem:[%s4 + $0x128] sm:$0xff]
  %v1985 = vld [vmem:[%s4 + $0x130] sm:$0xff]
  %v1986 = vld [vmem:[%s4 + $0x138] sm:$0xff]
  %v1987 = vld [vmem:[%s4 + $0x140] sm:$0xff]
  %v1988 = vld [vmem:[%s4 + $0x148] sm:$0xff]
  %v1989 = vld [vmem:[%s4 + $0x150] sm:$0xff]
  %v1990 = vld [vmem:[%s4 + $0x158] sm:$0xff]
  %v1991 = vld [vmem:[%s4 + $0x160] sm:$0xff]
  %v1992 = vld [vmem:[%s4 + $0x168] sm:$0xff]
  %v1993 = vld [vmem:[%s4 + $0x170] sm:$0xff]
  %v1994 = vld [vmem:[%s4 + $0x178] sm:$0xff]
  %v1995 = vld [vmem:[%s4 + $0x180] sm:$0xff]
  %v1996 = vld [vmem:[%s4 + $0x188] sm:$0xff]
  %v1997 = vld [vmem:[%s4 + $0x190] sm:$0xff]
  %v1998 = vld [vmem:[%s4 + $0x198] sm:$0xff]
  %v1999 = vld [vmem:[%s4 + $0x1a0] sm:$0xff]
  %v2000 = vld [vmem:[%s4 + $0x1a8] sm:$0xff]
  %v2001 = vld [vmem:[%s4 + $0x1b0] sm:$0xff]
  %v2002 = vld [vmem:[%s4 + $0x1b8] sm:$0xff]
  %v2003 = vld [vmem:[%s4 + $0x1c0] sm:$0xff]
  %v2004 = vld [vmem:[%s4 + $0x1c8] sm:$0xff]
  %v2005 = vld [vmem:[%s4 + $0x1d0] sm:$0xff]
  %v2006 = vld [vmem:[%s4 + $0x1d8] sm:$0xff]
  %v2007 = vld [vmem:[%s4 + $0x1e0] sm:$0xff]
  %v2008 = vld [vmem:[%s4 + $0x1e8] sm:$0xff]
  %v2009 = vld [vmem:[%s4 + $0x1f0] sm:$0xff]
  %v2010 = vld [vmem:[%s4 + $0x1f8] sm:$0xff]
  %v2011 = vld [vmem:[%s4 + $0x200] sm:$0xff]
  %v2012 = vld [vmem:[%s4 + $0x208] sm:$0xff]
  %v2013 = vld [vmem:[%s4 + $0x210] sm:$0xff]
  %v2014 = vld [vmem:[%s4 + $0x218] sm:$0xff]
  %v2015 = vld [vmem:[%s4 + $0x220] sm:$0xff]
  %v2016 = vld [vmem:[%s4 + $0x228] sm:$0xff]
  %v2017 = vld [vmem:[%s4 + $0x230] sm:$0xff]
  %v2018 = vld [vmem:[%s4 + $0x238] sm:$0xff]
  %v2019 = vld [vmem:[%s4 + $0x240] sm:$0xff]
  %v2020 = vld [vmem:[%s4 + $0x248] sm:$0xff]
  %v2021 = vld [vmem:[%s4 + $0x250] sm:$0xff]
  %v2022 = vld [vmem:[%s4 + $0x258] sm:$0xff]
  %v2023 = vld [vmem:[%s4 + $0x260] sm:$0xff]
  %v2024 = vld [vmem:[%s4 + $0x268] sm:$0xff]
  %v2025 = vld [vmem:[%s4 + $0x270] sm:$0xff]
  %v2026 = vld [vmem:[%s4 + $0x278] sm:$0xff]
  %v2027 = vld [vmem:[%s4 + $0x280] sm:$0xff]
  %v2028 = vld [vmem:[%s4 + $0x288] sm:$0xff]
  %v2029 = vld [vmem:[%s4 + $0x290] sm:$0xff]
  %v2030 = vld [vmem:[%s4 + $0x298] sm:$0xff]
  %v2031 = vld [vmem:[%s4 + $0x2a0] sm:$0xff]
  %v2032 = vld [vmem:[%s4 + $0x2a8] sm:$0xff]
  %v2033 = vld [vmem:[%s4 + $0x2b0] sm:$0xff]
  %v2034 = vld [vmem:[%s4 + $0x2b8] sm:$0xff]
  %v2035 = vld [vmem:[%s4 + $0x2c0] sm:$0xff]
  %v2036 = vld [vmem:[%s4 + $0x2c8] sm:$0xff]
  %v2037 = vld [vmem:[%s4 + $0x2d0] sm:$0xff]
  %v2038 = vld [vmem:[%s4 + $0x2d8] sm:$0xff]
  %v2039 = vld [vmem:[%s4 + $0x2e0] sm:$0xff]
  %v2040 = vld [vmem:[%s4 + $0x2e8] sm:$0xff]
  %v2041 = vld [vmem:[%s4 + $0x2f0] sm:$0xff]
  %v2042 = vld [vmem:[%s4 + $0x2f8] sm:$0xff]
  %v2043 = vld [vmem:[#allocation5] sm:$0xff]
  %v2044 = vld [vmem:[#allocation5 + $0x8] sm:$0xff]
  %v2045 = vld [vmem:[#allocation5 + $0x10] sm:$0xff]
  %v2046 = vld [vmem:[#allocation5 + $0x18] sm:$0x3]
  %v2047 = vld [vmem:[#allocation5 + $0x20] sm:$0x3]
  %v2048 = vld [vmem:[#allocation5 + $0x28] sm:$0x3]
  %v2049 = vld [vmem:[%s5] sm:$0xff]
  %v2050 = vld [vmem:[%s5 + $0x8] sm:$0xff]
  %v2051 = vld [vmem:[%s5 + $0x10] sm:$0xff]
  %v2052 = vld [vmem:[%s5 + $0x18] sm:$0xff]
  %v2053 = vld [vmem:[%s5 + $0x20] sm:$0xff]
  %v2054 = vld [vmem:[%s5 + $0x28] sm:$0xff]
  %v2055 = vld [vmem:[%s5 + $0x30] sm:$0xff]
  %v2056 = vld [vmem:[%s5 + $0x38] sm:$0xff]
  %v2057 = vld [vmem:[%s5 + $0x40] sm:$0xff]
  %v2058 = vld [vmem:[%s5 + $0x48] sm:$0xff]
  %v2059 = vld [vmem:[%s5 + $0x50] sm:$0xff]
  %v2060 = vld [vmem:[%s5 + $0x58] sm:$0xff]
  %v2061 = vld [vmem:[%s5 + $0x60] sm:$0xff]
  %v2062 = vld [vmem:[%s5 + $0x68] sm:$0xff]
  %v2063 = vld [vmem:[%s5 + $0x70] sm:$0xff]
  %v2064 = vld [vmem:[%s5 + $0x78] sm:$0xff]
  %v2065 = vld [vmem:[%s5 + $0x80] sm:$0xff]
  %v2066 = vld [vmem:[%s5 + $0x88] sm:$0xff]
  %v2067 = vld [vmem:[%s5 + $0x90] sm:$0xff]
  %v2068 = vld [vmem:[%s5 + $0x98] sm:$0xff]
  %v2069 = vld [vmem:[%s5 + $0xa0] sm:$0xff]
  %v2070 = vld [vmem:[%s5 + $0xa8] sm:$0xff]
  %v2071 = vld [vmem:[%s5 + $0xb0] sm:$0xff]
  %v2072 = vld [vmem:[%s5 + $0xb8] sm:$0xff]
  %v2073 = vld [vmem:[%s5 + $0xc0] sm:$0xff]
  %v2074 = vld [vmem:[%s5 + $0xc8] sm:$0xff]
  %v2075 = vld [vmem:[%s5 + $0xd0] sm:$0xff]
  %v2076 = vld [vmem:[%s5 + $0xd8] sm:$0xff]
  %v2077 = vld [vmem:[%s5 + $0xe0] sm:$0xff]
  %v2078 = vld [vmem:[%s5 + $0xe8] sm:$0xff]
  %v2079 = vld [vmem:[%s5 + $0xf0] sm:$0xff]
  %v2080 = vld [vmem:[%s5 + $0xf8] sm:$0xff]
  %v2081 = vld [vmem:[%s5 + $0x100] sm:$0xff]
  %v2082 = vld [vmem:[%s5 + $0x108] sm:$0xff]
  %v2083 = vld [vmem:[%s5 + $0x110] sm:$0xff]
  %v2084 = vld [vmem:[%s5 + $0x118] sm:$0xff]
  %v2085 = vld [vmem:[%s5 + $0x120] sm:$0xff]
  %v2086 = vld [vmem:[%s5 + $0x128] sm:$0xff]
  %v2087 = vld [vmem:[%s5 + $0x130] sm:$0xff]
  %v2088 = vld [vmem:[%s5 + $0x138] sm:$0xff]
  %v2089 = vld [vmem:[%s5 + $0x140] sm:$0xff]
  %v2090 = vld [vmem:[%s5 + $0x148] sm:$0xff]
  %v2091 = vld [vmem:[%s5 + $0x150] sm:$0xff]
  %v2092 = vld [vmem:[%s5 + $0x158] sm:$0xff]
  %v2093 = vld [vmem:[%s5 + $0x160] sm:$0xff]
  %v2094 = vld [vmem:[%s5 + $0x168] sm:$0xff]
  %v2095 = vld [vmem:[%s5 + $0x170] sm:$0xff]
  %v2096 = vld [vmem:[%s5 + $0x178] sm:$0xff]
  %v2097 = vld [vmem:[%s5 + $0x180] sm:$0xff]
  %v2098 = vld [vmem:[%s5 + $0x188] sm:$0xff]
  %v2099 = vld [vmem:[%s5 + $0x190] sm:$0xff]
  %v2100 = vld [vmem:[%s5 + $0x198] sm:$0xff]
  %v2101 = vld [vmem:[%s5 + $0x1a0] sm:$0xff]
  %v2102 = vld [vmem:[%s5 + $0x1a8] sm:$0xff]
  %v2103 = vld [vmem:[%s5 + $0x1b0] sm:$0xff]
  %v2104 = vld [vmem:[%s5 + $0x1b8] sm:$0xff]
  %v2105 = vld [vmem:[%s5 + $0x1c0] sm:$0xff]
  %v2106 = vld [vmem:[%s5 + $0x1c8] sm:$0xff]
  %v2107 = vld [vmem:[%s5 + $0x1d0] sm:$0xff]
  %v2108 = vld [vmem:[%s5 + $0x1d8] sm:$0xff]
  %v2109 = vld [vmem:[%s5 + $0x1e0] sm:$0xff]
  %v2110 = vld [vmem:[%s5 + $0x1e8] sm:$0xff]
  %v2111 = vld [vmem:[%s5 + $0x1f0] sm:$0xff]
  %v2112 = vld [vmem:[%s5 + $0x1f8] sm:$0xff]
  %v2113 = vld [vmem:[%s5 + $0x200] sm:$0xff]
  %v2114 = vld [vmem:[%s5 + $0x208] sm:$0xff]
  %v2115 = vld [vmem:[%s5 + $0x210] sm:$0xff]
  %v2116 = vld [vmem:[%s5 + $0x218] sm:$0xff]
  %v2117 = vld [vmem:[%s5 + $0x220] sm:$0xff]
  %v2118 = vld [vmem:[%s5 + $0x228] sm:$0xff]
  %v2119 = vld [vmem:[%s5 + $0x230] sm:$0xff]
  %v2120 = vld [vmem:[%s5 + $0x238] sm:$0xff]
  %v2121 = vld [vmem:[%s5 + $0x240] sm:$0xff]
  %v2122 = vld [vmem:[%s5 + $0x248] sm:$0xff]
  %v2123 = vld [vmem:[%s5 + $0x250] sm:$0xff]
  %v2124 = vld [vmem:[%s5 + $0x258] sm:$0xff]
  %v2125 = vld [vmem:[%s5 + $0x260] sm:$0xff]
  %v2126 = vld [vmem:[%s5 + $0x268] sm:$0xff]
  %v2127 = vld [vmem:[%s5 + $0x270] sm:$0xff]
  %v2128 = vld [vmem:[%s5 + $0x278] sm:$0xff]
  %v2129 = vld [vmem:[%s5 + $0x280] sm:$0xff]
  %v2130 = vld [vmem:[%s5 + $0x288] sm:$0xff]
  %v2131 = vld [vmem:[%s5 + $0x290] sm:$0xff]
  %v2132 = vld [vmem:[%s5 + $0x298] sm:$0xff]
  %v2133 = vld [vmem:[%s5 + $0x2a0] sm:$0xff]
  %v2134 = vld [vmem:[%s5 + $0x2a8] sm:$0xff]
  %v2135 = vld [vmem:[%s5 + $0x2b0] sm:$0xff]
  %v2136 = vld [vmem:[%s5 + $0x2b8] sm:$0xff]
  %v2137 = vld [vmem:[%s5 + $0x2c0] sm:$0xff]
  %v2138 = vld [vmem:[%s5 + $0x2c8] sm:$0xff]
  %v2139 = vld [vmem:[%s5 + $0x2d0] sm:$0xff]
  %v2140 = vld [vmem:[%s5 + $0x2d8] sm:$0xff]
  %v2141 = vld [vmem:[%s5 + $0x2e0] sm:$0xff]
  %v2142 = vld [vmem:[%s5 + $0x2e8] sm:$0xff]
  %v2143 = vld [vmem:[%s5 + $0x2f0] sm:$0xff]
  %v2144 = vld [vmem:[%s5 + $0x2f8] sm:$0xff]
  %2145 = vmatprep.subr.mxu0 %v2050
  %2146 = vmatpush1.msra.mxu0 %v2049
  %2147 = vmatprep.subr.mxu0 %v2052
  %2148 = vmatpush1.msra.mxu0 %v2051
  %2149 = vmatprep.subr.mxu0 %v2054
  %2150 = vmatpush1.msra.mxu0 %v2053
  %2151 = vmatprep.subr.mxu0 %v2056
  %2152 = vmatpush1.msra.mxu0 %v2055
  %2153 = vmatprep.subr.mxu0 %v2058
  %2154 = vmatpush1.msra.mxu0 %v2057
  %2155 = vmatprep.subr.mxu0 %v2060
  %2156 = vmatpush1.msra.mxu0 %v2059
  %2157 = vmatprep.subr.mxu0 %v2062
  %2158 = vmatpush1.msra.mxu0 %v2061
  %2159 = vmatprep.subr.mxu0 %v2064
  %2160 = vmatpush1.msra.mxu0 %v2063
  %2161 = vmatprep.subr.mxu0 %v2066
  %2162 = vmatpush1.msra.mxu0 %v2065
  %2163 = vmatprep.subr.mxu0 %v2068
  %2164 = vmatpush1.msra.mxu0 %v2067
  %2165 = vmatprep.subr.mxu0 %v2070
  %2166 = vmatpush1.msra.mxu0 %v2069
  %2167 = vmatprep.subr.mxu0 %v2072
  %2168 = vmatpush1.msra.mxu0 %v2071
  %2169 = vmatprep.subr.mxu0 %v2074
  %2170 = vmatpush1.msra.mxu0 %v2073
  %2171 = vmatprep.subr.mxu0 %v2076
  %2172 = vmatpush1.msra.mxu0 %v2075
  %2173 = vmatprep.subr.mxu0 %v2078
  %2174 = vmatpush1.msra.mxu0 %v2077
  %2175 = vmatprep.subr.mxu0 %v2080
  %2176 = vmatpush1.msra.mxu0 %v2079
  %2177 = vmatprep.subr.mxu0 %v2082
  %2178 = vmatpush1.msra.mxu0 %v2081
  %2179 = vmatprep.subr.mxu0 %v2084
  %2180 = vmatpush1.msra.mxu0 %v2083
  %2181 = vmatprep.subr.mxu0 %v2086
  %2182 = vmatpush1.msra.mxu0 %v2085
  %2183 = vmatprep.subr.mxu0 %v2088
  %2184 = vmatpush1.msra.mxu0 %v2087
  %2185 = vmatprep.subr.mxu0 %v2090
  %2186 = vmatpush1.msra.mxu0 %v2089
  %2187 = vmatprep.subr.mxu0 %v2092
  %2188 = vmatpush1.msra.mxu0 %v2091
  %2189 = vmatprep.subr.mxu0 %v2094
  %2190 = vmatpush1.msra.mxu0 %v2093
  %2191 = vmatprep.subr.mxu0 %v2096
  %2192 = vmatpush1.msra.mxu0 %v2095
  %2193 = vmatprep.subr.mxu0 %v2098
  %2194 = vmatpush1.msra.mxu0 %v2097
  %2195 = vmatprep.subr.mxu0 %v2100
  %2196 = vmatpush1.msra.mxu0 %v2099
  %2197 = vmatprep.subr.mxu0 %v2102
  %2198 = vmatpush1.msra.mxu0 %v2101
  %2199 = vmatprep.subr.mxu0 %v2104
  %2200 = vmatpush1.msra.mxu0 %v2103
  %2201 = vmatprep.subr.mxu0 %v2106
  %2202 = vmatpush1.msra.mxu0 %v2105
  %2203 = vmatprep.subr.mxu0 %v2108
  %2204 = vmatpush1.msra.mxu0 %v2107
  %2205 = vmatprep.subr.mxu0 %v2110
  %2206 = vmatpush1.msra.mxu0 %v2109
  %2207 = vmatprep.subr.mxu0 %v2112
  %2208 = vmatpush1.msra.mxu0 %v2111
  %2209 = vmatprep.mubr.f32.mxu0 %v2044
  %2210 = vmatmul.mubr.f32.gmra.mrb[0].mxu0 %v2043
  %v2211 = vpop.f32.mrb[0].mxu0
  %v2212 = vadd.f32 0.0, %v2211
  %v2213 = vpop.f32.mrb[0].mxu0
  %v2214 = vadd.f32 0.0, %v2213
  %2215 = vmatprep.mubr.f32.mxu0 %v2047
  %2216 = vmatmul.mubr.f32.gmra.mrb[0].mxu0 %v2046
  %v2217 = vpop.f32.mrb[0].mxu0
  %v2218 = vadd.f32 0.0, %v2217
  %v2219 = vpop.f32.mrb[0].mxu0
  %v2220 = vadd.f32 0.0, %v2219
  %2221 = vdwg.mxu0
  %2222 = vmatprep.subr.mxu0 %v2114
  %2223 = vmatpush1.msra.mxu0 %v2113
  %2224 = vmatprep.subr.mxu0 %v2116
  %2225 = vmatpush1.msra.mxu0 %v2115
  %2226 = vmatprep.subr.mxu0 %v2118
  %2227 = vmatpush1.msra.mxu0 %v2117
  %2228 = vmatprep.subr.mxu0 %v2120
  %2229 = vmatpush1.msra.mxu0 %v2119
  %2230 = vmatprep.subr.mxu0 %v2122
  %2231 = vmatpush1.msra.mxu0 %v2121
  %2232 = vmatprep.subr.mxu0 %v2124
  %2233 = vmatpush1.msra.mxu0 %v2123
  %2234 = vmatprep.subr.mxu0 %v2126
  %2235 = vmatpush1.msra.mxu0 %v2125
  %2236 = vmatprep.subr.mxu0 %v2128
  %2237 = vmatpush1.msra.mxu0 %v2127
  %2238 = vmatprep.subr.mxu0 %v2130
  %2239 = vmatpush1.msra.mxu0 %v2129
  %2240 = vmatprep.subr.mxu0 %v2132
  %2241 = vmatpush1.msra.mxu0 %v2131
  %2242 = vmatprep.subr.mxu0 %v2134
  %2243 = vmatpush1.msra.mxu0 %v2133
  %2244 = vmatprep.subr.mxu0 %v2136
  %2245 = vmatpush1.msra.mxu0 %v2135
  %2246 = vmatprep.subr.mxu0 %v2138
  %2247 = vmatpush1.msra.mxu0 %v2137
  %2248 = vmatprep.subr.mxu0 %v2140
  %2249 = vmatpush1.msra.mxu0 %v2139
  %2250 = vmatprep.subr.mxu0 %v2142
  %2251 = vmatpush1.msra.mxu0 %v2141
  %2252 = vmatprep.subr.mxu0 %v2144
  %2253 = vmatpush1.msra.mxu0 %v2143
  %2254 = vmatprep.subr.mxu0 0.0
  %2255 = vmatpush1.msra.mxu0 0.0
  %2256 = vmatprep.subr.mxu0 0.0
  %2257 = vmatpush1.msra.mxu0 0.0
  %2258 = vmatprep.subr.mxu0 0.0
  %2259 = vmatpush1.msra.mxu0 0.0
  %2260 = vmatprep.subr.mxu0 0.0
  %2261 = vmatpush1.msra.mxu0 0.0
  %2262 = vmatprep.subr.mxu0 0.0
  %2263 = vmatpush1.msra.mxu0 0.0
  %2264 = vmatprep.subr.mxu0 0.0
  %2265 = vmatpush1.msra.mxu0 0.0
  %2266 = vmatprep.subr.mxu0 0.0
  %2267 = vmatpush1.msra.mxu0 0.0
  %2268 = vmatprep.subr.mxu0 0.0
  %2269 = vmatpush1.msra.mxu0 0.0
  %2270 = vmatprep.subr.mxu0 0.0
  %2271 = vmatpush1.msra.mxu0 0.0
  %2272 = vmatprep.subr.mxu0 0.0
  %2273 = vmatpush1.msra.mxu0 0.0
  %2274 = vmatprep.subr.mxu0 0.0
  %2275 = vmatpush1.msra.mxu0 0.0
  %2276 = vmatprep.subr.mxu0 0.0
  %2277 = vmatpush1.msra.mxu0 0.0
  %2278 = vmatprep.subr.mxu0 0.0
  %2279 = vmatpush1.msra.mxu0 0.0
  %2280 = vmatprep.subr.mxu0 0.0
  %2281 = vmatpush1.msra.mxu0 0.0
  %2282 = vmatprep.subr.mxu0 0.0
  %2283 = vmatpush1.msra.mxu0 0.0
  %2284 = vmatprep.subr.mxu0 0.0
  %2285 = vmatpush1.msra.mxu0 0.0
  %2286 = vmatprep.mubr.f32.mxu0 0.0
  %2287 = vmatmul.mubr.f32.gmra.mrb[0].mxu0 %v2045
  %v2288 = vpop.f32.mrb[0].mxu0
  %v2289 = vadd.f32 %v2212, %v2288
  %v2290 = vpop.f32.mrb[0].mxu0
  %v2291 = vadd.f32 %v2214, %v2290
  %2292 = vmatprep.mubr.f32.mxu0 0.0
  %2293 = vmatmul.mubr.f32.gmra.mrb[0].mxu0 %v2048
  %v2294 = vpop.f32.mrb[0].mxu0
  %v2295 = vadd.f32 %v2218, %v2294
  %v2296 = vpop.f32.mrb[0].mxu0
  %v2297 = vadd.f32 %v2220, %v2296
  %2298 = vdwg.mxu0
  %2299 = vmatprep.subr.mxu0 %v1948
  %2300 = vmatpush1.msra.mxu0 %v1947
  %2301 = vmatprep.subr.mxu0 %v1950
  %2302 = vmatpush1.msra.mxu0 %v1949
  %2303 = vmatprep.subr.mxu0 %v1952
  %2304 = vmatpush1.msra.mxu0 %v1951
  %2305 = vmatprep.subr.mxu0 %v1954
  %2306 = vmatpush1.msra.mxu0 %v1953
  %2307 = vmatprep.subr.mxu0 %v1956
  %2308 = vmatpush1.msra.mxu0 %v1955
  %2309 = vmatprep.subr.mxu0 %v1958
  %2310 = vmatpush1.msra.mxu0 %v1957
  %2311 = vmatprep.subr.mxu0 %v1960
  %2312 = vmatpush1.msra.mxu0 %v1959
  %2313 = vmatprep.subr.mxu0 %v1962
  %2314 = vmatpush1.msra.mxu0 %v1961
  %2315 = vmatprep.subr.mxu0 %v1964
  %2316 = vmatpush1.msra.mxu0 %v1963
  %2317 = vmatprep.subr.mxu0 %v1966
  %2318 = vmatpush1.msra.mxu0 %v1965
  %2319 = vmatprep.subr.mxu0 %v1968
  %2320 = vmatpush1.msra.mxu0 %v1967
  %2321 = vmatprep.subr.mxu0 %v1970
  %2322 = vmatpush1.msra.mxu0 %v1969
  %2323 = vmatprep.subr.mxu0 %v1972
  %2324 = vmatpush1.msra.mxu0 %v1971
  %2325 = vmatprep.subr.mxu0 %v1974
  %2326 = vmatpush1.msra.mxu0 %v1973
  %2327 = vmatprep.subr.mxu0 %v1976
  %2328 = vmatpush1.msra.mxu0 %v1975
  %2329 = vmatprep.subr.mxu0 %v1978
  %2330 = vmatpush1.msra.mxu0 %v1977
  %2331 = vmatprep.subr.mxu0 %v1980
  %2332 = vmatpush1.msra.mxu0 %v1979
  %2333 = vmatprep.subr.mxu0 %v1982
  %2334 = vmatpush1.msra.mxu0 %v1981
  %2335 = vmatprep.subr.mxu0 %v1984
  %2336 = vmatpush1.msra.mxu0 %v1983
  %2337 = vmatprep.subr.mxu0 %v1986
  %2338 = vmatpush1.msra.mxu0 %v1985
  %2339 = vmatprep.subr.mxu0 %v1988
  %2340 = vmatpush1.msra.mxu0 %v1987
  %2341 = vmatprep.subr.mxu0 %v1990
  %2342 = vmatpush1.msra.mxu0 %v1989
  %2343 = vmatprep.subr.mxu0 %v1992
  %2344 = vmatpush1.msra.mxu0 %v1991
  %2345 = vmatprep.subr.mxu0 %v1994
  %2346 = vmatpush1.msra.mxu0 %v1993
  %2347 = vmatprep.subr.mxu0 %v1996
  %2348 = vmatpush1.msra.mxu0 %v1995
  %2349 = vmatprep.subr.mxu0 %v1998
  %2350 = vmatpush1.msra.mxu0 %v1997
  %2351 = vmatprep.subr.mxu0 %v2000
  %2352 = vmatpush1.msra.mxu0 %v1999
  %2353 = vmatprep.subr.mxu0 %v2002
  %2354 = vmatpush1.msra.mxu0 %v2001
  %2355 = vmatprep.subr.mxu0 %v2004
  %2356 = vmatpush1.msra.mxu0 %v2003
  %2357 = vmatprep.subr.mxu0 %v2006
  %2358 = vmatpush1.msra.mxu0 %v2005
  %2359 = vmatprep.subr.mxu0 %v2008
  %2360 = vmatpush1.msra.mxu0 %v2007
  %2361 = vmatprep.subr.mxu0 %v2010
  %2362 = vmatpush1.msra.mxu0 %v2009
  %2363 = vmatprep.mubr.f32.mxu0 %v1942
  %2364 = vmatmul.mubr.f32.gmra.mrb[0].mxu0 %v1941
  %v2365 = vpop.f32.mrb[0].mxu0
  %v2366 = vadd.f32 %v2289, %v2365
  %v2367 = vpop.f32.mrb[0].mxu0
  %v2368 = vadd.f32 %v2291, %v2367
  %2369 = vmatprep.mubr.f32.mxu0 %v1945
  %2370 = vmatmul.mubr.f32.gmra.mrb[0].mxu0 %v1944
  %v2371 = vpop.f32.mrb[0].mxu0
  %v2372 = vadd.f32 %v2295, %v2371
  %v2373 = vpop.f32.mrb[0].mxu0
  %v2374 = vadd.f32 %v2297, %v2373
  %2375 = vdwg.mxu0
  %2376 = vmatprep.subr.mxu0 %v2012
  %2377 = vmatpush1.msra.mxu0 %v2011
  %2378 = vmatprep.subr.mxu0 %v2014
  %2379 = vmatpush1.msra.mxu0 %v2013
  %2380 = vmatprep.subr.mxu0 %v2016
  %2381 = vmatpush1.msra.mxu0 %v2015
  %2382 = vmatprep.subr.mxu0 %v2018
  %2383 = vmatpush1.msra.mxu0 %v2017
  %2384 = vmatprep.subr.mxu0 %v2020
  %2385 = vmatpush1.msra.mxu0 %v2019
  %2386 = vmatprep.subr.mxu0 %v2022
  %2387 = vmatpush1.msra.mxu0 %v2021
  %2388 = vmatprep.subr.mxu0 %v2024
  %2389 = vmatpush1.msra.mxu0 %v2023
  %2390 = vmatprep.subr.mxu0 %v2026
  %2391 = vmatpush1.msra.mxu0 %v2025
  %2392 = vmatprep.subr.mxu0 %v2028
  %2393 = vmatpush1.msra.mxu0 %v2027
  %2394 = vmatprep.subr.mxu0 %v2030
  %2395 = vmatpush1.msra.mxu0 %v2029
  %2396 = vmatprep.subr.mxu0 %v2032
  %2397 = vmatpush1.msra.mxu0 %v2031
  %2398 = vmatprep.subr.mxu0 %v2034
  %2399 = vmatpush1.msra.mxu0 %v2033
  %2400 = vmatprep.subr.mxu0 %v2036
  %2401 = vmatpush1.msra.mxu0 %v2035
  %2402 = vmatprep.subr.mxu0 %v2038
  %2403 = vmatpush1.msra.mxu0 %v2037
  %2404 = vmatprep.subr.mxu0 %v2040
  %2405 = vmatpush1.msra.mxu0 %v2039
  %2406 = vmatprep.subr.mxu0 %v2042
  %2407 = vmatpush1.msra.mxu0 %v2041
  %2408 = vmatprep.subr.mxu0 0.0
  %2409 = vmatpush1.msra.mxu0 0.0
  %2410 = vmatprep.subr.mxu0 0.0
  %2411 = vmatpush1.msra.mxu0 0.0
  %2412 = vmatprep.subr.mxu0 0.0
  %2413 = vmatpush1.msra.mxu0 0.0
  %2414 = vmatprep.subr.mxu0 0.0
  %2415 = vmatpush1.msra.mxu0 0.0
  %2416 = vmatprep.subr.mxu0 0.0
  %2417 = vmatpush1.msra.mxu0 0.0
  %2418 = vmatprep.subr.mxu0 0.0
  %2419 = vmatpush1.msra.mxu0 0.0
  %2420 = vmatprep.subr.mxu0 0.0
  %2421 = vmatpush1.msra.mxu0 0.0
  %2422 = vmatprep.subr.mxu0 0.0
  %2423 = vmatpush1.msra.mxu0 0.0
  %2424 = vmatprep.subr.mxu0 0.0
  %2425 = vmatpush1.msra.mxu0 0.0
  %2426 = vmatprep.subr.mxu0 0.0
  %2427 = vmatpush1.msra.mxu0 0.0
  %2428 = vmatprep.subr.mxu0 0.0
  %2429 = vmatpush1.msra.mxu0 0.0
  %2430 = vmatprep.subr.mxu0 0.0
  %2431 = vmatpush1.msra.mxu0 0.0
  %2432 = vmatprep.subr.mxu0 0.0
  %2433 = vmatpush1.msra.mxu0 0.0
  %2434 = vmatprep.subr.mxu0 0.0
  %2435 = vmatpush1.msra.mxu0 0.0
  %2436 = vmatprep.subr.mxu0 0.0
  %2437 = vmatpush1.msra.mxu0 0.0
  %2438 = vmatprep.subr.mxu0 0.0
  %2439 = vmatpush1.msra.mxu0 0.0
  %2440 = vmatprep.mubr.f32.mxu0 0.0
  %2441 = vmatmul.mubr.f32.gmra.mrb[0].mxu0 %v1943
  %v2442 = vpop.f32.mrb[0].mxu0
  %v2443 = vadd.f32 %v2366, %v2442
  %v2444 = vpop.f32.mrb[0].mxu0
  %v2445 = vadd.f32 %v2368, %v2444
  %2446 = vmatprep.mubr.f32.mxu0 0.0
  %2447 = vmatmul.mubr.f32.gmra.mrb[0].mxu0 %v1946
  %v2448 = vpop.f32.mrb[0].mxu0
  %v2449 = vadd.f32 %v2372, %v2448
  %v2450 = vpop.f32.mrb[0].mxu0
  %v2451 = vadd.f32 %v2374, %v2450
  %2452 = vdwg.mxu0
  %v2453 = vld [vmem:[%s6] sm:$0x3]
  %v2455 = vlaneseq
  %v2456 = vshrl.u32 %v2455, 7
  %v2457 = vsub.s32 0, %v2456
  %v2458 = vrot.slane %v2453, %v2457
  %v2459 = vlaneseq
  %v2460 = vshrl.u32 %v2459, 7
  %v2461 = vsub.s32 1, %v2460
  %v2462 = vrot.slane %v2453, %v2461
  %v2465 = vadd.f32 %v2443, %v2458
  %v2466 = vadd.f32 %v2445, %v2462
  %v2467 = vadd.f32 %v2449, %v2458
  %v2468 = vadd.f32 %v2451, %v2462
  %v2469 = vmax.f32 %v2465, 0.0
  %v2470 = vmax.f32 %v2466, 0.0
  %v2471 = vmax.f32 %v2467, 0.0
  %v2472 = vmax.f32 %v2468, 0.0
  %2473 = vst [vmem:[#allocation9] sm:$0xff] %v2469
  %2474 = vst.msk [vmem:[#allocation9 + $0x8] sm:$0xff] %vm48, %v2470
  %2475 = vst [vmem:[#allocation9 + $0x10] sm:$0x3] %v2471
  %vm2476 = vcmask 517120
  %2477 = vst.msk [vmem:[#allocation9 + $0x18] sm:$0x3] %vm2476, %v2472
  %2478 = vst [vmem:[#allocation6] sm:$0xff] 0.0
  %2479 = vst [vmem:[#allocation6 + $0x8] sm:$0xff] 0.0
  %2480 = vst [vmem:[#allocation7] sm:$0xff] 0.0
  %2481 = vst [vmem:[#allocation7 + $0x8] sm:$0xff] 0.0
  %v2482 = vld [vmem:[#allocation9] ss:$8 sm:$0x3]
  %2484 = vrot.lane.b32.xlu0 %v2482, 32
  %v2485 = vpop.permute.xlu0 %2484
  %v2486 = vrot.slane %v2485, 7
  %vm2487 = vcmask 261120
  %v2488 = vsel %vm2487, %v2486, %v2485
  %vm2490 = vcmp.ge.s32.totalorder %v79, 32
  %vm2491 = vcmp.lt.s32.totalorder %v79, 224
  %vm2492 = vmand %vm2490, %vm2491
  %s2493 = scalar_lea.vmem [#allocation6], 1
  %2494 = vst.msk [vmem:[%s2493] ss:$8 sm:$0x3] %vm2492, %v2488
  %2495 = vst.msk [vmem:[%s2493] ss:$8 sm:$0x0] %vm2492, %v2488
  %s2496 = scalar_lea.vmem [#allocation9], 1
  %v2497 = vld [vmem:[%s2496] ss:$8 sm:$0x3]
  %2499 = vrot.lane.b32.xlu0 %v2497, 32
  %v2500 = vpop.permute.xlu0 %2499
  %v2501 = vrot.slane %v2500, 7
  %v2502 = vsel %vm2487, %v2501, %v2500
  %s2504 = scalar_lea.vmem [#allocation7], 1
  %2505 = vst.msk [vmem:[%s2504] ss:$8 sm:$0x3] %vm2492, %v2502
  %2506 = vst.msk [vmem:[%s2504] ss:$8 sm:$0x0] %vm2492, %v2502
  %s2507 = scalar_lea.vmem [#allocation9], 2
  %v2508 = vld [vmem:[%s2507] ss:$8 sm:$0x3]
  %2510 = vrot.lane.b32.xlu0 %v2508, 32
  %v2511 = vpop.permute.xlu0 %2510
  %v2512 = vrot.slane %v2511, 7
  %v2513 = vsel %vm2487, %v2512, %v2511
  %s2515 = scalar_lea.vmem [#allocation6], 2
  %2516 = vst.msk [vmem:[%s2515] ss:$8 sm:$0x3] %vm2492, %v2513
  %2517 = vst.msk [vmem:[%s2515] ss:$8 sm:$0x0] %vm2492, %v2513
  %s2518 = scalar_lea.vmem [#allocation9], 3
  %v2519 = vld [vmem:[%s2518] ss:$8 sm:$0x3]
  %2521 = vrot.lane.b32.xlu0 %v2519, 32
  %v2522 = vpop.permute.xlu0 %2521
  %v2523 = vrot.slane %v2522, 7
  %v2524 = vsel %vm2487, %v2523, %v2522
  %s2526 = scalar_lea.vmem [#allocation7], 2
  %2527 = vst.msk [vmem:[%s2526] ss:$8 sm:$0x3] %vm2492, %v2524
  %2528 = vst.msk [vmem:[%s2526] ss:$8 sm:$0x0] %vm2492, %v2524
  %s2529 = scalar_lea.vmem [#allocation9], 4
  %v2530 = vld [vmem:[%s2529] ss:$8 sm:$0x3]
  %2532 = vrot.lane.b32.xlu0 %v2530, 32
  %v2533 = vpop.permute.xlu0 %2532
  %v2534 = vrot.slane %v2533, 7
  %v2535 = vsel %vm2487, %v2534, %v2533
  %s2537 = scalar_lea.vmem [#allocation6], 3
  %2538 = vst.msk [vmem:[%s2537] ss:$8 sm:$0x3] %vm2492, %v2535
  %2539 = vst.msk [vmem:[%s2537] ss:$8 sm:$0x0] %vm2492, %v2535
  %s2540 = scalar_lea.vmem [#allocation9], 5
  %v2541 = vld [vmem:[%s2540] ss:$8 sm:$0x3]
  %2543 = vrot.lane.b32.xlu0 %v2541, 32
  %v2544 = vpop.permute.xlu0 %2543
  %v2545 = vrot.slane %v2544, 7
  %v2546 = vsel %vm2487, %v2545, %v2544
  %s2548 = scalar_lea.vmem [#allocation6], 5
  %2549 = vst.msk [vmem:[%s2548] ss:$8 sm:$0x3] %vm2492, %v2546
  %2550 = vst.msk [vmem:[%s2548] ss:$8 sm:$0x0] %vm2492, %v2546
  %s2551 = scalar_lea.vmem [#allocation9], 6
  %v2552 = vld [vmem:[%s2551] ss:$8 sm:$0x3]
  %2554 = vrot.lane.b32.xlu0 %v2552, 32
  %v2555 = vpop.permute.xlu0 %2554
  %v2556 = vrot.slane %v2555, 7
  %v2557 = vsel %vm2487, %v2556, %v2555
  %s2559 = scalar_lea.vmem [#allocation7], 5
  %2560 = vst.msk [vmem:[%s2559] ss:$8 sm:$0x3] %vm2492, %v2557
  %2561 = vst.msk [vmem:[%s2559] ss:$8 sm:$0x0] %vm2492, %v2557
  %s2562 = scalar_lea.vmem [#allocation9], 7
  %v2563 = vld [vmem:[%s2562] ss:$8 sm:$0x3]
  %2565 = vrot.lane.b32.xlu0 %v2563, 32
  %v2566 = vpop.permute.xlu0 %2565
  %v2567 = vrot.slane %v2566, 7
  %v2568 = vsel %vm2487, %v2567, %v2566
  %s2570 = scalar_lea.vmem [#allocation6], 6
  %2571 = vst.msk [vmem:[%s2570] ss:$8 sm:$0x3] %vm2492, %v2568
  %2572 = vst.msk [vmem:[%s2570] ss:$8 sm:$0x0] %vm2492, %v2568
  %s2573 = scalar_lea.vmem [#allocation9], 16
  %v2574 = vld [vmem:[%s2573] ss:$8 sm:$0x3]
  %2576 = vrot.lane.b32.xlu0 %v2574, 32
  %v2577 = vpop.permute.xlu0 %2576
  %v2578 = vrot.slane %v2577, 7
  %v2579 = vsel %vm2487, %v2578, %v2577
  %s2581 = scalar_lea.vmem [#allocation7], 6
  %2582 = vst.msk [vmem:[%s2581] ss:$8 sm:$0x3] %vm2492, %v2579
  %2583 = vst.msk [vmem:[%s2581] ss:$8 sm:$0x0] %vm2492, %v2579
  %s2584 = scalar_lea.vmem [#allocation9], 17
  %v2585 = vld [vmem:[%s2584] ss:$8 sm:$0x3]
  %2587 = vrot.lane.b32.xlu0 %v2585, 32
  %v2588 = vpop.permute.xlu0 %2587
  %v2589 = vrot.slane %v2588, 7
  %v2590 = vsel %vm2487, %v2589, %v2588
  %s2592 = scalar_lea.vmem [#allocation6], 7
  %2593 = vst.msk [vmem:[%s2592] ss:$8 sm:$0x3] %vm2492, %v2590
  %2594 = vst.msk [vmem:[%s2592] ss:$8 sm:$0x0] %vm2492, %v2590
  %v2595 = vld [vmem:[#allocation6] sm:$0xff]
  %v2596 = vld [vmem:[#allocation6 + $0x8] sm:$0xff]
  %v2597 = vld [vmem:[%s7] sm:$0xff]
  %v2598 = vld [vmem:[%s7 + $0x8] sm:$0xff]
  %v2599 = vld [vmem:[%s7 + $0x10] sm:$0xff]
  %v2600 = vld [vmem:[%s7 + $0x18] sm:$0xff]
  %v2601 = vld [vmem:[%s7 + $0x20] sm:$0xff]
  %v2602 = vld [vmem:[%s7 + $0x28] sm:$0xff]
  %v2603 = vld [vmem:[%s7 + $0x30] sm:$0xff]
  %v2604 = vld [vmem:[%s7 + $0x38] sm:$0xff]
  %v2605 = vld [vmem:[%s7 + $0x40] sm:$0xff]
  %v2606 = vld [vmem:[%s7 + $0x48] sm:$0xff]
  %v2607 = vld [vmem:[%s7 + $0x50] sm:$0xff]
  %v2608 = vld [vmem:[%s7 + $0x58] sm:$0xff]
  %v2609 = vld [vmem:[%s7 + $0x60] sm:$0xff]
  %v2610 = vld [vmem:[%s7 + $0x68] sm:$0xff]
  %v2611 = vld [vmem:[%s7 + $0x70] sm:$0xff]
  %v2612 = vld [vmem:[%s7 + $0x78] sm:$0xff]
  %v2613 = vld [vmem:[%s7 + $0x80] sm:$0xff]
  %v2614 = vld [vmem:[%s7 + $0x88] sm:$0xff]
  %v2615 = vld [vmem:[%s7 + $0x90] sm:$0xff]
  %v2616 = vld [vmem:[%s7 + $0x98] sm:$0xff]
  %v2617 = vld [vmem:[%s7 + $0xa0] sm:$0xff]
  %v2618 = vld [vmem:[%s7 + $0xa8] sm:$0xff]
  %v2619 = vld [vmem:[%s7 + $0xb0] sm:$0xff]
  %v2620 = vld [vmem:[%s7 + $0xb8] sm:$0xff]
  %v2621 = vld [vmem:[%s7 + $0xc0] sm:$0xff]
  %v2622 = vld [vmem:[%s7 + $0xc8] sm:$0xff]
  %v2623 = vld [vmem:[%s7 + $0xd0] sm:$0xff]
  %v2624 = vld [vmem:[%s7 + $0xd8] sm:$0xff]
  %v2625 = vld [vmem:[%s7 + $0xe0] sm:$0xff]
  %v2626 = vld [vmem:[%s7 + $0xe8] sm:$0xff]
  %v2627 = vld [vmem:[%s7 + $0xf0] sm:$0xff]
  %v2628 = vld [vmem:[%s7 + $0xf8] sm:$0xff]
  %v2629 = vld [vmem:[#allocation7] sm:$0xff]
  %v2630 = vld [vmem:[#allocation7 + $0x8] sm:$0xff]
  %v2631 = vld [vmem:[%s8] sm:$0xff]
  %v2632 = vld [vmem:[%s8 + $0x8] sm:$0xff]
  %v2633 = vld [vmem:[%s8 + $0x10] sm:$0xff]
  %v2634 = vld [vmem:[%s8 + $0x18] sm:$0xff]
  %v2635 = vld [vmem:[%s8 + $0x20] sm:$0xff]
  %v2636 = vld [vmem:[%s8 + $0x28] sm:$0xff]
  %v2637 = vld [vmem:[%s8 + $0x30] sm:$0xff]
  %v2638 = vld [vmem:[%s8 + $0x38] sm:$0xff]
  %v2639 = vld [vmem:[%s8 + $0x40] sm:$0xff]
  %v2640 = vld [vmem:[%s8 + $0x48] sm:$0xff]
  %v2641 = vld [vmem:[%s8 + $0x50] sm:$0xff]
  %v2642 = vld [vmem:[%s8 + $0x58] sm:$0xff]
  %v2643 = vld [vmem:[%s8 + $0x60] sm:$0xff]
  %v2644 = vld [vmem:[%s8 + $0x68] sm:$0xff]
  %v2645 = vld [vmem:[%s8 + $0x70] sm:$0xff]
  %v2646 = vld [vmem:[%s8 + $0x78] sm:$0xff]
  %v2647 = vld [vmem:[%s8 + $0x80] sm:$0xff]
  %v2648 = vld [vmem:[%s8 + $0x88] sm:$0xff]
  %v2649 = vld [vmem:[%s8 + $0x90] sm:$0xff]
  %v2650 = vld [vmem:[%s8 + $0x98] sm:$0xff]
  %v2651 = vld [vmem:[%s8 + $0xa0] sm:$0xff]
  %v2652 = vld [vmem:[%s8 + $0xa8] sm:$0xff]
  %v2653 = vld [vmem:[%s8 + $0xb0] sm:$0xff]
  %v2654 = vld [vmem:[%s8 + $0xb8] sm:$0xff]
  %v2655 = vld [vmem:[%s8 + $0xc0] sm:$0xff]
  %v2656 = vld [vmem:[%s8 + $0xc8] sm:$0xff]
  %v2657 = vld [vmem:[%s8 + $0xd0] sm:$0xff]
  %v2658 = vld [vmem:[%s8 + $0xd8] sm:$0xff]
  %v2659 = vld [vmem:[%s8 + $0xe0] sm:$0xff]
  %v2660 = vld [vmem:[%s8 + $0xe8] sm:$0xff]
  %v2661 = vld [vmem:[%s8 + $0xf0] sm:$0xff]
  %v2662 = vld [vmem:[%s8 + $0xf8] sm:$0xff]
  %2663 = vmatprep.subr.mxu0 0.0
  %2664 = vmatpush1.msra.mxu0 %v2631
  %2665 = vmatprep.subr.mxu0 0.0
  %2666 = vmatpush1.msra.mxu0 %v2632
  %2667 = vmatprep.subr.mxu0 0.0
  %2668 = vmatpush1.msra.mxu0 %v2633
  %2669 = vmatprep.subr.mxu0 0.0
  %2670 = vmatpush1.msra.mxu0 %v2634
  %2671 = vmatprep.subr.mxu0 0.0
  %2672 = vmatpush1.msra.mxu0 %v2635
  %2673 = vmatprep.subr.mxu0 0.0
  %2674 = vmatpush1.msra.mxu0 %v2636
  %2675 = vmatprep.subr.mxu0 0.0
  %2676 = vmatpush1.msra.mxu0 %v2637
  %2677 = vmatprep.subr.mxu0 0.0
  %2678 = vmatpush1.msra.mxu0 %v2638
  %2679 = vmatprep.subr.mxu0 0.0
  %2680 = vmatpush1.msra.mxu0 %v2639
  %2681 = vmatprep.subr.mxu0 0.0
  %2682 = vmatpush1.msra.mxu0 %v2640
  %2683 = vmatprep.subr.mxu0 0.0
  %2684 = vmatpush1.msra.mxu0 %v2641
  %2685 = vmatprep.subr.mxu0 0.0
  %2686 = vmatpush1.msra.mxu0 %v2642
  %2687 = vmatprep.subr.mxu0 0.0
  %2688 = vmatpush1.msra.mxu0 %v2643
  %2689 = vmatprep.subr.mxu0 0.0
  %2690 = vmatpush1.msra.mxu0 %v2644
  %2691 = vmatprep.subr.mxu0 0.0
  %2692 = vmatpush1.msra.mxu0 %v2645
  %2693 = vmatprep.subr.mxu0 0.0
  %2694 = vmatpush1.msra.mxu0 %v2646
  %2695 = vmatprep.subr.mxu0 0.0
  %2696 = vmatpush1.msra.mxu0 %v2647
  %2697 = vmatprep.subr.mxu0 0.0
  %2698 = vmatpush1.msra.mxu0 %v2648
  %2699 = vmatprep.subr.mxu0 0.0
  %2700 = vmatpush1.msra.mxu0 %v2649
  %2701 = vmatprep.subr.mxu0 0.0
  %2702 = vmatpush1.msra.mxu0 %v2650
  %2703 = vmatprep.subr.mxu0 0.0
  %2704 = vmatpush1.msra.mxu0 %v2651
  %2705 = vmatprep.subr.mxu0 0.0
  %2706 = vmatpush1.msra.mxu0 %v2652
  %2707 = vmatprep.subr.mxu0 0.0
  %2708 = vmatpush1.msra.mxu0 %v2653
  %2709 = vmatprep.subr.mxu0 0.0
  %2710 = vmatpush1.msra.mxu0 %v2654
  %2711 = vmatprep.subr.mxu0 0.0
  %2712 = vmatpush1.msra.mxu0 %v2655
  %2713 = vmatprep.subr.mxu0 0.0
  %2714 = vmatpush1.msra.mxu0 %v2656
  %2715 = vmatprep.subr.mxu0 0.0
  %2716 = vmatpush1.msra.mxu0 %v2657
  %2717 = vmatprep.subr.mxu0 0.0
  %2718 = vmatpush1.msra.mxu0 %v2658
  %2719 = vmatprep.subr.mxu0 0.0
  %2720 = vmatpush1.msra.mxu0 %v2659
  %2721 = vmatprep.subr.mxu0 0.0
  %2722 = vmatpush1.msra.mxu0 %v2660
  %2723 = vmatprep.subr.mxu0 0.0
  %2724 = vmatpush1.msra.mxu0 %v2661
  %2725 = vmatprep.subr.mxu0 0.0
  %2726 = vmatpush1.msra.mxu0 %v2662
  %2727 = vmatprep.mubr.f32.mxu0 %v2630
  %2728 = vmatmul.mubr.f32.gmra.mrb[0].mxu0 %v2629
  %v2729 = vpop.f32.mrb[0].mxu0
  %v2730 = vadd.f32 0.0, %v2729
  %v2731 = vpop.f32.mrb[0].mxu0
  %2732 = vdwg.mxu0
  %2733 = vmatprep.subr.mxu0 0.0
  %2734 = vmatpush1.msra.mxu0 %v2597
  %2735 = vmatprep.subr.mxu0 0.0
  %2736 = vmatpush1.msra.mxu0 %v2598
  %2737 = vmatprep.subr.mxu0 0.0
  %2738 = vmatpush1.msra.mxu0 %v2599
  %2739 = vmatprep.subr.mxu0 0.0
  %2740 = vmatpush1.msra.mxu0 %v2600
  %2741 = vmatprep.subr.mxu0 0.0
  %2742 = vmatpush1.msra.mxu0 %v2601
  %2743 = vmatprep.subr.mxu0 0.0
  %2744 = vmatpush1.msra.mxu0 %v2602
  %2745 = vmatprep.subr.mxu0 0.0
  %2746 = vmatpush1.msra.mxu0 %v2603
  %2747 = vmatprep.subr.mxu0 0.0
  %2748 = vmatpush1.msra.mxu0 %v2604
  %2749 = vmatprep.subr.mxu0 0.0
  %2750 = vmatpush1.msra.mxu0 %v2605
  %2751 = vmatprep.subr.mxu0 0.0
  %2752 = vmatpush1.msra.mxu0 %v2606
  %2753 = vmatprep.subr.mxu0 0.0
  %2754 = vmatpush1.msra.mxu0 %v2607
  %2755 = vmatprep.subr.mxu0 0.0
  %2756 = vmatpush1.msra.mxu0 %v2608
  %2757 = vmatprep.subr.mxu0 0.0
  %2758 = vmatpush1.msra.mxu0 %v2609
  %2759 = vmatprep.subr.mxu0 0.0
  %2760 = vmatpush1.msra.mxu0 %v2610
  %2761 = vmatprep.subr.mxu0 0.0
  %2762 = vmatpush1.msra.mxu0 %v2611
  %2763 = vmatprep.subr.mxu0 0.0
  %2764 = vmatpush1.msra.mxu0 %v2612
  %2765 = vmatprep.subr.mxu0 0.0
  %2766 = vmatpush1.msra.mxu0 %v2613
  %2767 = vmatprep.subr.mxu0 0.0
  %2768 = vmatpush1.msra.mxu0 %v2614
  %2769 = vmatprep.subr.mxu0 0.0
  %2770 = vmatpush1.msra.mxu0 %v2615
  %2771 = vmatprep.subr.mxu0 0.0
  %2772 = vmatpush1.msra.mxu0 %v2616
  %2773 = vmatprep.subr.mxu0 0.0
  %2774 = vmatpush1.msra.mxu0 %v2617
  %2775 = vmatprep.subr.mxu0 0.0
  %2776 = vmatpush1.msra.mxu0 %v2618
  %2777 = vmatprep.subr.mxu0 0.0
  %2778 = vmatpush1.msra.mxu0 %v2619
  %2779 = vmatprep.subr.mxu0 0.0
  %2780 = vmatpush1.msra.mxu0 %v2620
  %2781 = vmatprep.subr.mxu0 0.0
  %2782 = vmatpush1.msra.mxu0 %v2621
  %2783 = vmatprep.subr.mxu0 0.0
  %2784 = vmatpush1.msra.mxu0 %v2622
  %2785 = vmatprep.subr.mxu0 0.0
  %2786 = vmatpush1.msra.mxu0 %v2623
  %2787 = vmatprep.subr.mxu0 0.0
  %2788 = vmatpush1.msra.mxu0 %v2624
  %2789 = vmatprep.subr.mxu0 0.0
  %2790 = vmatpush1.msra.mxu0 %v2625
  %2791 = vmatprep.subr.mxu0 0.0
  %2792 = vmatpush1.msra.mxu0 %v2626
  %2793 = vmatprep.subr.mxu0 0.0
  %2794 = vmatpush1.msra.mxu0 %v2627
  %2795 = vmatprep.subr.mxu0 0.0
  %2796 = vmatpush1.msra.mxu0 %v2628
  %2797 = vmatprep.mubr.f32.mxu0 %v2596
  %2798 = vmatmul.mubr.f32.gmra.mrb[0].mxu0 %v2595
  %v2799 = vpop.f32.mrb[0].mxu0
  %v2800 = vadd.f32 %v2730, %v2799
  %v2801 = vpop.f32.mrb[0].mxu0
  %2802 = vdwg.mxu0
  %v2803 = vld [vmem:[%s9] sm:$0x1]
  %v2805 = vlaneseq
  %v2806 = vshrl.u32 %v2805, 7
  %v2807 = vsub.s32 0, %v2806
  %v2808 = vrot.slane %v2803, %v2807
  %v2810 = vadd.f32 %v2800, %v2808
  %v2811 = vmax.f32 %v2810, 0.0
  %v2812 = vld [vmem:[%s10] sm:$0xff]
  %v2813 = vmul.f32 %v2811, %v2812
  %vm2814 = vcmask 1043456
  %v2815 = vsel %vm2814, %v2813, 0.0
  %2816 = vadd.xlane.f32.xlu0 %v2815
  %v2817 = vpop.xlane.xlu0 %2816
  %v2818 = vrot.slane %v2817, 4
  %v2819 = vadd.f32 %v2817, %v2818
  %v2820 = vrot.slane %v2819, 2
  %v2821 = vadd.f32 %v2819, %v2820
  %v2822 = vrot.slane %v2821, 1
  %v2823 = vadd.f32 %v2821, %v2822
  %s2824 = vtos %v2823
  %v2825 = vld [vmem:[#allocation10] sm:$0x1]
  %v2826 = vstv %s2824
  %v2827 = vadd.f32 %v2825, %v2826
  %vm2828 = vcmask 0
  %2829 = vst.msk [vmem:[%s12] sm:$0x1] %vm2828, %v2827
  %v2831 = vrot.slane %v2813, 4
  %v2833 = vsel %vm2814, %v2831, 0.0
  %2834 = vadd.xlane.f32.xlu0 %v2833
  %v2835 = vpop.xlane.xlu0 %2834
  %v2836 = vrot.slane %v2835, 4
  %v2837 = vadd.f32 %v2835, %v2836
  %v2838 = vrot.slane %v2837, 2
  %v2839 = vadd.f32 %v2837, %v2838
  %v2840 = vrot.slane %v2839, 1
  %v2841 = vadd.f32 %v2839, %v2840
  %s2842 = vtos %v2841
  %v2843 = vld [vmem:[#allocation10] sm:$0x1]
  %v2844 = vstv %s2842
  %v2845 = vadd.f32 %v2843, %v2844
  %2846 = vst.msk [vmem:[%s12 + $0x1] sm:$0x1] %vm2828, %v2845
  // Predicated region
  $region50: #{forward.1} parent=0 // pred_check
    _
  $region51: #{forward.1} parent=0 // pred_check_branch
    %2848 = sbr.rel (0) target = $region53
  $region52: #{forward.1} parent=0 // pred_region
    _
  $region53: #{forward.1} parent=0 // pred_fallthru
    _
  // Predicated region
  $region54: #{forward.1} parent=0 // pred_check
    _
  $region55: #{forward.1} parent=0 // pred_check_branch
    %2850 = sbr.rel (0) target = $region57
  $region56: #{forward.1} parent=0 // pred_region
    _
  $region57: #{forward.1} parent=0 // pred_fallthru
    _

</llo_original>
